<compile_context>
chip_gen: v6e
topology: v6e:2x2x1
jax: 0.10.0
libtpu: 0.0.40
codegen_flags: <defaults>
</compile_context>

<pallas_src>
import numpy as np
import jax
import jax.numpy as jnp
from jax.experimental import pallas as pl
from jax.experimental.pallas import tpu as pltpu


# ----------------------------------------------------------------------------
# Static geometry implied by the module (28x28 input -> 1x1x16 before fc1).
# ----------------------------------------------------------------------------
H0 = 28
C1, K1, ST1 = 16, 5, 2
H1 = (H0 - K1) // ST1 + 1          # 12
C2, K2, ST2, G2 = 16, 4, 2, 2
H2 = (H1 - K2) // ST2 + 1          # 5
C3, K3, ST3, G3 = 16, 3, 1, 2
H3 = (H2 - K3) // ST3 + 1          # 3
C4, K4, ST4, G4 = 16, 3, 1, 2
H4 = (H3 - K4) // ST4 + 1          # 1
NCLS = 10

M1, M2, M3 = H1 * H1, H2 * H2, H3 * H3      # 144, 25, 9
T1, T2, T3, T4 = K1 * K1, K2 * K2, K3 * K3, K4 * K4   # 25, 16, 9, 9


# ----------------------------------------------------------------------------
# Single fused kernel: conv1..conv4 + fc1 (all ReLU'd), one batch element per
# grid step.  Activations are (spatial, channel) 2-D tiles living in vregs.
# ----------------------------------------------------------------------------
def _net_kernel(p1_ref, w1_ref, b1_ref,
                s2_ref, w2_ref, b2_ref,
                s3_ref, w3_ref, b3_ref,
                w4_ref, b4_ref,
                wf_ref, bf_ref,
                o_ref):
    f32, bf16 = jnp.float32, jnp.bfloat16

    # conv1 + relu: (M1, T1) @ (T1, C1) -> (M1, C1)
    h1 = jnp.dot(p1_ref[0], w1_ref[...], preferred_element_type=f32)
    h1 = jnp.maximum(h1 + b1_ref[...], 0.0).astype(bf16)            # (144, 16)

    # conv2 + relu (stride 2, groups folded into block-diagonal weights).
    # For each window offset t: gather shifted spatial rows with a constant
    # 0/1 matrix (MXU "gather"), then contract with the packed weight.
    acc = jnp.zeros((M2, C2), f32)
    for t in range(T2):
        xs = jnp.dot(s2_ref[t], h1, preferred_element_type=f32).astype(bf16)  # (25, 16)
        acc = acc + jnp.dot(xs, w2_ref[t], preferred_element_type=f32)
    h2 = jnp.maximum(acc + b2_ref[...], 0.0).astype(bf16)            # (25, 16)

    # conv3 + relu (stride 1, groups=2), same scheme.
    acc = jnp.zeros((M3, C3), f32)
    for t in range(T3):
        xs = jnp.dot(s3_ref[t], h2, preferred_element_type=f32).astype(bf16)  # (9, 16)
        acc = acc + jnp.dot(xs, w3_ref[t], preferred_element_type=f32)
    h3 = jnp.maximum(acc + b3_ref[...], 0.0).astype(bf16)            # (9, 16)

    # conv4 + relu: 3x3 -> 1x1, so window offset t reads spatial row t of h3.
    acc = jnp.zeros((1, C4), f32)
    for t in range(T4):
        acc = acc + jnp.dot(h3[t:t + 1, :], w4_ref[t], preferred_element_type=f32)
    h4 = jnp.maximum(acc + b4_ref[...], 0.0).astype(bf16)            # (1, 16)

    # fc1 + relu -> logits (1, 10)
    y = jnp.dot(h4, wf_ref[...], preferred_element_type=f32)
    o_ref[0] = jnp.maximum(y + bf_ref[...], 0.0)


# ----------------------------------------------------------------------------
# One-time packing (hoisted out of the jitted forward).
# ----------------------------------------------------------------------------
def _gather_mats(hw, k, stride):
    """S[t, m_out, m_in] = 1 iff input pixel m_in feeds output pixel m_out at
    window offset t = i*k + j (square hw x hw input, VALID padding)."""
    oh = (hw - k) // stride + 1
    S = np.zeros((k * k, oh * oh, hw * hw), np.float32)
    for i in range(k):
        for j in range(k):
            t = i * k + j
            for oy in range(oh):
                for ox in range(oh):
                    m_in = (stride * oy + i) * hw + (stride * ox + j)
                    S[t, oy * oh + ox, m_in] = 1.0
    return jnp.asarray(S).astype(jnp.bfloat16)


def _pack_grouped(w, groups):
    """torch (Cout, Cin/g, kh, kw) -> (kh*kw, Cin, Cout) bf16, block-diagonal
    over channel groups and transposed for right-multiplication."""
    cout, cin_g, kh, kw = w.shape
    cout_g = cout // groups
    cin = cin_g * groups
    wt = w.reshape(cout, cin_g, kh * kw)
    packed = jnp.zeros((kh * kw, cin, cout), jnp.float32)
    for g in range(groups):
        blk = wt[g * cout_g:(g + 1) * cout_g]            # (cout_g, cin_g, T)
        blk = jnp.transpose(blk, (2, 1, 0))              # (T, cin_g, cout_g)
        packed = packed.at[:, g * cin_g:(g + 1) * cin_g,
                           g * cout_g:(g + 1) * cout_g].set(blk)
    return packed.astype(jnp.bfloat16)


def pack_params(p):
    """Repack torch-layout params into the kernel layout (runs once)."""
    return {
        "w1": p["w1"].reshape(C1, T1).T.astype(jnp.bfloat16),   # (T1, C1)
        "b1": p["b1"].reshape(1, C1).astype(jnp.float32),
        "s2": _gather_mats(H1, K2, ST2),                        # (T2, M2, M1)
        "w2": _pack_grouped(p["w2"], G2),                       # (T2, C1, C2)
        "b2": p["b2"].reshape(1, C2).astype(jnp.float32),
        "s3": _gather_mats(H2, K3, ST3),                        # (T3, M3, M2)
        "w3": _pack_grouped(p["w3"], G3),                       # (T3, C2, C3)
        "b3": p["b3"].reshape(1, C3).astype(jnp.float32),
        "w4": _pack_grouped(p["w4"], G4),                       # (T4, C3, C4)
        "b4": p["b4"].reshape(1, C4).astype(jnp.float32),
        "wf": p["wf"].T.astype(jnp.bfloat16),                   # (C4, 10)
        "bf": p["bf"].reshape(1, NCLS).astype(jnp.float32),
    }


# ----------------------------------------------------------------------------
# Forward pass: one pallas_call for the whole network.
# ----------------------------------------------------------------------------
@jax.jit
def net_forward(x_nchw, packed):
    b = x_nchw.shape[0]
    xin = x_nchw[:, 0, :, :].astype(jnp.float32)                 # (B, 28, 28)

    # Input-only preprocessing: 5x5 / stride-2 patches of the raw image,
    # ordered (row = oy*12+ox, col = i*5+j).
    cols = []
    for i in range(K1):
        for j in range(K1):
            win = xin[:, i:i + ST1 * (H1 - 1) + 1:ST1,
                      j:j + ST1 * (H1 - 1) + 1:ST1]              # (B, 12, 12)
            cols.append(win.reshape(b, M1))
    p1 = jnp.stack(cols, axis=-1).astype(jnp.bfloat16)           # (B, M1, T1)

    def full(*s):
        return pl.BlockSpec(s, lambda bb: (0,) * len(s))

    out = pl.pallas_call(
        _net_kernel,
        out_shape=jax.ShapeDtypeStruct((b, 1, NCLS), jnp.float32),
        grid=(b,),
        in_specs=[
            pl.BlockSpec((1, M1, T1), lambda bb: (bb, 0, 0)),    # p1
            full(T1, C1), full(1, C1),                           # w1, b1
            full(T2, M2, M1), full(T2, C1, C2), full(1, C2),     # s2, w2, b2
            full(T3, M3, M2), full(T3, C2, C3), full(1, C3),     # s3, w3, b3
            full(T4, C3, C4), full(1, C4),                       # w4, b4
            full(C4, NCLS), full(1, NCLS),                       # wf, bf
        ],
        out_specs=pl.BlockSpec((1, 1, NCLS), lambda bb: (bb, 0, 0)),
        compiler_params=pltpu.CompilerParams(
            dimension_semantics=("parallel",)),
    )(p1, packed["w1"], packed["b1"],
      packed["s2"], packed["w2"], packed["b2"],
      packed["s3"], packed["w3"], packed["b3"],
      packed["w4"], packed["b4"],
      packed["wf"], packed["bf"])
    return out.reshape(b, NCLS)


# ----------------------------------------------------------------------------
# Parameters (torch layouts, mirroring the module's init) + plain-JAX reference.
# ----------------------------------------------------------------------------
def xavier_uniform(key, shape, fan_in, fan_out):
    limit = (6.0 / (fan_in + fan_out)) ** 0.5
    return jax.random.uniform(key, shape, jnp.float32, -limit, limit)


def init_params(key):
    ks = jax.random.split(key, 10)
    p = {}
    p["w1"] = xavier_uniform(ks[0], (16, 1, 5, 5), 1 * 25, 16 * 25)
    p["b1"] = jax.random.uniform(ks[1], (16,), jnp.float32, -0.2, 0.2)
    p["w2"] = xavier_uniform(ks[2], (16, 8, 4, 4), 8 * 16, 16 * 16)
    p["b2"] = jax.random.uniform(ks[3], (16,), jnp.float32, -0.1, 0.1)
    p["w3"] = xavier_uniform(ks[4], (16, 8, 3, 3), 8 * 9, 16 * 9)
    p["b3"] = jax.random.uniform(ks[5], (16,), jnp.float32, -0.1, 0.1)
    p["w4"] = xavier_uniform(ks[6], (16, 8, 3, 3), 8 * 9, 16 * 9)
    p["b4"] = jax.random.uniform(ks[7], (16,), jnp.float32, -0.1, 0.1)
    p["wf"] = xavier_uniform(ks[8], (10, 16), 16, 10)
    p["bf"] = jax.random.uniform(ks[9], (10,), jnp.float32, -0.25, 0.25)
    return p


def reference_forward(x_nchw, p):
    def conv(x, w, bias, stride, groups):
        y = jax.lax.conv_general_dilated(
            x, w, window_strides=(stride, stride), padding="VALID",
            dimension_numbers=("NCHW", "OIHW", "NCHW"),
            feature_group_count=groups)
        return jax.nn.relu(y + bias.reshape(1, -1, 1, 1))
    x = conv(x_nchw, p["w1"], p["b1"], 2, 1)
    x = conv(x, p["w2"], p["b2"], 2, 2)
    x = conv(x, p["w3"], p["b3"], 1, 2)
    x = conv(x, p["w4"], p["b4"], 1, 2)
    x = x.reshape(x.shape[0], -1)
    return jax.nn.relu(x @ p["wf"].T + p["bf"])


if __name__ == "__main__":
    key = jax.random.PRNGKey(0)
    k_in, k_param = jax.random.split(key)
    # PyTorch-style NCHW input: (2, 1, 28, 28); 28x28 is the spatial size
    # implied by the module (four convs reduce it to 1x1x16 = Linear(16, .)).
    x = jax.random.normal(k_in, (2, 1, 28, 28), jnp.float32)
    params = init_params(k_param)
    packed = pack_params(params)      # one-time repack, outside the jit'd forward

    out = jax.block_until_ready(net_forward(x, packed))
    assert out.shape == (2, 10), out.shape
    assert bool(jnp.all(jnp.isfinite(out)))

    # Loose (bf16-operand) correctness check against a plain-JAX reference.
    ref = jax.block_until_ready(reference_forward(x, params))
    assert bool(jnp.allclose(out, ref, atol=5e-2, rtol=5e-2)), \
        float(jnp.max(jnp.abs(out - ref)))
    print("KERNEL_OK")
</pallas_src>

<mosaic_0001>
module attributes {stable_mosaic.version = 11 : i64} {
  func.func @_net_kernel(%arg0: i32, %arg1: memref<1x144x25xbf16, #tpu.memory_space<vmem>>, %arg2: memref<25x16xbf16, #tpu.memory_space<vmem>>, %arg3: memref<1x16xf32, #tpu.memory_space<vmem>>, %arg4: memref<16x25x144xbf16, #tpu.memory_space<vmem>>, %arg5: memref<16x16x16xbf16, #tpu.memory_space<vmem>>, %arg6: memref<1x16xf32, #tpu.memory_space<vmem>>, %arg7: memref<9x9x25xbf16, #tpu.memory_space<vmem>>, %arg8: memref<9x16x16xbf16, #tpu.memory_space<vmem>>, %arg9: memref<1x16xf32, #tpu.memory_space<vmem>>, %arg10: memref<9x16x16xbf16, #tpu.memory_space<vmem>>, %arg11: memref<1x16xf32, #tpu.memory_space<vmem>>, %arg12: memref<16x10xbf16, #tpu.memory_space<vmem>>, %arg13: memref<1x10xf32, #tpu.memory_space<vmem>>, %arg14: memref<1x1x10xf32, #tpu.memory_space<vmem>>) attributes {dimension_semantics = [#tpu.dimension_semantics<parallel>], iteration_bounds = array<i64: 2>, scalar_prefetch = 0 : i64, scratch_operands = 0 : i64, tpu.core_type = #tpu.core_type<tc>, window_params = [{transform_indices = @transform_0, window_bounds = array<i64: 1, 144, 25>}, {pipeline_mode = #tpu.pipeline_mode<synchronous>, transform_indices = @transform_1, window_bounds = array<i64: 25, 16>}, {pipeline_mode = #tpu.pipeline_mode<synchronous>, transform_indices = @transform_2, window_bounds = array<i64: 1, 16>}, {pipeline_mode = #tpu.pipeline_mode<synchronous>, transform_indices = @transform_3, window_bounds = array<i64: 16, 25, 144>}, {pipeline_mode = #tpu.pipeline_mode<synchronous>, transform_indices = @transform_4, window_bounds = array<i64: 16, 16, 16>}, {pipeline_mode = #tpu.pipeline_mode<synchronous>, transform_indices = @transform_5, window_bounds = array<i64: 1, 16>}, {pipeline_mode = #tpu.pipeline_mode<synchronous>, transform_indices = @transform_6, window_bounds = array<i64: 9, 9, 25>}, {pipeline_mode = #tpu.pipeline_mode<synchronous>, transform_indices = @transform_7, window_bounds = array<i64: 9, 16, 16>}, {pipeline_mode = #tpu.pipeline_mode<synchronous>, transform_indices = @transform_8, window_bounds = array<i64: 1, 16>}, {pipeline_mode = #tpu.pipeline_mode<synchronous>, transform_indices = @transform_9, window_bounds = array<i64: 9, 16, 16>}, {pipeline_mode = #tpu.pipeline_mode<synchronous>, transform_indices = @transform_10, window_bounds = array<i64: 1, 16>}, {pipeline_mode = #tpu.pipeline_mode<synchronous>, transform_indices = @transform_11, window_bounds = array<i64: 16, 10>}, {pipeline_mode = #tpu.pipeline_mode<synchronous>, transform_indices = @transform_12, window_bounds = array<i64: 1, 10>}, {transform_indices = @transform_13, window_bounds = array<i64: 1, 1, 10>}]} {
    %c0 = arith.constant 0 : index
    %c0_0 = arith.constant 0 : index
    %c0_1 = arith.constant 0 : index
    %0 = vector.load %arg1[%c0, %c0_0, %c0_1] : memref<1x144x25xbf16, #tpu.memory_space<vmem>>, vector<1x144x25xbf16>
    %1 = vector.shape_cast %0 : vector<1x144x25xbf16> to vector<144x25xbf16>
    %c0_2 = arith.constant 0 : index
    %c0_3 = arith.constant 0 : index
    %2 = vector.load %arg2[%c0_2, %c0_3] : memref<25x16xbf16, #tpu.memory_space<vmem>>, vector<25x16xbf16>
    %cst = arith.constant dense<0.000000e+00> : vector<144x16xf32>
    %3 = tpu.matmul %1, %2, %cst {dimension_numbers = #tpu.dot_dimension_numbers<[1], [0], [0], [1], [0, 0, 1, 1], [], []>} : vector<144x25xbf16>, vector<25x16xbf16>, vector<144x16xf32> -> vector<144x16xf32>
    %c0_4 = arith.constant 0 : index
    %c0_5 = arith.constant 0 : index
    %4 = vector.load %arg3[%c0_4, %c0_5] : memref<1x16xf32, #tpu.memory_space<vmem>>, vector<1x16xf32>
    %5 = vector.broadcast %4 : vector<1x16xf32> to vector<144x16xf32>
    %6 = arith.addf %3, %5 : vector<144x16xf32>
    %cst_6 = arith.constant 0.000000e+00 : f32
    %7 = vector.broadcast %cst_6 : f32 to vector<144x16xf32>
    %8 = arith.maximumf %6, %7 : vector<144x16xf32>
    %9 = arith.truncf %8 : vector<144x16xf32> to vector<144x16xbf16>
    %cst_7 = arith.constant 0.000000e+00 : f32
    %10 = vector.broadcast %cst_7 : f32 to vector<25x16xf32>
    %c0_8 = arith.constant 0 : index
    %c0_9 = arith.constant 0 : index
    %c0_10 = arith.constant 0 : index
    %11 = vector.load %arg4[%c0_8, %c0_9, %c0_10] : memref<16x25x144xbf16, #tpu.memory_space<vmem>>, vector<1x25x144xbf16>
    %12 = vector.shape_cast %11 : vector<1x25x144xbf16> to vector<25x144xbf16>
    %cst_11 = arith.constant dense<0.000000e+00> : vector<25x16xf32>
    %13 = tpu.matmul %12, %9, %cst_11 {dimension_numbers = #tpu.dot_dimension_numbers<[1], [0], [0], [1], [0, 0, 1, 1], [], []>} : vector<25x144xbf16>, vector<144x16xbf16>, vector<25x16xf32> -> vector<25x16xf32>
    %14 = arith.truncf %13 : vector<25x16xf32> to vector<25x16xbf16>
    %c0_12 = arith.constant 0 : index
    %c0_13 = arith.constant 0 : index
    %c0_14 = arith.constant 0 : index
    %15 = vector.load %arg5[%c0_12, %c0_13, %c0_14] : memref<16x16x16xbf16, #tpu.memory_space<vmem>>, vector<1x16x16xbf16>
    %16 = vector.shape_cast %15 : vector<1x16x16xbf16> to vector<16x16xbf16>
    %cst_15 = arith.constant dense<0.000000e+00> : vector<25x16xf32>
    %17 = tpu.matmul %14, %16, %cst_15 {dimension_numbers = #tpu.dot_dimension_numbers<[1], [0], [0], [1], [0, 0, 1, 1], [], []>} : vector<25x16xbf16>, vector<16x16xbf16>, vector<25x16xf32> -> vector<25x16xf32>
    %18 = arith.addf %10, %17 : vector<25x16xf32>
    %c1 = arith.constant 1 : index
    %c0_16 = arith.constant 0 : index
    %c0_17 = arith.constant 0 : index
    %19 = vector.load %arg4[%c1, %c0_16, %c0_17] : memref<16x25x144xbf16, #tpu.memory_space<vmem>>, vector<1x25x144xbf16>
    %20 = vector.shape_cast %19 : vector<1x25x144xbf16> to vector<25x144xbf16>
    %cst_18 = arith.constant dense<0.000000e+00> : vector<25x16xf32>
    %21 = tpu.matmul %20, %9, %cst_18 {dimension_numbers = #tpu.dot_dimension_numbers<[1], [0], [0], [1], [0, 0, 1, 1], [], []>} : vector<25x144xbf16>, vector<144x16xbf16>, vector<25x16xf32> -> vector<25x16xf32>
    %22 = arith.truncf %21 : vector<25x16xf32> to vector<25x16xbf16>
    %c1_19 = arith.constant 1 : index
    %c0_20 = arith.constant 0 : index
    %c0_21 = arith.constant 0 : index
    %23 = vector.load %arg5[%c1_19, %c0_20, %c0_21] : memref<16x16x16xbf16, #tpu.memory_space<vmem>>, vector<1x16x16xbf16>
    %24 = vector.shape_cast %23 : vector<1x16x16xbf16> to vector<16x16xbf16>
    %cst_22 = arith.constant dense<0.000000e+00> : vector<25x16xf32>
    %25 = tpu.matmul %22, %24, %cst_22 {dimension_numbers = #tpu.dot_dimension_numbers<[1], [0], [0], [1], [0, 0, 1, 1], [], []>} : vector<25x16xbf16>, vector<16x16xbf16>, vector<25x16xf32> -> vector<25x16xf32>
    %26 = arith.addf %18, %25 : vector<25x16xf32>
    %c2 = arith.constant 2 : index
    %c0_23 = arith.constant 0 : index
    %c0_24 = arith.constant 0 : index
    %27 = vector.load %arg4[%c2, %c0_23, %c0_24] : memref<16x25x144xbf16, #tpu.memory_space<vmem>>, vector<1x25x144xbf16>
    %28 = vector.shape_cast %27 : vector<1x25x144xbf16> to vector<25x144xbf16>
    %cst_25 = arith.constant dense<0.000000e+00> : vector<25x16xf32>
    %29 = tpu.matmul %28, %9, %cst_25 {dimension_numbers = #tpu.dot_dimension_numbers<[1], [0], [0], [1], [0, 0, 1, 1], [], []>} : vector<25x144xbf16>, vector<144x16xbf16>, vector<25x16xf32> -> vector<25x16xf32>
    %30 = arith.truncf %29 : vector<25x16xf32> to vector<25x16xbf16>
    %c2_26 = arith.constant 2 : index
    %c0_27 = arith.constant 0 : index
    %c0_28 = arith.constant 0 : index
    %31 = vector.load %arg5[%c2_26, %c0_27, %c0_28] : memref<16x16x16xbf16, #tpu.memory_space<vmem>>, vector<1x16x16xbf16>
    %32 = vector.shape_cast %31 : vector<1x16x16xbf16> to vector<16x16xbf16>
    %cst_29 = arith.constant dense<0.000000e+00> : vector<25x16xf32>
    %33 = tpu.matmul %30, %32, %cst_29 {dimension_numbers = #tpu.dot_dimension_numbers<[1], [0], [0], [1], [0, 0, 1, 1], [], []>} : vector<25x16xbf16>, vector<16x16xbf16>, vector<25x16xf32> -> vector<25x16xf32>
    %34 = arith.addf %26, %33 : vector<25x16xf32>
    %c3 = arith.constant 3 : index
    %c0_30 = arith.constant 0 : index
    %c0_31 = arith.constant 0 : index
    %35 = vector.load %arg4[%c3, %c0_30, %c0_31] : memref<16x25x144xbf16, #tpu.memory_space<vmem>>, vector<1x25x144xbf16>
    %36 = vector.shape_cast %35 : vector<1x25x144xbf16> to vector<25x144xbf16>
    %cst_32 = arith.constant dense<0.000000e+00> : vector<25x16xf32>
    %37 = tpu.matmul %36, %9, %cst_32 {dimension_numbers = #tpu.dot_dimension_numbers<[1], [0], [0], [1], [0, 0, 1, 1], [], []>} : vector<25x144xbf16>, vector<144x16xbf16>, vector<25x16xf32> -> vector<25x16xf32>
    %38 = arith.truncf %37 : vector<25x16xf32> to vector<25x16xbf16>
    %c3_33 = arith.constant 3 : index
    %c0_34 = arith.constant 0 : index
    %c0_35 = arith.constant 0 : index
    %39 = vector.load %arg5[%c3_33, %c0_34, %c0_35] : memref<16x16x16xbf16, #tpu.memory_space<vmem>>, vector<1x16x16xbf16>
    %40 = vector.shape_cast %39 : vector<1x16x16xbf16> to vector<16x16xbf16>
    %cst_36 = arith.constant dense<0.000000e+00> : vector<25x16xf32>
    %41 = tpu.matmul %38, %40, %cst_36 {dimension_numbers = #tpu.dot_dimension_numbers<[1], [0], [0], [1], [0, 0, 1, 1], [], []>} : vector<25x16xbf16>, vector<16x16xbf16>, vector<25x16xf32> -> vector<25x16xf32>
    %42 = arith.addf %34, %41 : vector<25x16xf32>
    %c4 = arith.constant 4 : index
    %c0_37 = arith.constant 0 : index
    %c0_38 = arith.constant 0 : index
    %43 = vector.load %arg4[%c4, %c0_37, %c0_38] : memref<16x25x144xbf16, #tpu.memory_space<vmem>>, vector<1x25x144xbf16>
    %44 = vector.shape_cast %43 : vector<1x25x144xbf16> to vector<25x144xbf16>
    %cst_39 = arith.constant dense<0.000000e+00> : vector<25x16xf32>
    %45 = tpu.matmul %44, %9, %cst_39 {dimension_numbers = #tpu.dot_dimension_numbers<[1], [0], [0], [1], [0, 0, 1, 1], [], []>} : vector<25x144xbf16>, vector<144x16xbf16>, vector<25x16xf32> -> vector<25x16xf32>
    %46 = arith.truncf %45 : vector<25x16xf32> to vector<25x16xbf16>
    %c4_40 = arith.constant 4 : index
    %c0_41 = arith.constant 0 : index
    %c0_42 = arith.constant 0 : index
    %47 = vector.load %arg5[%c4_40, %c0_41, %c0_42] : memref<16x16x16xbf16, #tpu.memory_space<vmem>>, vector<1x16x16xbf16>
    %48 = vector.shape_cast %47 : vector<1x16x16xbf16> to vector<16x16xbf16>
    %cst_43 = arith.constant dense<0.000000e+00> : vector<25x16xf32>
    %49 = tpu.matmul %46, %48, %cst_43 {dimension_numbers = #tpu.dot_dimension_numbers<[1], [0], [0], [1], [0, 0, 1, 1], [], []>} : vector<25x16xbf16>, vector<16x16xbf16>, vector<25x16xf32> -> vector<25x16xf32>
    %50 = arith.addf %42, %49 : vector<25x16xf32>
    %c5 = arith.constant 5 : index
    %c0_44 = arith.constant 0 : index
    %c0_45 = arith.constant 0 : index
    %51 = vector.load %arg4[%c5, %c0_44, %c0_45] : memref<16x25x144xbf16, #tpu.memory_space<vmem>>, vector<1x25x144xbf16>
    %52 = vector.shape_cast %51 : vector<1x25x144xbf16> to vector<25x144xbf16>
    %cst_46 = arith.constant dense<0.000000e+00> : vector<25x16xf32>
    %53 = tpu.matmul %52, %9, %cst_46 {dimension_numbers = #tpu.dot_dimension_numbers<[1], [0], [0], [1], [0, 0, 1, 1], [], []>} : vector<25x144xbf16>, vector<144x16xbf16>, vector<25x16xf32> -> vector<25x16xf32>
    %54 = arith.truncf %53 : vector<25x16xf32> to vector<25x16xbf16>
    %c5_47 = arith.constant 5 : index
    %c0_48 = arith.constant 0 : index
    %c0_49 = arith.constant 0 : index
    %55 = vector.load %arg5[%c5_47, %c0_48, %c0_49] : memref<16x16x16xbf16, #tpu.memory_space<vmem>>, vector<1x16x16xbf16>
    %56 = vector.shape_cast %55 : vector<1x16x16xbf16> to vector<16x16xbf16>
    %cst_50 = arith.constant dense<0.000000e+00> : vector<25x16xf32>
    %57 = tpu.matmul %54, %56, %cst_50 {dimension_numbers = #tpu.dot_dimension_numbers<[1], [0], [0], [1], [0, 0, 1, 1], [], []>} : vector<25x16xbf16>, vector<16x16xbf16>, vector<25x16xf32> -> vector<25x16xf32>
    %58 = arith.addf %50, %57 : vector<25x16xf32>
    %c6 = arith.constant 6 : index
    %c0_51 = arith.constant 0 : index
    %c0_52 = arith.constant 0 : index
    %59 = vector.load %arg4[%c6, %c0_51, %c0_52] : memref<16x25x144xbf16, #tpu.memory_space<vmem>>, vector<1x25x144xbf16>
    %60 = vector.shape_cast %59 : vector<1x25x144xbf16> to vector<25x144xbf16>
    %cst_53 = arith.constant dense<0.000000e+00> : vector<25x16xf32>
    %61 = tpu.matmul %60, %9, %cst_53 {dimension_numbers = #tpu.dot_dimension_numbers<[1], [0], [0], [1], [0, 0, 1, 1], [], []>} : vector<25x144xbf16>, vector<144x16xbf16>, vector<25x16xf32> -> vector<25x16xf32>
    %62 = arith.truncf %61 : vector<25x16xf32> to vector<25x16xbf16>
    %c6_54 = arith.constant 6 : index
    %c0_55 = arith.constant 0 : index
    %c0_56 = arith.constant 0 : index
    %63 = vector.load %arg5[%c6_54, %c0_55, %c0_56] : memref<16x16x16xbf16, #tpu.memory_space<vmem>>, vector<1x16x16xbf16>
    %64 = vector.shape_cast %63 : vector<1x16x16xbf16> to vector<16x16xbf16>
    %cst_57 = arith.constant dense<0.000000e+00> : vector<25x16xf32>
    %65 = tpu.matmul %62, %64, %cst_57 {dimension_numbers = #tpu.dot_dimension_numbers<[1], [0], [0], [1], [0, 0, 1, 1], [], []>} : vector<25x16xbf16>, vector<16x16xbf16>, vector<25x16xf32> -> vector<25x16xf32>
    %66 = arith.addf %58, %65 : vector<25x16xf32>
    %c7 = arith.constant 7 : index
    %c0_58 = arith.constant 0 : index
    %c0_59 = arith.constant 0 : index
    %67 = vector.load %arg4[%c7, %c0_58, %c0_59] : memref<16x25x144xbf16, #tpu.memory_space<vmem>>, vector<1x25x144xbf16>
    %68 = vector.shape_cast %67 : vector<1x25x144xbf16> to vector<25x144xbf16>
    %cst_60 = arith.constant dense<0.000000e+00> : vector<25x16xf32>
    %69 = tpu.matmul %68, %9, %cst_60 {dimension_numbers = #tpu.dot_dimension_numbers<[1], [0], [0], [1], [0, 0, 1, 1], [], []>} : vector<25x144xbf16>, vector<144x16xbf16>, vector<25x16xf32> -> vector<25x16xf32>
    %70 = arith.truncf %69 : vector<25x16xf32> to vector<25x16xbf16>
    %c7_61 = arith.constant 7 : index
    %c0_62 = arith.constant 0 : index
    %c0_63 = arith.constant 0 : index
    %71 = vector.load %arg5[%c7_61, %c0_62, %c0_63] : memref<16x16x16xbf16, #tpu.memory_space<vmem>>, vector<1x16x16xbf16>
    %72 = vector.shape_cast %71 : vector<1x16x16xbf16> to vector<16x16xbf16>
    %cst_64 = arith.constant dense<0.000000e+00> : vector<25x16xf32>
    %73 = tpu.matmul %70, %72, %cst_64 {dimension_numbers = #tpu.dot_dimension_numbers<[1], [0], [0], [1], [0, 0, 1, 1], [], []>} : vector<25x16xbf16>, vector<16x16xbf16>, vector<25x16xf32> -> vector<25x16xf32>
    %74 = arith.addf %66, %73 : vector<25x16xf32>
    %c8 = arith.constant 8 : index
    %c0_65 = arith.constant 0 : index
    %c0_66 = arith.constant 0 : index
    %75 = vector.load %arg4[%c8, %c0_65, %c0_66] : memref<16x25x144xbf16, #tpu.memory_space<vmem>>, vector<1x25x144xbf16>
    %76 = vector.shape_cast %75 : vector<1x25x144xbf16> to vector<25x144xbf16>
    %cst_67 = arith.constant dense<0.000000e+00> : vector<25x16xf32>
    %77 = tpu.matmul %76, %9, %cst_67 {dimension_numbers = #tpu.dot_dimension_numbers<[1], [0], [0], [1], [0, 0, 1, 1], [], []>} : vector<25x144xbf16>, vector<144x16xbf16>, vector<25x16xf32> -> vector<25x16xf32>
    %78 = arith.truncf %77 : vector<25x16xf32> to vector<25x16xbf16>
    %c8_68 = arith.constant 8 : index
    %c0_69 = arith.constant 0 : index
    %c0_70 = arith.constant 0 : index
    %79 = vector.load %arg5[%c8_68, %c0_69, %c0_70] : memref<16x16x16xbf16, #tpu.memory_space<vmem>>, vector<1x16x16xbf16>
    %80 = vector.shape_cast %79 : vector<1x16x16xbf16> to vector<16x16xbf16>
    %cst_71 = arith.constant dense<0.000000e+00> : vector<25x16xf32>
    %81 = tpu.matmul %78, %80, %cst_71 {dimension_numbers = #tpu.dot_dimension_numbers<[1], [0], [0], [1], [0, 0, 1, 1], [], []>} : vector<25x16xbf16>, vector<16x16xbf16>, vector<25x16xf32> -> vector<25x16xf32>
    %82 = arith.addf %74, %81 : vector<25x16xf32>
    %c9 = arith.constant 9 : index
    %c0_72 = arith.constant 0 : index
    %c0_73 = arith.constant 0 : index
    %83 = vector.load %arg4[%c9, %c0_72, %c0_73] : memref<16x25x144xbf16, #tpu.memory_space<vmem>>, vector<1x25x144xbf16>
    %84 = vector.shape_cast %83 : vector<1x25x144xbf16> to vector<25x144xbf16>
    %cst_74 = arith.constant dense<0.000000e+00> : vector<25x16xf32>
    %85 = tpu.matmul %84, %9, %cst_74 {dimension_numbers = #tpu.dot_dimension_numbers<[1], [0], [0], [1], [0, 0, 1, 1], [], []>} : vector<25x144xbf16>, vector<144x16xbf16>, vector<25x16xf32> -> vector<25x16xf32>
    %86 = arith.truncf %85 : vector<25x16xf32> to vector<25x16xbf16>
    %c9_75 = arith.constant 9 : index
    %c0_76 = arith.constant 0 : index
    %c0_77 = arith.constant 0 : index
    %87 = vector.load %arg5[%c9_75, %c0_76, %c0_77] : memref<16x16x16xbf16, #tpu.memory_space<vmem>>, vector<1x16x16xbf16>
    %88 = vector.shape_cast %87 : vector<1x16x16xbf16> to vector<16x16xbf16>
    %cst_78 = arith.constant dense<0.000000e+00> : vector<25x16xf32>
    %89 = tpu.matmul %86, %88, %cst_78 {dimension_numbers = #tpu.dot_dimension_numbers<[1], [0], [0], [1], [0, 0, 1, 1], [], []>} : vector<25x16xbf16>, vector<16x16xbf16>, vector<25x16xf32> -> vector<25x16xf32>
    %90 = arith.addf %82, %89 : vector<25x16xf32>
    %c10 = arith.constant 10 : index
    %c0_79 = arith.constant 0 : index
    %c0_80 = arith.constant 0 : index
    %91 = vector.load %arg4[%c10, %c0_79, %c0_80] : memref<16x25x144xbf16, #tpu.memory_space<vmem>>, vector<1x25x144xbf16>
    %92 = vector.shape_cast %91 : vector<1x25x144xbf16> to vector<25x144xbf16>
    %cst_81 = arith.constant dense<0.000000e+00> : vector<25x16xf32>
    %93 = tpu.matmul %92, %9, %cst_81 {dimension_numbers = #tpu.dot_dimension_numbers<[1], [0], [0], [1], [0, 0, 1, 1], [], []>} : vector<25x144xbf16>, vector<144x16xbf16>, vector<25x16xf32> -> vector<25x16xf32>
    %94 = arith.truncf %93 : vector<25x16xf32> to vector<25x16xbf16>
    %c10_82 = arith.constant 10 : index
    %c0_83 = arith.constant 0 : index
    %c0_84 = arith.constant 0 : index
    %95 = vector.load %arg5[%c10_82, %c0_83, %c0_84] : memref<16x16x16xbf16, #tpu.memory_space<vmem>>, vector<1x16x16xbf16>
    %96 = vector.shape_cast %95 : vector<1x16x16xbf16> to vector<16x16xbf16>
    %cst_85 = arith.constant dense<0.000000e+00> : vector<25x16xf32>
    %97 = tpu.matmul %94, %96, %cst_85 {dimension_numbers = #tpu.dot_dimension_numbers<[1], [0], [0], [1], [0, 0, 1, 1], [], []>} : vector<25x16xbf16>, vector<16x16xbf16>, vector<25x16xf32> -> vector<25x16xf32>
    %98 = arith.addf %90, %97 : vector<25x16xf32>
    %c11 = arith.constant 11 : index
    %c0_86 = arith.constant 0 : index
    %c0_87 = arith.constant 0 : index
    %99 = vector.load %arg4[%c11, %c0_86, %c0_87] : memref<16x25x144xbf16, #tpu.memory_space<vmem>>, vector<1x25x144xbf16>
    %100 = vector.shape_cast %99 : vector<1x25x144xbf16> to vector<25x144xbf16>
    %cst_88 = arith.constant dense<0.000000e+00> : vector<25x16xf32>
    %101 = tpu.matmul %100, %9, %cst_88 {dimension_numbers = #tpu.dot_dimension_numbers<[1], [0], [0], [1], [0, 0, 1, 1], [], []>} : vector<25x144xbf16>, vector<144x16xbf16>, vector<25x16xf32> -> vector<25x16xf32>
    %102 = arith.truncf %101 : vector<25x16xf32> to vector<25x16xbf16>
    %c11_89 = arith.constant 11 : index
    %c0_90 = arith.constant 0 : index
    %c0_91 = arith.constant 0 : index
    %103 = vector.load %arg5[%c11_89, %c0_90, %c0_91] : memref<16x16x16xbf16, #tpu.memory_space<vmem>>, vector<1x16x16xbf16>
    %104 = vector.shape_cast %103 : vector<1x16x16xbf16> to vector<16x16xbf16>
    %cst_92 = arith.constant dense<0.000000e+00> : vector<25x16xf32>
    %105 = tpu.matmul %102, %104, %cst_92 {dimension_numbers = #tpu.dot_dimension_numbers<[1], [0], [0], [1], [0, 0, 1, 1], [], []>} : vector<25x16xbf16>, vector<16x16xbf16>, vector<25x16xf32> -> vector<25x16xf32>
    %106 = arith.addf %98, %105 : vector<25x16xf32>
    %c12 = arith.constant 12 : index
    %c0_93 = arith.constant 0 : index
    %c0_94 = arith.constant 0 : index
    %107 = vector.load %arg4[%c12, %c0_93, %c0_94] : memref<16x25x144xbf16, #tpu.memory_space<vmem>>, vector<1x25x144xbf16>
    %108 = vector.shape_cast %107 : vector<1x25x144xbf16> to vector<25x144xbf16>
    %cst_95 = arith.constant dense<0.000000e+00> : vector<25x16xf32>
    %109 = tpu.matmul %108, %9, %cst_95 {dimension_numbers = #tpu.dot_dimension_numbers<[1], [0], [0], [1], [0, 0, 1, 1], [], []>} : vector<25x144xbf16>, vector<144x16xbf16>, vector<25x16xf32> -> vector<25x16xf32>
    %110 = arith.truncf %109 : vector<25x16xf32> to vector<25x16xbf16>
    %c12_96 = arith.constant 12 : index
    %c0_97 = arith.constant 0 : index
    %c0_98 = arith.constant 0 : index
    %111 = vector.load %arg5[%c12_96, %c0_97, %c0_98] : memref<16x16x16xbf16, #tpu.memory_space<vmem>>, vector<1x16x16xbf16>
    %112 = vector.shape_cast %111 : vector<1x16x16xbf16> to vector<16x16xbf16>
    %cst_99 = arith.constant dense<0.000000e+00> : vector<25x16xf32>
    %113 = tpu.matmul %110, %112, %cst_99 {dimension_numbers = #tpu.dot_dimension_numbers<[1], [0], [0], [1], [0, 0, 1, 1], [], []>} : vector<25x16xbf16>, vector<16x16xbf16>, vector<25x16xf32> -> vector<25x16xf32>
    %114 = arith.addf %106, %113 : vector<25x16xf32>
    %c13 = arith.constant 13 : index
    %c0_100 = arith.constant 0 : index
    %c0_101 = arith.constant 0 : index
    %115 = vector.load %arg4[%c13, %c0_100, %c0_101] : memref<16x25x144xbf16, #tpu.memory_space<vmem>>, vector<1x25x144xbf16>
    %116 = vector.shape_cast %115 : vector<1x25x144xbf16> to vector<25x144xbf16>
    %cst_102 = arith.constant dense<0.000000e+00> : vector<25x16xf32>
    %117 = tpu.matmul %116, %9, %cst_102 {dimension_numbers = #tpu.dot_dimension_numbers<[1], [0], [0], [1], [0, 0, 1, 1], [], []>} : vector<25x144xbf16>, vector<144x16xbf16>, vector<25x16xf32> -> vector<25x16xf32>
    %118 = arith.truncf %117 : vector<25x16xf32> to vector<25x16xbf16>
    %c13_103 = arith.constant 13 : index
    %c0_104 = arith.constant 0 : index
    %c0_105 = arith.constant 0 : index
    %119 = vector.load %arg5[%c13_103, %c0_104, %c0_105] : memref<16x16x16xbf16, #tpu.memory_space<vmem>>, vector<1x16x16xbf16>
    %120 = vector.shape_cast %119 : vector<1x16x16xbf16> to vector<16x16xbf16>
    %cst_106 = arith.constant dense<0.000000e+00> : vector<25x16xf32>
    %121 = tpu.matmul %118, %120, %cst_106 {dimension_numbers = #tpu.dot_dimension_numbers<[1], [0], [0], [1], [0, 0, 1, 1], [], []>} : vector<25x16xbf16>, vector<16x16xbf16>, vector<25x16xf32> -> vector<25x16xf32>
    %122 = arith.addf %114, %121 : vector<25x16xf32>
    %c14 = arith.constant 14 : index
    %c0_107 = arith.constant 0 : index
    %c0_108 = arith.constant 0 : index
    %123 = vector.load %arg4[%c14, %c0_107, %c0_108] : memref<16x25x144xbf16, #tpu.memory_space<vmem>>, vector<1x25x144xbf16>
    %124 = vector.shape_cast %123 : vector<1x25x144xbf16> to vector<25x144xbf16>
    %cst_109 = arith.constant dense<0.000000e+00> : vector<25x16xf32>
    %125 = tpu.matmul %124, %9, %cst_109 {dimension_numbers = #tpu.dot_dimension_numbers<[1], [0], [0], [1], [0, 0, 1, 1], [], []>} : vector<25x144xbf16>, vector<144x16xbf16>, vector<25x16xf32> -> vector<25x16xf32>
    %126 = arith.truncf %125 : vector<25x16xf32> to vector<25x16xbf16>
    %c14_110 = arith.constant 14 : index
    %c0_111 = arith.constant 0 : index
    %c0_112 = arith.constant 0 : index
    %127 = vector.load %arg5[%c14_110, %c0_111, %c0_112] : memref<16x16x16xbf16, #tpu.memory_space<vmem>>, vector<1x16x16xbf16>
    %128 = vector.shape_cast %127 : vector<1x16x16xbf16> to vector<16x16xbf16>
    %cst_113 = arith.constant dense<0.000000e+00> : vector<25x16xf32>
    %129 = tpu.matmul %126, %128, %cst_113 {dimension_numbers = #tpu.dot_dimension_numbers<[1], [0], [0], [1], [0, 0, 1, 1], [], []>} : vector<25x16xbf16>, vector<16x16xbf16>, vector<25x16xf32> -> vector<25x16xf32>
    %130 = arith.addf %122, %129 : vector<25x16xf32>
    %c15 = arith.constant 15 : index
    %c0_114 = arith.constant 0 : index
    %c0_115 = arith.constant 0 : index
    %131 = vector.load %arg4[%c15, %c0_114, %c0_115] : memref<16x25x144xbf16, #tpu.memory_space<vmem>>, vector<1x25x144xbf16>
    %132 = vector.shape_cast %131 : vector<1x25x144xbf16> to vector<25x144xbf16>
    %cst_116 = arith.constant dense<0.000000e+00> : vector<25x16xf32>
    %133 = tpu.matmul %132, %9, %cst_116 {dimension_numbers = #tpu.dot_dimension_numbers<[1], [0], [0], [1], [0, 0, 1, 1], [], []>} : vector<25x144xbf16>, vector<144x16xbf16>, vector<25x16xf32> -> vector<25x16xf32>
    %134 = arith.truncf %133 : vector<25x16xf32> to vector<25x16xbf16>
    %c15_117 = arith.constant 15 : index
    %c0_118 = arith.constant 0 : index
    %c0_119 = arith.constant 0 : index
    %135 = vector.load %arg5[%c15_117, %c0_118, %c0_119] : memref<16x16x16xbf16, #tpu.memory_space<vmem>>, vector<1x16x16xbf16>
    %136 = vector.shape_cast %135 : vector<1x16x16xbf16> to vector<16x16xbf16>
    %cst_120 = arith.constant dense<0.000000e+00> : vector<25x16xf32>
    %137 = tpu.matmul %134, %136, %cst_120 {dimension_numbers = #tpu.dot_dimension_numbers<[1], [0], [0], [1], [0, 0, 1, 1], [], []>} : vector<25x16xbf16>, vector<16x16xbf16>, vector<25x16xf32> -> vector<25x16xf32>
    %138 = arith.addf %130, %137 : vector<25x16xf32>
    %c0_121 = arith.constant 0 : index
    %c0_122 = arith.constant 0 : index
    %139 = vector.load %arg6[%c0_121, %c0_122] : memref<1x16xf32, #tpu.memory_space<vmem>>, vector<1x16xf32>
    %140 = vector.broadcast %139 : vector<1x16xf32> to vector<25x16xf32>
    %141 = arith.addf %138, %140 : vector<25x16xf32>
    %cst_123 = arith.constant 0.000000e+00 : f32
    %142 = vector.broadcast %cst_123 : f32 to vector<25x16xf32>
    %143 = arith.maximumf %141, %142 : vector<25x16xf32>
    %144 = arith.truncf %143 : vector<25x16xf32> to vector<25x16xbf16>
    %cst_124 = arith.constant 0.000000e+00 : f32
    %145 = vector.broadcast %cst_124 : f32 to vector<9x16xf32>
    %c0_125 = arith.constant 0 : index
    %c0_126 = arith.constant 0 : index
    %c0_127 = arith.constant 0 : index
    %146 = vector.load %arg7[%c0_125, %c0_126, %c0_127] : memref<9x9x25xbf16, #tpu.memory_space<vmem>>, vector<1x9x25xbf16>
    %147 = vector.shape_cast %146 : vector<1x9x25xbf16> to vector<9x25xbf16>
    %cst_128 = arith.constant dense<0.000000e+00> : vector<9x16xf32>
    %148 = tpu.matmul %147, %144, %cst_128 {dimension_numbers = #tpu.dot_dimension_numbers<[1], [0], [0], [1], [0, 0, 1, 1], [], []>} : vector<9x25xbf16>, vector<25x16xbf16>, vector<9x16xf32> -> vector<9x16xf32>
    %149 = arith.truncf %148 : vector<9x16xf32> to vector<9x16xbf16>
    %c0_129 = arith.constant 0 : index
    %c0_130 = arith.constant 0 : index
    %c0_131 = arith.constant 0 : index
    %150 = vector.load %arg8[%c0_129, %c0_130, %c0_131] : memref<9x16x16xbf16, #tpu.memory_space<vmem>>, vector<1x16x16xbf16>
    %151 = vector.shape_cast %150 : vector<1x16x16xbf16> to vector<16x16xbf16>
    %cst_132 = arith.constant dense<0.000000e+00> : vector<9x16xf32>
    %152 = tpu.matmul %149, %151, %cst_132 {dimension_numbers = #tpu.dot_dimension_numbers<[1], [0], [0], [1], [0, 0, 1, 1], [], []>} : vector<9x16xbf16>, vector<16x16xbf16>, vector<9x16xf32> -> vector<9x16xf32>
    %153 = arith.addf %145, %152 : vector<9x16xf32>
    %c1_133 = arith.constant 1 : index
    %c0_134 = arith.constant 0 : index
    %c0_135 = arith.constant 0 : index
    %154 = vector.load %arg7[%c1_133, %c0_134, %c0_135] : memref<9x9x25xbf16, #tpu.memory_space<vmem>>, vector<1x9x25xbf16>
    %155 = vector.shape_cast %154 : vector<1x9x25xbf16> to vector<9x25xbf16>
    %cst_136 = arith.constant dense<0.000000e+00> : vector<9x16xf32>
    %156 = tpu.matmul %155, %144, %cst_136 {dimension_numbers = #tpu.dot_dimension_numbers<[1], [0], [0], [1], [0, 0, 1, 1], [], []>} : vector<9x25xbf16>, vector<25x16xbf16>, vector<9x16xf32> -> vector<9x16xf32>
    %157 = arith.truncf %156 : vector<9x16xf32> to vector<9x16xbf16>
    %c1_137 = arith.constant 1 : index
    %c0_138 = arith.constant 0 : index
    %c0_139 = arith.constant 0 : index
    %158 = vector.load %arg8[%c1_137, %c0_138, %c0_139] : memref<9x16x16xbf16, #tpu.memory_space<vmem>>, vector<1x16x16xbf16>
    %159 = vector.shape_cast %158 : vector<1x16x16xbf16> to vector<16x16xbf16>
    %cst_140 = arith.constant dense<0.000000e+00> : vector<9x16xf32>
    %160 = tpu.matmul %157, %159, %cst_140 {dimension_numbers = #tpu.dot_dimension_numbers<[1], [0], [0], [1], [0, 0, 1, 1], [], []>} : vector<9x16xbf16>, vector<16x16xbf16>, vector<9x16xf32> -> vector<9x16xf32>
    %161 = arith.addf %153, %160 : vector<9x16xf32>
    %c2_141 = arith.constant 2 : index
    %c0_142 = arith.constant 0 : index
    %c0_143 = arith.constant 0 : index
    %162 = vector.load %arg7[%c2_141, %c0_142, %c0_143] : memref<9x9x25xbf16, #tpu.memory_space<vmem>>, vector<1x9x25xbf16>
    %163 = vector.shape_cast %162 : vector<1x9x25xbf16> to vector<9x25xbf16>
    %cst_144 = arith.constant dense<0.000000e+00> : vector<9x16xf32>
    %164 = tpu.matmul %163, %144, %cst_144 {dimension_numbers = #tpu.dot_dimension_numbers<[1], [0], [0], [1], [0, 0, 1, 1], [], []>} : vector<9x25xbf16>, vector<25x16xbf16>, vector<9x16xf32> -> vector<9x16xf32>
    %165 = arith.truncf %164 : vector<9x16xf32> to vector<9x16xbf16>
    %c2_145 = arith.constant 2 : index
    %c0_146 = arith.constant 0 : index
    %c0_147 = arith.constant 0 : index
    %166 = vector.load %arg8[%c2_145, %c0_146, %c0_147] : memref<9x16x16xbf16, #tpu.memory_space<vmem>>, vector<1x16x16xbf16>
    %167 = vector.shape_cast %166 : vector<1x16x16xbf16> to vector<16x16xbf16>
    %cst_148 = arith.constant dense<0.000000e+00> : vector<9x16xf32>
    %168 = tpu.matmul %165, %167, %cst_148 {dimension_numbers = #tpu.dot_dimension_numbers<[1], [0], [0], [1], [0, 0, 1, 1], [], []>} : vector<9x16xbf16>, vector<16x16xbf16>, vector<9x16xf32> -> vector<9x16xf32>
    %169 = arith.addf %161, %168 : vector<9x16xf32>
    %c3_149 = arith.constant 3 : index
    %c0_150 = arith.constant 0 : index
    %c0_151 = arith.constant 0 : index
    %170 = vector.load %arg7[%c3_149, %c0_150, %c0_151] : memref<9x9x25xbf16, #tpu.memory_space<vmem>>, vector<1x9x25xbf16>
    %171 = vector.shape_cast %170 : vector<1x9x25xbf16> to vector<9x25xbf16>
    %cst_152 = arith.constant dense<0.000000e+00> : vector<9x16xf32>
    %172 = tpu.matmul %171, %144, %cst_152 {dimension_numbers = #tpu.dot_dimension_numbers<[1], [0], [0], [1], [0, 0, 1, 1], [], []>} : vector<9x25xbf16>, vector<25x16xbf16>, vector<9x16xf32> -> vector<9x16xf32>
    %173 = arith.truncf %172 : vector<9x16xf32> to vector<9x16xbf16>
    %c3_153 = arith.constant 3 : index
    %c0_154 = arith.constant 0 : index
    %c0_155 = arith.constant 0 : index
    %174 = vector.load %arg8[%c3_153, %c0_154, %c0_155] : memref<9x16x16xbf16, #tpu.memory_space<vmem>>, vector<1x16x16xbf16>
    %175 = vector.shape_cast %174 : vector<1x16x16xbf16> to vector<16x16xbf16>
    %cst_156 = arith.constant dense<0.000000e+00> : vector<9x16xf32>
    %176 = tpu.matmul %173, %175, %cst_156 {dimension_numbers = #tpu.dot_dimension_numbers<[1], [0], [0], [1], [0, 0, 1, 1], [], []>} : vector<9x16xbf16>, vector<16x16xbf16>, vector<9x16xf32> -> vector<9x16xf32>
    %177 = arith.addf %169, %176 : vector<9x16xf32>
    %c4_157 = arith.constant 4 : index
    %c0_158 = arith.constant 0 : index
    %c0_159 = arith.constant 0 : index
    %178 = vector.load %arg7[%c4_157, %c0_158, %c0_159] : memref<9x9x25xbf16, #tpu.memory_space<vmem>>, vector<1x9x25xbf16>
    %179 = vector.shape_cast %178 : vector<1x9x25xbf16> to vector<9x25xbf16>
    %cst_160 = arith.constant dense<0.000000e+00> : vector<9x16xf32>
    %180 = tpu.matmul %179, %144, %cst_160 {dimension_numbers = #tpu.dot_dimension_numbers<[1], [0], [0], [1], [0, 0, 1, 1], [], []>} : vector<9x25xbf16>, vector<25x16xbf16>, vector<9x16xf32> -> vector<9x16xf32>
    %181 = arith.truncf %180 : vector<9x16xf32> to vector<9x16xbf16>
    %c4_161 = arith.constant 4 : index
    %c0_162 = arith.constant 0 : index
    %c0_163 = arith.constant 0 : index
    %182 = vector.load %arg8[%c4_161, %c0_162, %c0_163] : memref<9x16x16xbf16, #tpu.memory_space<vmem>>, vector<1x16x16xbf16>
    %183 = vector.shape_cast %182 : vector<1x16x16xbf16> to vector<16x16xbf16>
    %cst_164 = arith.constant dense<0.000000e+00> : vector<9x16xf32>
    %184 = tpu.matmul %181, %183, %cst_164 {dimension_numbers = #tpu.dot_dimension_numbers<[1], [0], [0], [1], [0, 0, 1, 1], [], []>} : vector<9x16xbf16>, vector<16x16xbf16>, vector<9x16xf32> -> vector<9x16xf32>
    %185 = arith.addf %177, %184 : vector<9x16xf32>
    %c5_165 = arith.constant 5 : index
    %c0_166 = arith.constant 0 : index
    %c0_167 = arith.constant 0 : index
    %186 = vector.load %arg7[%c5_165, %c0_166, %c0_167] : memref<9x9x25xbf16, #tpu.memory_space<vmem>>, vector<1x9x25xbf16>
    %187 = vector.shape_cast %186 : vector<1x9x25xbf16> to vector<9x25xbf16>
    %cst_168 = arith.constant dense<0.000000e+00> : vector<9x16xf32>
    %188 = tpu.matmul %187, %144, %cst_168 {dimension_numbers = #tpu.dot_dimension_numbers<[1], [0], [0], [1], [0, 0, 1, 1], [], []>} : vector<9x25xbf16>, vector<25x16xbf16>, vector<9x16xf32> -> vector<9x16xf32>
    %189 = arith.truncf %188 : vector<9x16xf32> to vector<9x16xbf16>
    %c5_169 = arith.constant 5 : index
    %c0_170 = arith.constant 0 : index
    %c0_171 = arith.constant 0 : index
    %190 = vector.load %arg8[%c5_169, %c0_170, %c0_171] : memref<9x16x16xbf16, #tpu.memory_space<vmem>>, vector<1x16x16xbf16>
    %191 = vector.shape_cast %190 : vector<1x16x16xbf16> to vector<16x16xbf16>
    %cst_172 = arith.constant dense<0.000000e+00> : vector<9x16xf32>
    %192 = tpu.matmul %189, %191, %cst_172 {dimension_numbers = #tpu.dot_dimension_numbers<[1], [0], [0], [1], [0, 0, 1, 1], [], []>} : vector<9x16xbf16>, vector<16x16xbf16>, vector<9x16xf32> -> vector<9x16xf32>
    %193 = arith.addf %185, %192 : vector<9x16xf32>
    %c6_173 = arith.constant 6 : index
    %c0_174 = arith.constant 0 : index
    %c0_175 = arith.constant 0 : index
    %194 = vector.load %arg7[%c6_173, %c0_174, %c0_175] : memref<9x9x25xbf16, #tpu.memory_space<vmem>>, vector<1x9x25xbf16>
    %195 = vector.shape_cast %194 : vector<1x9x25xbf16> to vector<9x25xbf16>
    %cst_176 = arith.constant dense<0.000000e+00> : vector<9x16xf32>
    %196 = tpu.matmul %195, %144, %cst_176 {dimension_numbers = #tpu.dot_dimension_numbers<[1], [0], [0], [1], [0, 0, 1, 1], [], []>} : vector<9x25xbf16>, vector<25x16xbf16>, vector<9x16xf32> -> vector<9x16xf32>
    %197 = arith.truncf %196 : vector<9x16xf32> to vector<9x16xbf16>
    %c6_177 = arith.constant 6 : index
    %c0_178 = arith.constant 0 : index
    %c0_179 = arith.constant 0 : index
    %198 = vector.load %arg8[%c6_177, %c0_178, %c0_179] : memref<9x16x16xbf16, #tpu.memory_space<vmem>>, vector<1x16x16xbf16>
    %199 = vector.shape_cast %198 : vector<1x16x16xbf16> to vector<16x16xbf16>
    %cst_180 = arith.constant dense<0.000000e+00> : vector<9x16xf32>
    %200 = tpu.matmul %197, %199, %cst_180 {dimension_numbers = #tpu.dot_dimension_numbers<[1], [0], [0], [1], [0, 0, 1, 1], [], []>} : vector<9x16xbf16>, vector<16x16xbf16>, vector<9x16xf32> -> vector<9x16xf32>
    %201 = arith.addf %193, %200 : vector<9x16xf32>
    %c7_181 = arith.constant 7 : index
    %c0_182 = arith.constant 0 : index
    %c0_183 = arith.constant 0 : index
    %202 = vector.load %arg7[%c7_181, %c0_182, %c0_183] : memref<9x9x25xbf16, #tpu.memory_space<vmem>>, vector<1x9x25xbf16>
    %203 = vector.shape_cast %202 : vector<1x9x25xbf16> to vector<9x25xbf16>
    %cst_184 = arith.constant dense<0.000000e+00> : vector<9x16xf32>
    %204 = tpu.matmul %203, %144, %cst_184 {dimension_numbers = #tpu.dot_dimension_numbers<[1], [0], [0], [1], [0, 0, 1, 1], [], []>} : vector<9x25xbf16>, vector<25x16xbf16>, vector<9x16xf32> -> vector<9x16xf32>
    %205 = arith.truncf %204 : vector<9x16xf32> to vector<9x16xbf16>
    %c7_185 = arith.constant 7 : index
    %c0_186 = arith.constant 0 : index
    %c0_187 = arith.constant 0 : index
    %206 = vector.load %arg8[%c7_185, %c0_186, %c0_187] : memref<9x16x16xbf16, #tpu.memory_space<vmem>>, vector<1x16x16xbf16>
    %207 = vector.shape_cast %206 : vector<1x16x16xbf16> to vector<16x16xbf16>
    %cst_188 = arith.constant dense<0.000000e+00> : vector<9x16xf32>
    %208 = tpu.matmul %205, %207, %cst_188 {dimension_numbers = #tpu.dot_dimension_numbers<[1], [0], [0], [1], [0, 0, 1, 1], [], []>} : vector<9x16xbf16>, vector<16x16xbf16>, vector<9x16xf32> -> vector<9x16xf32>
    %209 = arith.addf %201, %208 : vector<9x16xf32>
    %c8_189 = arith.constant 8 : index
    %c0_190 = arith.constant 0 : index
    %c0_191 = arith.constant 0 : index
    %210 = vector.load %arg7[%c8_189, %c0_190, %c0_191] : memref<9x9x25xbf16, #tpu.memory_space<vmem>>, vector<1x9x25xbf16>
    %211 = vector.shape_cast %210 : vector<1x9x25xbf16> to vector<9x25xbf16>
    %cst_192 = arith.constant dense<0.000000e+00> : vector<9x16xf32>
    %212 = tpu.matmul %211, %144, %cst_192 {dimension_numbers = #tpu.dot_dimension_numbers<[1], [0], [0], [1], [0, 0, 1, 1], [], []>} : vector<9x25xbf16>, vector<25x16xbf16>, vector<9x16xf32> -> vector<9x16xf32>
    %213 = arith.truncf %212 : vector<9x16xf32> to vector<9x16xbf16>
    %c8_193 = arith.constant 8 : index
    %c0_194 = arith.constant 0 : index
    %c0_195 = arith.constant 0 : index
    %214 = vector.load %arg8[%c8_193, %c0_194, %c0_195] : memref<9x16x16xbf16, #tpu.memory_space<vmem>>, vector<1x16x16xbf16>
    %215 = vector.shape_cast %214 : vector<1x16x16xbf16> to vector<16x16xbf16>
    %cst_196 = arith.constant dense<0.000000e+00> : vector<9x16xf32>
    %216 = tpu.matmul %213, %215, %cst_196 {dimension_numbers = #tpu.dot_dimension_numbers<[1], [0], [0], [1], [0, 0, 1, 1], [], []>} : vector<9x16xbf16>, vector<16x16xbf16>, vector<9x16xf32> -> vector<9x16xf32>
    %217 = arith.addf %209, %216 : vector<9x16xf32>
    %c0_197 = arith.constant 0 : index
    %c0_198 = arith.constant 0 : index
    %218 = vector.load %arg9[%c0_197, %c0_198] : memref<1x16xf32, #tpu.memory_space<vmem>>, vector<1x16xf32>
    %219 = vector.broadcast %218 : vector<1x16xf32> to vector<9x16xf32>
    %220 = arith.addf %217, %219 : vector<9x16xf32>
    %cst_199 = arith.constant 0.000000e+00 : f32
    %221 = vector.broadcast %cst_199 : f32 to vector<9x16xf32>
    %222 = arith.maximumf %220, %221 : vector<9x16xf32>
    %223 = arith.truncf %222 : vector<9x16xf32> to vector<9x16xbf16>
    %cst_200 = arith.constant 0.000000e+00 : f32
    %224 = vector.broadcast %cst_200 : f32 to vector<1x16xf32>
    %225 = vector.extract_strided_slice %223 {offsets = [0, 0], sizes = [1, 16], strides = [1, 1]} : vector<9x16xbf16> to vector<1x16xbf16>
    %c0_201 = arith.constant 0 : index
    %c0_202 = arith.constant 0 : index
    %c0_203 = arith.constant 0 : index
    %226 = vector.load %arg10[%c0_201, %c0_202, %c0_203] : memref<9x16x16xbf16, #tpu.memory_space<vmem>>, vector<1x16x16xbf16>
    %227 = vector.shape_cast %226 : vector<1x16x16xbf16> to vector<16x16xbf16>
    %cst_204 = arith.constant dense<0.000000e+00> : vector<1x16xf32>
    %228 = tpu.matmul %225, %227, %cst_204 {dimension_numbers = #tpu.dot_dimension_numbers<[1], [0], [0], [1], [0, 0, 1, 1], [], []>} : vector<1x16xbf16>, vector<16x16xbf16>, vector<1x16xf32> -> vector<1x16xf32>
    %229 = arith.addf %224, %228 : vector<1x16xf32>
    %230 = vector.extract_strided_slice %223 {offsets = [1, 0], sizes = [1, 16], strides = [1, 1]} : vector<9x16xbf16> to vector<1x16xbf16>
    %c1_205 = arith.constant 1 : index
    %c0_206 = arith.constant 0 : index
    %c0_207 = arith.constant 0 : index
    %231 = vector.load %arg10[%c1_205, %c0_206, %c0_207] : memref<9x16x16xbf16, #tpu.memory_space<vmem>>, vector<1x16x16xbf16>
    %232 = vector.shape_cast %231 : vector<1x16x16xbf16> to vector<16x16xbf16>
    %cst_208 = arith.constant dense<0.000000e+00> : vector<1x16xf32>
    %233 = tpu.matmul %230, %232, %cst_208 {dimension_numbers = #tpu.dot_dimension_numbers<[1], [0], [0], [1], [0, 0, 1, 1], [], []>} : vector<1x16xbf16>, vector<16x16xbf16>, vector<1x16xf32> -> vector<1x16xf32>
    %234 = arith.addf %229, %233 : vector<1x16xf32>
    %235 = vector.extract_strided_slice %223 {offsets = [2, 0], sizes = [1, 16], strides = [1, 1]} : vector<9x16xbf16> to vector<1x16xbf16>
    %c2_209 = arith.constant 2 : index
    %c0_210 = arith.constant 0 : index
    %c0_211 = arith.constant 0 : index
    %236 = vector.load %arg10[%c2_209, %c0_210, %c0_211] : memref<9x16x16xbf16, #tpu.memory_space<vmem>>, vector<1x16x16xbf16>
    %237 = vector.shape_cast %236 : vector<1x16x16xbf16> to vector<16x16xbf16>
    %cst_212 = arith.constant dense<0.000000e+00> : vector<1x16xf32>
    %238 = tpu.matmul %235, %237, %cst_212 {dimension_numbers = #tpu.dot_dimension_numbers<[1], [0], [0], [1], [0, 0, 1, 1], [], []>} : vector<1x16xbf16>, vector<16x16xbf16>, vector<1x16xf32> -> vector<1x16xf32>
    %239 = arith.addf %234, %238 : vector<1x16xf32>
    %240 = vector.extract_strided_slice %223 {offsets = [3, 0], sizes = [1, 16], strides = [1, 1]} : vector<9x16xbf16> to vector<1x16xbf16>
    %c3_213 = arith.constant 3 : index
    %c0_214 = arith.constant 0 : index
    %c0_215 = arith.constant 0 : index
    %241 = vector.load %arg10[%c3_213, %c0_214, %c0_215] : memref<9x16x16xbf16, #tpu.memory_space<vmem>>, vector<1x16x16xbf16>
    %242 = vector.shape_cast %241 : vector<1x16x16xbf16> to vector<16x16xbf16>
    %cst_216 = arith.constant dense<0.000000e+00> : vector<1x16xf32>
    %243 = tpu.matmul %240, %242, %cst_216 {dimension_numbers = #tpu.dot_dimension_numbers<[1], [0], [0], [1], [0, 0, 1, 1], [], []>} : vector<1x16xbf16>, vector<16x16xbf16>, vector<1x16xf32> -> vector<1x16xf32>
    %244 = arith.addf %239, %243 : vector<1x16xf32>
    %245 = vector.extract_strided_slice %223 {offsets = [4, 0], sizes = [1, 16], strides = [1, 1]} : vector<9x16xbf16> to vector<1x16xbf16>
    %c4_217 = arith.constant 4 : index
    %c0_218 = arith.constant 0 : index
    %c0_219 = arith.constant 0 : index
    %246 = vector.load %arg10[%c4_217, %c0_218, %c0_219] : memref<9x16x16xbf16, #tpu.memory_space<vmem>>, vector<1x16x16xbf16>
    %247 = vector.shape_cast %246 : vector<1x16x16xbf16> to vector<16x16xbf16>
    %cst_220 = arith.constant dense<0.000000e+00> : vector<1x16xf32>
    %248 = tpu.matmul %245, %247, %cst_220 {dimension_numbers = #tpu.dot_dimension_numbers<[1], [0], [0], [1], [0, 0, 1, 1], [], []>} : vector<1x16xbf16>, vector<16x16xbf16>, vector<1x16xf32> -> vector<1x16xf32>
    %249 = arith.addf %244, %248 : vector<1x16xf32>
    %250 = vector.extract_strided_slice %223 {offsets = [5, 0], sizes = [1, 16], strides = [1, 1]} : vector<9x16xbf16> to vector<1x16xbf16>
    %c5_221 = arith.constant 5 : index
    %c0_222 = arith.constant 0 : index
    %c0_223 = arith.constant 0 : index
    %251 = vector.load %arg10[%c5_221, %c0_222, %c0_223] : memref<9x16x16xbf16, #tpu.memory_space<vmem>>, vector<1x16x16xbf16>
    %252 = vector.shape_cast %251 : vector<1x16x16xbf16> to vector<16x16xbf16>
    %cst_224 = arith.constant dense<0.000000e+00> : vector<1x16xf32>
    %253 = tpu.matmul %250, %252, %cst_224 {dimension_numbers = #tpu.dot_dimension_numbers<[1], [0], [0], [1], [0, 0, 1, 1], [], []>} : vector<1x16xbf16>, vector<16x16xbf16>, vector<1x16xf32> -> vector<1x16xf32>
    %254 = arith.addf %249, %253 : vector<1x16xf32>
    %255 = vector.extract_strided_slice %223 {offsets = [6, 0], sizes = [1, 16], strides = [1, 1]} : vector<9x16xbf16> to vector<1x16xbf16>
    %c6_225 = arith.constant 6 : index
    %c0_226 = arith.constant 0 : index
    %c0_227 = arith.constant 0 : index
    %256 = vector.load %arg10[%c6_225, %c0_226, %c0_227] : memref<9x16x16xbf16, #tpu.memory_space<vmem>>, vector<1x16x16xbf16>
    %257 = vector.shape_cast %256 : vector<1x16x16xbf16> to vector<16x16xbf16>
    %cst_228 = arith.constant dense<0.000000e+00> : vector<1x16xf32>
    %258 = tpu.matmul %255, %257, %cst_228 {dimension_numbers = #tpu.dot_dimension_numbers<[1], [0], [0], [1], [0, 0, 1, 1], [], []>} : vector<1x16xbf16>, vector<16x16xbf16>, vector<1x16xf32> -> vector<1x16xf32>
    %259 = arith.addf %254, %258 : vector<1x16xf32>
    %260 = vector.extract_strided_slice %223 {offsets = [7, 0], sizes = [1, 16], strides = [1, 1]} : vector<9x16xbf16> to vector<1x16xbf16>
    %c7_229 = arith.constant 7 : index
    %c0_230 = arith.constant 0 : index
    %c0_231 = arith.constant 0 : index
    %261 = vector.load %arg10[%c7_229, %c0_230, %c0_231] : memref<9x16x16xbf16, #tpu.memory_space<vmem>>, vector<1x16x16xbf16>
    %262 = vector.shape_cast %261 : vector<1x16x16xbf16> to vector<16x16xbf16>
    %cst_232 = arith.constant dense<0.000000e+00> : vector<1x16xf32>
    %263 = tpu.matmul %260, %262, %cst_232 {dimension_numbers = #tpu.dot_dimension_numbers<[1], [0], [0], [1], [0, 0, 1, 1], [], []>} : vector<1x16xbf16>, vector<16x16xbf16>, vector<1x16xf32> -> vector<1x16xf32>
    %264 = arith.addf %259, %263 : vector<1x16xf32>
    %265 = vector.extract_strided_slice %223 {offsets = [8, 0], sizes = [1, 16], strides = [1, 1]} : vector<9x16xbf16> to vector<1x16xbf16>
    %c8_233 = arith.constant 8 : index
    %c0_234 = arith.constant 0 : index
    %c0_235 = arith.constant 0 : index
    %266 = vector.load %arg10[%c8_233, %c0_234, %c0_235] : memref<9x16x16xbf16, #tpu.memory_space<vmem>>, vector<1x16x16xbf16>
    %267 = vector.shape_cast %266 : vector<1x16x16xbf16> to vector<16x16xbf16>
    %cst_236 = arith.constant dense<0.000000e+00> : vector<1x16xf32>
    %268 = tpu.matmul %265, %267, %cst_236 {dimension_numbers = #tpu.dot_dimension_numbers<[1], [0], [0], [1], [0, 0, 1, 1], [], []>} : vector<1x16xbf16>, vector<16x16xbf16>, vector<1x16xf32> -> vector<1x16xf32>
    %269 = arith.addf %264, %268 : vector<1x16xf32>
    %c0_237 = arith.constant 0 : index
    %c0_238 = arith.constant 0 : index
    %270 = vector.load %arg11[%c0_237, %c0_238] : memref<1x16xf32, #tpu.memory_space<vmem>>, vector<1x16xf32>
    %271 = arith.addf %269, %270 : vector<1x16xf32>
    %cst_239 = arith.constant 0.000000e+00 : f32
    %272 = vector.broadcast %cst_239 : f32 to vector<1x16xf32>
    %273 = arith.maximumf %271, %272 : vector<1x16xf32>
    %274 = arith.truncf %273 : vector<1x16xf32> to vector<1x16xbf16>
    %c0_240 = arith.constant 0 : index
    %c0_241 = arith.constant 0 : index
    %275 = vector.load %arg12[%c0_240, %c0_241] : memref<16x10xbf16, #tpu.memory_space<vmem>>, vector<16x10xbf16>
    %cst_242 = arith.constant dense<0.000000e+00> : vector<1x10xf32>
    %276 = tpu.matmul %274, %275, %cst_242 {dimension_numbers = #tpu.dot_dimension_numbers<[1], [0], [0], [1], [0, 0, 1, 1], [], []>} : vector<1x16xbf16>, vector<16x10xbf16>, vector<1x10xf32> -> vector<1x10xf32>
    %c0_243 = arith.constant 0 : index
    %c0_244 = arith.constant 0 : index
    %277 = vector.load %arg13[%c0_243, %c0_244] : memref<1x10xf32, #tpu.memory_space<vmem>>, vector<1x10xf32>
    %278 = arith.addf %276, %277 : vector<1x10xf32>
    %cst_245 = arith.constant 0.000000e+00 : f32
    %279 = vector.broadcast %cst_245 : f32 to vector<1x10xf32>
    %280 = arith.maximumf %278, %279 : vector<1x10xf32>
    %c0_246 = arith.constant 0 : index
    %c0_247 = arith.constant 0 : index
    %c0_248 = arith.constant 0 : index
    %281 = vector.load %arg14[%c0_246, %c0_247, %c0_248] : memref<1x1x10xf32, #tpu.memory_space<vmem>>, vector<1x1x10xf32>
    %282 = vector.shape_cast %281 : vector<1x1x10xf32> to vector<1x10xf32>
    %283 = vector.shape_cast %280 : vector<1x10xf32> to vector<1x1x10xf32>
    tpu.vector_store %arg14[%c0_246, %c0_247, %c0_248], %283 {strides = array<i32>} : memref<1x1x10xf32, #tpu.memory_space<vmem>>, vector<1x1x10xf32>,
    return
  }
  func.func @transform_0(%arg0: i32) -> (i32, i32, i32) {
    %c0_i32 = arith.constant 0 : i32
    %c0_i32_0 = arith.constant 0 : i32
    %c0_i32_1 = arith.constant 0 : i32
    return %arg0, %c0_i32, %c0_i32_0 : i32, i32, i32
  }
  func.func @transform_1(%arg0: i32) -> (i32, i32) {
    %c0_i32 = arith.constant 0 : i32
    %c0_i32_0 = arith.constant 0 : i32
    %c0_i32_1 = arith.constant 0 : i32
    return %c0_i32, %c0_i32_0 : i32, i32
  }
  func.func @transform_2(%arg0: i32) -> (i32, i32) {
    %c0_i32 = arith.constant 0 : i32
    %c0_i32_0 = arith.constant 0 : i32
    %c0_i32_1 = arith.constant 0 : i32
    return %c0_i32, %c0_i32_0 : i32, i32
  }
  func.func @transform_3(%arg0: i32) -> (i32, i32, i32) {
    %c0_i32 = arith.constant 0 : i32
    %c0_i32_0 = arith.constant 0 : i32
    %c0_i32_1 = arith.constant 0 : i32
    %c0_i32_2 = arith.constant 0 : i32
    return %c0_i32, %c0_i32_0, %c0_i32_1 : i32, i32, i32
  }
  func.func @transform_4(%arg0: i32) -> (i32, i32, i32) {
    %c0_i32 = arith.constant 0 : i32
    %c0_i32_0 = arith.constant 0 : i32
    %c0_i32_1 = arith.constant 0 : i32
    %c0_i32_2 = arith.constant 0 : i32
    return %c0_i32, %c0_i32_0, %c0_i32_1 : i32, i32, i32
  }
  func.func @transform_5(%arg0: i32) -> (i32, i32) {
    %c0_i32 = arith.constant 0 : i32
    %c0_i32_0 = arith.constant 0 : i32
    %c0_i32_1 = arith.constant 0 : i32
    return %c0_i32, %c0_i32_0 : i32, i32
  }
  func.func @transform_6(%arg0: i32) -> (i32, i32, i32) {
    %c0_i32 = arith.constant 0 : i32
    %c0_i32_0 = arith.constant 0 : i32
    %c0_i32_1 = arith.constant 0 : i32
    %c0_i32_2 = arith.constant 0 : i32
    return %c0_i32, %c0_i32_0, %c0_i32_1 : i32, i32, i32
  }
  func.func @transform_7(%arg0: i32) -> (i32, i32, i32) {
    %c0_i32 = arith.constant 0 : i32
    %c0_i32_0 = arith.constant 0 : i32
    %c0_i32_1 = arith.constant 0 : i32
    %c0_i32_2 = arith.constant 0 : i32
    return %c0_i32, %c0_i32_0, %c0_i32_1 : i32, i32, i32
  }
  func.func @transform_8(%arg0: i32) -> (i32, i32) {
    %c0_i32 = arith.constant 0 : i32
    %c0_i32_0 = arith.constant 0 : i32
    %c0_i32_1 = arith.constant 0 : i32
    return %c0_i32, %c0_i32_0 : i32, i32
  }
  func.func @transform_9(%arg0: i32) -> (i32, i32, i32) {
    %c0_i32 = arith.constant 0 : i32
    %c0_i32_0 = arith.constant 0 : i32
    %c0_i32_1 = arith.constant 0 : i32
    %c0_i32_2 = arith.constant 0 : i32
    return %c0_i32, %c0_i32_0, %c0_i32_1 : i32, i32, i32
  }
  func.func @transform_10(%arg0: i32) -> (i32, i32) {
    %c0_i32 = arith.constant 0 : i32
    %c0_i32_0 = arith.constant 0 : i32
    %c0_i32_1 = arith.constant 0 : i32
    return %c0_i32, %c0_i32_0 : i32, i32
  }
  func.func @transform_11(%arg0: i32) -> (i32, i32) {
    %c0_i32 = arith.constant 0 : i32
    %c0_i32_0 = arith.constant 0 : i32
    %c0_i32_1 = arith.constant 0 : i32
    return %c0_i32, %c0_i32_0 : i32, i32
  }
  func.func @transform_12(%arg0: i32) -> (i32, i32) {
    %c0_i32 = arith.constant 0 : i32
    %c0_i32_0 = arith.constant 0 : i32
    %c0_i32_1 = arith.constant 0 : i32
    return %c0_i32, %c0_i32_0 : i32, i32
  }
  func.func @transform_13(%arg0: i32) -> (i32, i32, i32) {
    %c0_i32 = arith.constant 0 : i32
    %c0_i32_0 = arith.constant 0 : i32
    %c0_i32_1 = arith.constant 0 : i32
    return %arg0, %c0_i32, %c0_i32_0 : i32, i32, i32
  }
}

</mosaic_0001>

<llo_original>
// kernel: net_forward.1
$region0: #{net_forward.1}
  #allocation0 [shape = 'u32[]', space=smem, size = 0x4, offset = 0x4, fixed_abs, tag = 'smem constant byte address 0x4 - core index']
  #allocation1 [shape = 'u32[144,128]{1,0:T(1,128)}', space=vmem, size = 0x12000, scoped, tag = 'internal scratch']
  %s0 = inlined_call_operand.vmem [shape: bf16[2,144,25], index: 0, kind: input, shape index: {}]
  %s1 = inlined_call_operand.vmem [shape: bf16[25,16], index: 1, kind: input, shape index: {}]
  %s2 = inlined_call_operand.vmem [shape: f32[1,16], index: 2, kind: input, shape index: {}]
  %s3 = inlined_call_operand.vmem [shape: bf16[16,25,144], index: 3, kind: input, shape index: {}]
  %s4 = inlined_call_operand.vmem [shape: bf16[16,16,16], index: 4, kind: input, shape index: {}]
  %s5 = inlined_call_operand.vmem [shape: f32[1,16], index: 5, kind: input, shape index: {}]
  %s6 = inlined_call_operand.vmem [shape: bf16[9,9,25], index: 6, kind: input, shape index: {}]
  %s7 = inlined_call_operand.vmem [shape: bf16[9,16,16], index: 7, kind: input, shape index: {}]
  %s8 = inlined_call_operand.vmem [shape: f32[1,16], index: 8, kind: input, shape index: {}]
  %s9 = inlined_call_operand.vmem [shape: bf16[9,16,16], index: 9, kind: input, shape index: {}]
  %s10 = inlined_call_operand.vmem [shape: f32[1,16], index: 10, kind: input, shape index: {}]
  %s11 = inlined_call_operand.vmem [shape: bf16[16,10], index: 11, kind: input, shape index: {}]
  %s12 = inlined_call_operand.vmem [shape: f32[1,10], index: 12, kind: input, shape index: {}]
  %s13 = inlined_call_operand.hbm [shape: f32[2,1,10], index: 13, kind: output, shape index: {}]
  %s14 = sld [smem:[#allocation0]]
  $region85: #{net_forward.1} parent=0
    _
  %s16 = ssub.s32 1, %s14
  %s17 = scalar_select 0, %s16, %s14
  $region1: #{net_forward.1} parent=0
    #allocation2 [shape = 'u8[1024]{0}', space=vmem, size = 0x400, scoped, tag = 'output window, operand 0']
    #allocation3 [shape = 's32[2]{0}', space=sflag, size = 0x8, scoped, tag = 'scoped memory for net_forward.1']
    %18 = vsyncpa [#allocation3], 0
    %s19 = scalar_lea.sflag [#allocation3], 1
    %20 = vsyncpa %s19, 0
    loop: start=0, step=1, limit=4
    $region2: #{net_forward.1} parent=1 // loop_pre_header
      _
    $region3: #{net_forward.1} parent=1 // loop_header
      %s22 = sphi 0, %s26
      %p23 = scmp.ge.s32.totalorder %s22, 4
      %s32 = sphi 0, %s34
      %s35 = sphi 0, %s32
      %s36 = sphi 0, %s35
      %s52 = sphi 0, %s36
      %s56 = sphi 0, %s56
      %s58 = sphi 0, %s56
      %s59 = sphi 0, %s58
      %s73 = sphi 0, %s59
      %s77 = sphi 0, %s77
      %s79 = sphi 0, %s77
      %s80 = sphi 0, %s79
      %s94 = sphi 0, %s80
      %s98 = sphi 0, %s98
      %s100 = sphi 0, %s98
      %s101 = sphi 0, %s100
      %s115 = sphi 0, %s101
      %s119 = sphi 0, %s119
      %s121 = sphi 0, %s119
      %s122 = sphi 0, %s121
      %s136 = sphi 0, %s122
      %s140 = sphi 0, %s140
      %s142 = sphi 0, %s140
      %s143 = sphi 0, %s142
      %s157 = sphi 0, %s143
      %s161 = sphi 0, %s161
      %s163 = sphi 0, %s161
      %s164 = sphi 0, %s163
      %s178 = sphi 0, %s164
      %s182 = sphi 0, %s182
      %s184 = sphi 0, %s182
      %s185 = sphi 0, %s184
      %s199 = sphi 0, %s185
      %s203 = sphi 0, %s203
      %s205 = sphi 0, %s203
      %s206 = sphi 0, %s205
      %s220 = sphi 0, %s206
      %s224 = sphi 0, %s224
      %s226 = sphi 0, %s224
      %s227 = sphi 0, %s226
      %s241 = sphi 0, %s227
      %s245 = sphi 0, %s245
      %s247 = sphi 0, %s245
      %s248 = sphi 0, %s247
      %s262 = sphi 0, %s248
      %s266 = sphi 0, %s266
      %s268 = sphi 0, %s266
      %s269 = sphi 0, %s268
      %s283 = sphi 0, %s269
      %s287 = sphi 0, %s287
      %s289 = sphi 0, %s287
      %s290 = sphi 0, %s289
      %s304 = sphi 0, %s290
      %s310 = sphi 0, %s312
      %s313 = sphi 0, %s310
      %s314 = sphi 0, %s313
      %s330 = sphi 0, %s314
    $region4: #{net_forward.1} parent=1 // loop_header_branch
      %25 = sbr.rel (%p23) target = $region8
    $region5: #{net_forward.1} parent=1 // loop_body
      %s27 = ssub.s32 %s22, 1
      %s28 = ssub.s32 %s22, 2
      %s29 = sadd.s32 %s22, 1
      %s30 = ssub.s32 %s22, %s29
      %p31 = scmp.eq.s32.totalorder %s30, 0
      %s33 = sadd.s32 %s32, 1
      %s34 = scalar_select %p31, %s32, %s33
      %p37 = pneg %p31
      %p38 = scmp.eq.s32.totalorder %s22, 1
      %p39 = por %p37, %p38
      %p40 = scmp.ne.s32.totalorder %s32, %s35
      %p41 = scmp.eq.s32.totalorder %s22, 0
      %p42 = por %p40, %p41
      %p43 = scmp.ne.s32.totalorder %s32, %s35
      %p44 = scmp.eq.s32.totalorder %s27, 1
      %p45 = por %p43, %p44
      %p46 = scmp.ne.s32.totalorder %s35, %s36
      %p47 = scmp.eq.s32.totalorder %s27, 0
      %p48 = por %p46, %p47
      %p49 = scmp.ne.s32.totalorder %s35, %s36
      %p50 = scmp.eq.s32.totalorder %s28, 1
      %p51 = por %p49, %p50
      %p53 = scmp.ne.s32.totalorder %s36, %s52
      %p54 = scmp.eq.s32.totalorder %s28, 0
      %p55 = por %p53, %p54
      %s57 = sadd.s32 %s56, 1
      %p60 = scmp.eq.s32.totalorder %s22, 1
      %p61 = scmp.ne.s32.totalorder %s56, %s58
      %p62 = scmp.eq.s32.totalorder %s22, 0
      %p63 = por %p61, %p62
      %p64 = scmp.ne.s32.totalorder %s56, %s58
      %p65 = scmp.eq.s32.totalorder %s27, 1
      %p66 = por %p64, %p65
      %p67 = scmp.ne.s32.totalorder %s58, %s59
      %p68 = scmp.eq.s32.totalorder %s27, 0
      %p69 = por %p67, %p68
      %p70 = scmp.ne.s32.totalorder %s58, %s59
      %p71 = scmp.eq.s32.totalorder %s28, 1
      %p72 = por %p70, %p71
      %p74 = scmp.ne.s32.totalorder %s59, %s73
      %p75 = scmp.eq.s32.totalorder %s28, 0
      %p76 = por %p74, %p75
      %s78 = sadd.s32 %s77, 1
      %p81 = scmp.eq.s32.totalorder %s22, 1
      %p82 = scmp.ne.s32.totalorder %s77, %s79
      %p83 = scmp.eq.s32.totalorder %s22, 0
      %p84 = por %p82, %p83
      %p85 = scmp.ne.s32.totalorder %s77, %s79
      %p86 = scmp.eq.s32.totalorder %s27, 1
      %p87 = por %p85, %p86
      %p88 = scmp.ne.s32.totalorder %s79, %s80
      %p89 = scmp.eq.s32.totalorder %s27, 0
      %p90 = por %p88, %p89
      %p91 = scmp.ne.s32.totalorder %s79, %s80
      %p92 = scmp.eq.s32.totalorder %s28, 1
      %p93 = por %p91, %p92
      %p95 = scmp.ne.s32.totalorder %s80, %s94
      %p96 = scmp.eq.s32.totalorder %s28, 0
      %p97 = por %p95, %p96
      %s99 = sadd.s32 %s98, 1
      %p102 = scmp.eq.s32.totalorder %s22, 1
      %p103 = scmp.ne.s32.totalorder %s98, %s100
      %p104 = scmp.eq.s32.totalorder %s22, 0
      %p105 = por %p103, %p104
      %p106 = scmp.ne.s32.totalorder %s98, %s100
      %p107 = scmp.eq.s32.totalorder %s27, 1
      %p108 = por %p106, %p107
      %p109 = scmp.ne.s32.totalorder %s100, %s101
      %p110 = scmp.eq.s32.totalorder %s27, 0
      %p111 = por %p109, %p110
      %p112 = scmp.ne.s32.totalorder %s100, %s101
      %p113 = scmp.eq.s32.totalorder %s28, 1
      %p114 = por %p112, %p113
      %p116 = scmp.ne.s32.totalorder %s101, %s115
      %p117 = scmp.eq.s32.totalorder %s28, 0
      %p118 = por %p116, %p117
      %s120 = sadd.s32 %s119, 1
      %p123 = scmp.eq.s32.totalorder %s22, 1
      %p124 = scmp.ne.s32.totalorder %s119, %s121
      %p125 = scmp.eq.s32.totalorder %s22, 0
      %p126 = por %p124, %p125
      %p127 = scmp.ne.s32.totalorder %s119, %s121
      %p128 = scmp.eq.s32.totalorder %s27, 1
      %p129 = por %p127, %p128
      %p130 = scmp.ne.s32.totalorder %s121, %s122
      %p131 = scmp.eq.s32.totalorder %s27, 0
      %p132 = por %p130, %p131
      %p133 = scmp.ne.s32.totalorder %s121, %s122
      %p134 = scmp.eq.s32.totalorder %s28, 1
      %p135 = por %p133, %p134
      %p137 = scmp.ne.s32.totalorder %s122, %s136
      %p138 = scmp.eq.s32.totalorder %s28, 0
      %p139 = por %p137, %p138
      %s141 = sadd.s32 %s140, 1
      %p144 = scmp.eq.s32.totalorder %s22, 1
      %p145 = scmp.ne.s32.totalorder %s140, %s142
      %p146 = scmp.eq.s32.totalorder %s22, 0
      %p147 = por %p145, %p146
      %p148 = scmp.ne.s32.totalorder %s140, %s142
      %p149 = scmp.eq.s32.totalorder %s27, 1
      %p150 = por %p148, %p149
      %p151 = scmp.ne.s32.totalorder %s142, %s143
      %p152 = scmp.eq.s32.totalorder %s27, 0
      %p153 = por %p151, %p152
      %p154 = scmp.ne.s32.totalorder %s142, %s143
      %p155 = scmp.eq.s32.totalorder %s28, 1
      %p156 = por %p154, %p155
      %p158 = scmp.ne.s32.totalorder %s143, %s157
      %p159 = scmp.eq.s32.totalorder %s28, 0
      %p160 = por %p158, %p159
      %s162 = sadd.s32 %s161, 1
      %p165 = scmp.eq.s32.totalorder %s22, 1
      %p166 = scmp.ne.s32.totalorder %s161, %s163
      %p167 = scmp.eq.s32.totalorder %s22, 0
      %p168 = por %p166, %p167
      %p169 = scmp.ne.s32.totalorder %s161, %s163
      %p170 = scmp.eq.s32.totalorder %s27, 1
      %p171 = por %p169, %p170
      %p172 = scmp.ne.s32.totalorder %s163, %s164
      %p173 = scmp.eq.s32.totalorder %s27, 0
      %p174 = por %p172, %p173
      %p175 = scmp.ne.s32.totalorder %s163, %s164
      %p176 = scmp.eq.s32.totalorder %s28, 1
      %p177 = por %p175, %p176
      %p179 = scmp.ne.s32.totalorder %s164, %s178
      %p180 = scmp.eq.s32.totalorder %s28, 0
      %p181 = por %p179, %p180
      %s183 = sadd.s32 %s182, 1
      %p186 = scmp.eq.s32.totalorder %s22, 1
      %p187 = scmp.ne.s32.totalorder %s182, %s184
      %p188 = scmp.eq.s32.totalorder %s22, 0
      %p189 = por %p187, %p188
      %p190 = scmp.ne.s32.totalorder %s182, %s184
      %p191 = scmp.eq.s32.totalorder %s27, 1
      %p192 = por %p190, %p191
      %p193 = scmp.ne.s32.totalorder %s184, %s185
      %p194 = scmp.eq.s32.totalorder %s27, 0
      %p195 = por %p193, %p194
      %p196 = scmp.ne.s32.totalorder %s184, %s185
      %p197 = scmp.eq.s32.totalorder %s28, 1
      %p198 = por %p196, %p197
      %p200 = scmp.ne.s32.totalorder %s185, %s199
      %p201 = scmp.eq.s32.totalorder %s28, 0
      %p202 = por %p200, %p201
      %s204 = sadd.s32 %s203, 1
      %p207 = scmp.eq.s32.totalorder %s22, 1
      %p208 = scmp.ne.s32.totalorder %s203, %s205
      %p209 = scmp.eq.s32.totalorder %s22, 0
      %p210 = por %p208, %p209
      %p211 = scmp.ne.s32.totalorder %s203, %s205
      %p212 = scmp.eq.s32.totalorder %s27, 1
      %p213 = por %p211, %p212
      %p214 = scmp.ne.s32.totalorder %s205, %s206
      %p215 = scmp.eq.s32.totalorder %s27, 0
      %p216 = por %p214, %p215
      %p217 = scmp.ne.s32.totalorder %s205, %s206
      %p218 = scmp.eq.s32.totalorder %s28, 1
      %p219 = por %p217, %p218
      %p221 = scmp.ne.s32.totalorder %s206, %s220
      %p222 = scmp.eq.s32.totalorder %s28, 0
      %p223 = por %p221, %p222
      %s225 = sadd.s32 %s224, 1
      %p228 = scmp.eq.s32.totalorder %s22, 1
      %p229 = scmp.ne.s32.totalorder %s224, %s226
      %p230 = scmp.eq.s32.totalorder %s22, 0
      %p231 = por %p229, %p230
      %p232 = scmp.ne.s32.totalorder %s224, %s226
      %p233 = scmp.eq.s32.totalorder %s27, 1
      %p234 = por %p232, %p233
      %p235 = scmp.ne.s32.totalorder %s226, %s227
      %p236 = scmp.eq.s32.totalorder %s27, 0
      %p237 = por %p235, %p236
      %p238 = scmp.ne.s32.totalorder %s226, %s227
      %p239 = scmp.eq.s32.totalorder %s28, 1
      %p240 = por %p238, %p239
      %p242 = scmp.ne.s32.totalorder %s227, %s241
      %p243 = scmp.eq.s32.totalorder %s28, 0
      %p244 = por %p242, %p243
      %s246 = sadd.s32 %s245, 1
      %p249 = scmp.eq.s32.totalorder %s22, 1
      %p250 = scmp.ne.s32.totalorder %s245, %s247
      %p251 = scmp.eq.s32.totalorder %s22, 0
      %p252 = por %p250, %p251
      %p253 = scmp.ne.s32.totalorder %s245, %s247
      %p254 = scmp.eq.s32.totalorder %s27, 1
      %p255 = por %p253, %p254
      %p256 = scmp.ne.s32.totalorder %s247, %s248
      %p257 = scmp.eq.s32.totalorder %s27, 0
      %p258 = por %p256, %p257
      %p259 = scmp.ne.s32.totalorder %s247, %s248
      %p260 = scmp.eq.s32.totalorder %s28, 1
      %p261 = por %p259, %p260
      %p263 = scmp.ne.s32.totalorder %s248, %s262
      %p264 = scmp.eq.s32.totalorder %s28, 0
      %p265 = por %p263, %p264
      %s267 = sadd.s32 %s266, 1
      %p270 = scmp.eq.s32.totalorder %s22, 1
      %p271 = scmp.ne.s32.totalorder %s266, %s268
      %p272 = scmp.eq.s32.totalorder %s22, 0
      %p273 = por %p271, %p272
      %p274 = scmp.ne.s32.totalorder %s266, %s268
      %p275 = scmp.eq.s32.totalorder %s27, 1
      %p276 = por %p274, %p275
      %p277 = scmp.ne.s32.totalorder %s268, %s269
      %p278 = scmp.eq.s32.totalorder %s27, 0
      %p279 = por %p277, %p278
      %p280 = scmp.ne.s32.totalorder %s268, %s269
      %p281 = scmp.eq.s32.totalorder %s28, 1
      %p282 = por %p280, %p281
      %p284 = scmp.ne.s32.totalorder %s269, %s283
      %p285 = scmp.eq.s32.totalorder %s28, 0
      %p286 = por %p284, %p285
      %s288 = sadd.s32 %s287, 1
      %p291 = scmp.eq.s32.totalorder %s22, 1
      %p292 = scmp.ne.s32.totalorder %s287, %s289
      %p293 = scmp.eq.s32.totalorder %s22, 0
      %p294 = por %p292, %p293
      %p295 = scmp.ne.s32.totalorder %s287, %s289
      %p296 = scmp.eq.s32.totalorder %s27, 1
      %p297 = por %p295, %p296
      %p298 = scmp.ne.s32.totalorder %s289, %s290
      %p299 = scmp.eq.s32.totalorder %s27, 0
      %p300 = por %p298, %p299
      %p301 = scmp.ne.s32.totalorder %s289, %s290
      %p302 = scmp.eq.s32.totalorder %s28, 1
      %p303 = por %p301, %p302
      %p305 = scmp.ne.s32.totalorder %s290, %s304
      %p306 = scmp.eq.s32.totalorder %s28, 0
      %p307 = por %p305, %p306
      %s308 = ssub.s32 %s22, %s29
      %p309 = scmp.eq.s32.totalorder %s308, 0
      %s311 = sadd.s32 %s310, 1
      %s312 = scalar_select %p309, %s310, %s311
      %p315 = pneg %p309
      %p316 = scmp.eq.s32.totalorder %s22, 1
      %p317 = por %p315, %p316
      %p318 = scmp.ne.s32.totalorder %s310, %s313
      %p319 = scmp.eq.s32.totalorder %s22, 0
      %p320 = por %p318, %p319
      %p321 = scmp.ne.s32.totalorder %s310, %s313
      %p322 = scmp.eq.s32.totalorder %s27, 1
      %p323 = por %p321, %p322
      %p324 = scmp.ne.s32.totalorder %s313, %s314
      %p325 = scmp.eq.s32.totalorder %s27, 0
      %p326 = por %p324, %p325
      %p327 = scmp.ne.s32.totalorder %s313, %s314
      %p328 = scmp.eq.s32.totalorder %s28, 1
      %p329 = por %p327, %p328
      %p331 = scmp.ne.s32.totalorder %s314, %s330
      %p332 = scmp.eq.s32.totalorder %s28, 0
      %p333 = por %p331, %p332
      %p334 = scmp.le.s32.totalorder 1, %s22
      %p335 = scmp.lt.s32.totalorder %s22, 3
      %p336 = pnand %p334, %p335
      %p337 = pneg %p336
      // Predicated region
      $region9: #{net_forward.1} parent=5 // pred_check
        _
      $region10: #{net_forward.1} parent=5 // pred_check_branch
        %339 = sbr.rel (%p336) target = $region12
      $region11: #{net_forward.1} parent=5 // pred_region
        %s340 = ssub.s32 %s22, 1
        // Predicated region
        $region13: #{net_forward.1} parent=11 // pred_check
          %p341 = pneg %p69
        $region14: #{net_forward.1} parent=11 // pred_check_branch
          %343 = sbr.rel (%p341) target = $region16
        $region15: #{net_forward.1} parent=11 // pred_region
          _
        $region16: #{net_forward.1} parent=11 // pred_fallthru
          _
        // Predicated region
        $region17: #{net_forward.1} parent=11 // pred_check
          %p344 = pneg %p90
        $region18: #{net_forward.1} parent=11 // pred_check_branch
          %346 = sbr.rel (%p344) target = $region20
        $region19: #{net_forward.1} parent=11 // pred_region
          _
        $region20: #{net_forward.1} parent=11 // pred_fallthru
          _
        // Predicated region
        $region21: #{net_forward.1} parent=11 // pred_check
          %p347 = pneg %p111
        $region22: #{net_forward.1} parent=11 // pred_check_branch
          %349 = sbr.rel (%p347) target = $region24
        $region23: #{net_forward.1} parent=11 // pred_region
          _
        $region24: #{net_forward.1} parent=11 // pred_fallthru
          _
        // Predicated region
        $region25: #{net_forward.1} parent=11 // pred_check
          %p350 = pneg %p132
        $region26: #{net_forward.1} parent=11 // pred_check_branch
          %352 = sbr.rel (%p350) target = $region28
        $region27: #{net_forward.1} parent=11 // pred_region
          _
        $region28: #{net_forward.1} parent=11 // pred_fallthru
          _
        // Predicated region
        $region29: #{net_forward.1} parent=11 // pred_check
          %p353 = pneg %p153
        $region30: #{net_forward.1} parent=11 // pred_check_branch
          %355 = sbr.rel (%p353) target = $region32
        $region31: #{net_forward.1} parent=11 // pred_region
          _
        $region32: #{net_forward.1} parent=11 // pred_fallthru
          _
        // Predicated region
        $region33: #{net_forward.1} parent=11 // pred_check
          %p356 = pneg %p174
        $region34: #{net_forward.1} parent=11 // pred_check_branch
          %358 = sbr.rel (%p356) target = $region36
        $region35: #{net_forward.1} parent=11 // pred_region
          _
        $region36: #{net_forward.1} parent=11 // pred_fallthru
          _
        // Predicated region
        $region37: #{net_forward.1} parent=11 // pred_check
          %p359 = pneg %p195
        $region38: #{net_forward.1} parent=11 // pred_check_branch
          %361 = sbr.rel (%p359) target = $region40
        $region39: #{net_forward.1} parent=11 // pred_region
          _
        $region40: #{net_forward.1} parent=11 // pred_fallthru
          _
        // Predicated region
        $region41: #{net_forward.1} parent=11 // pred_check
          %p362 = pneg %p216
        $region42: #{net_forward.1} parent=11 // pred_check_branch
          %364 = sbr.rel (%p362) target = $region44
        $region43: #{net_forward.1} parent=11 // pred_region
          _
        $region44: #{net_forward.1} parent=11 // pred_fallthru
          _
        // Predicated region
        $region45: #{net_forward.1} parent=11 // pred_check
          %p365 = pneg %p237
        $region46: #{net_forward.1} parent=11 // pred_check_branch
          %367 = sbr.rel (%p365) target = $region48
        $region47: #{net_forward.1} parent=11 // pred_region
          _
        $region48: #{net_forward.1} parent=11 // pred_fallthru
          _
        // Predicated region
        $region49: #{net_forward.1} parent=11 // pred_check
          %p368 = pneg %p258
        $region50: #{net_forward.1} parent=11 // pred_check_branch
          %370 = sbr.rel (%p368) target = $region52
        $region51: #{net_forward.1} parent=11 // pred_region
          _
        $region52: #{net_forward.1} parent=11 // pred_fallthru
          _
        // Predicated region
        $region53: #{net_forward.1} parent=11 // pred_check
          %p371 = pneg %p279
        $region54: #{net_forward.1} parent=11 // pred_check_branch
          %373 = sbr.rel (%p371) target = $region56
        $region55: #{net_forward.1} parent=11 // pred_region
          _
        $region56: #{net_forward.1} parent=11 // pred_fallthru
          _
        // Predicated region
        $region57: #{net_forward.1} parent=11 // pred_check
          %p374 = pneg %p300
        $region58: #{net_forward.1} parent=11 // pred_check_branch
          %376 = sbr.rel (%p374) target = $region60
        $region59: #{net_forward.1} parent=11 // pred_region
          _
        $region60: #{net_forward.1} parent=11 // pred_fallthru
          _
      $region12: #{net_forward.1} parent=5 // pred_fallthru
        _
      %p377 = scmp.lt.s32.totalorder %s22, 2
      // Predicated region
      $region61: #{net_forward.1} parent=5 // pred_check
        %p378 = pneg %p377
      $region62: #{net_forward.1} parent=5 // pred_check_branch
        %380 = sbr.rel (%p378) target = $region64
      $region63: #{net_forward.1} parent=5 // pred_region
        // Predicated region
        $region65: #{net_forward.1} parent=63 // pred_check
          %p381 = pneg %p42
        $region66: #{net_forward.1} parent=63 // pred_check_branch
          %383 = sbr.rel (%p381) target = $region68
        $region67: #{net_forward.1} parent=63 // pred_region
          %p384 = scmp.lt.s32.totalorder %s22, 1
          %s385 = scalar_select %p384, %s22, 1
          %s386 = smul.addr %s385, 18
          %s387 = smul.addr %s386, 4
          %s388 = scalar_lea.vmem %s0, %s387
        $region68: #{net_forward.1} parent=63 // pred_fallthru
          _
      $region64: #{net_forward.1} parent=5 // pred_fallthru
        _
      %p389 = scmp.le.s32.totalorder 1, %s22
      %p390 = scmp.lt.s32.totalorder %s22, 3
      %p391 = pnand %p389, %p390
      %p392 = pneg %p391
      // Predicated region
      $region69: #{net_forward.1} parent=5 // pred_check
        _
      $region70: #{net_forward.1} parent=5 // pred_check_branch
        %394 = sbr.rel (%p391) target = $region72
      $region71: #{net_forward.1} parent=5 // pred_region
        %s395 = ssub.s32 %s22, 1
        %p396 = scmp.lt.s32.totalorder %s27, 1
        %s397 = scalar_select %p396, %s27, 1
        %s398 = smul.addr %s397, 18
        %s399 = smul.addr %s398, 4
        %s400 = scalar_lea.vmem %s0, %s399
        %p401 = pneg %p48
        %p402 = pneg %p45
        %p403 = pneg %p69
        %p404 = pneg %p66
        %p405 = pneg %p90
        %p406 = pneg %p87
        %p407 = pneg %p111
        %p408 = pneg %p108
        %p409 = pneg %p132
        %p410 = pneg %p129
        %p411 = pneg %p153
        %p412 = pneg %p150
        %p413 = pneg %p174
        %p414 = pneg %p171
        %p415 = pneg %p195
        %p416 = pneg %p192
        %p417 = pneg %p216
        %p418 = pneg %p213
        %p419 = pneg %p237
        %p420 = pneg %p234
        %p421 = pneg %p258
        %p422 = pneg %p255
        %p423 = pneg %p279
        %p424 = pneg %p276
        %p425 = pneg %p300
        %p426 = pneg %p297
        %p427 = pneg %p326
        %p428 = pneg %p323
        %s429 = sand.u32 %s313, 1
        %s430 = scalar_lea.sflag [#allocation3], %s429
        %s431 = sand.u32 %s313, 1
        %s432 = scalar_lea.vmem [#allocation2], %s431
        %p433 = scmp.lt.s32.totalorder %s27, 1
        %s434 = scalar_select %p433, %s27, 1
        %s435 = smul.addr %s434, 18
        %s436 = smul.addr %s435, 4
        %s437 = scalar_lea.vmem %s0, %s436
        %v439 = vld [vmem:[%s437] sm:$0xf]
        %v440 = vld [vmem:[%s437 + $0x4] sm:$0xf]
        %v441 = vld [vmem:[%s437 + $0x8] sm:$0xf]
        %v442 = vld [vmem:[%s437 + $0xc] sm:$0xf]
        %v443 = vld [vmem:[%s437 + $0x10] sm:$0xf]
        %v444 = vld [vmem:[%s437 + $0x14] sm:$0xf]
        %v445 = vld [vmem:[%s437 + $0x18] sm:$0xf]
        %v446 = vld [vmem:[%s437 + $0x1c] sm:$0xf]
        %v447 = vld [vmem:[%s437 + $0x20] sm:$0xf]
        %v448 = vld [vmem:[%s437 + $0x24] sm:$0xf]
        %v449 = vld [vmem:[%s437 + $0x28] sm:$0xf]
        %v450 = vld [vmem:[%s437 + $0x2c] sm:$0xf]
        %v451 = vld [vmem:[%s437 + $0x30] sm:$0xf]
        %v452 = vld [vmem:[%s437 + $0x34] sm:$0xf]
        %v453 = vld [vmem:[%s437 + $0x38] sm:$0xf]
        %v454 = vld [vmem:[%s437 + $0x3c] sm:$0xf]
        %v455 = vld [vmem:[%s437 + $0x40] sm:$0xf]
        %v456 = vld [vmem:[%s437 + $0x44] sm:$0xf]
        %v457 = vld [vmem:[%s1] sm:$0xf]
        %v458 = vld [vmem:[%s1 + $0x4] sm:$0xf]
        %v459 = vld [vmem:[%s1 + $0x8] sm:$0xf]
        %v460 = vld [vmem:[%s1 + $0xc] sm:$0x1]
        %v461 = vld [vmem:[%s2] sm:$0x1]
        %v463 = vlaneseq
        %v464 = vshrl.u32 %v463, 7
        %v465 = vsub.s32 0, %v464
        %v466 = vrot.slane %v461, %v465
        %v486 = vunpack.c.l.b16 %v439
        %v487 = vunpack.c.l.b16 %v440
        %v488 = vunpack.c.l.b16 %v441
        %v489 = vunpack.c.l.b16 %v442
        %v490 = vunpack.c.l.b16 %v443
        %v491 = vunpack.c.l.b16 %v444
        %v492 = vunpack.c.l.b16 %v445
        %v493 = vunpack.c.l.b16 %v446
        %v494 = vunpack.c.l.b16 %v447
        %v495 = vunpack.c.l.b16 %v448
        %v496 = vunpack.c.l.b16 %v449
        %v497 = vunpack.c.l.b16 %v450
        %v498 = vunpack.c.l.b16 %v451
        %v499 = vunpack.c.l.b16 %v452
        %v500 = vunpack.c.l.b16 %v453
        %v501 = vunpack.c.l.b16 %v454
        %v502 = vunpack.c.l.b16 %v455
        %v503 = vunpack.c.l.b16 %v456
        %v504 = vpack.c.b16 %v487, %v486
        %v505 = vpack.c.b16 %v489, %v488
        %v506 = vpack.c.b16 %v491, %v490
        %v507 = vpack.c.b16 %v493, %v492
        %v508 = vpack.c.b16 %v495, %v494
        %v509 = vpack.c.b16 %v497, %v496
        %v510 = vpack.c.b16 %v499, %v498
        %v511 = vpack.c.b16 %v501, %v500
        %v512 = vpack.c.b16 %v503, %v502
        %v517 = vunpack.c.l.b16 %v457
        %v518 = vunpack.c.l.b16 %v458
        %v519 = vunpack.c.l.b16 %v459
        %v520 = vunpack.c.l.b16 %v460
        %v521 = vpack.c.b16 %v518, %v517
        %v522 = vpack.c.b16 %v520, %v519
        %vm524 = vcmask 203776
        %v526 = vsel %vm524, %v504, 0
        %v529 = vsel %vm524, %v505, 0
        %v532 = vsel %vm524, %v506, 0
        %v535 = vsel %vm524, %v507, 0
        %v538 = vsel %vm524, %v508, 0
        %v541 = vsel %vm524, %v509, 0
        %v544 = vsel %vm524, %v510, 0
        %v547 = vsel %vm524, %v511, 0
        %v550 = vsel %vm524, %v512, 0
        %vm552 = vcmask 1043456
        %vm553 = vcmask 1044480
        %v554 = vsel %vm552, 4294967295, 65535
        %v555 = vsel %vm553, %v554, 0
        %v557 = vand.u32 %v522, %v555
        %559 = vmatprep.subr.bf16.mxu0 0
        %560 = vmatpush1.bf16.msra.mxu0 0
        %561 = vmatprep.subr.bf16.mxu0 0
        %562 = vmatpush1.bf16.msra.mxu0 0
        %563 = vmatprep.subr.bf16.mxu0 0
        %564 = vmatpush1.bf16.msra.mxu0 0
        %565 = vmatprep.subr.bf16.mxu0 0
        %566 = vmatpush1.bf16.msra.mxu0 0
        %567 = vmatprep.subr.bf16.mxu0 0
        %568 = vmatpush1.bf16.msra.mxu0 0
        %569 = vmatprep.subr.bf16.mxu0 0
        %570 = vmatpush1.bf16.msra.mxu0 0
        %571 = vmatprep.subr.bf16.mxu0 0
        %572 = vmatpush1.bf16.msra.mxu0 %v557
        %573 = vmatprep.subr.bf16.mxu0 0
        %574 = vmatpush1.bf16.msra.mxu0 %v521
        %575 = vmatprep.subr.bf16.mxu0 0
        %576 = vmatpush2.bf16.msra.mxu0 0
        %577 = vmatprep.subr.bf16.mxu0 0
        %578 = vmatpush2.bf16.msra.mxu0 0
        %579 = vmatprep.subr.bf16.mxu0 0
        %580 = vmatpush2.bf16.msra.mxu0 0
        %581 = vmatprep.subr.bf16.mxu0 0
        %582 = vmatpush2.bf16.msra.mxu0 0
        %583 = vmatprep.subr.bf16.mxu0 0
        %584 = vmatpush2.bf16.msra.mxu0 0
        %585 = vmatprep.subr.bf16.mxu0 0
        %586 = vmatpush2.bf16.msra.mxu0 0
        %587 = vmatprep.subr.bf16.mxu0 0
        %588 = vmatpush2.bf16.msra.mxu0 0
        %589 = vmatprep.subr.bf16.mxu0 0
        %590 = vmatpush2.bf16.msra.mxu0 0
        %591 = vmatprep.mubr.bf16.mxu0 0
        %592 = vmatmul.mubr.bf16.gmra.mxu0 %v526
        %v593 = vpop.f32.mrf.mxu0
        %v594 = vadd.f32 %v466, %v593
        %v595 = vpop.f32.mrf.mxu0
        %v596 = vpop.f32.mrf.mxu0
        %v597 = vadd.f32 %v466, %v596
        %v598 = vpop.f32.mrf.mxu0
        %599 = vmatprep.mubr.bf16.mxu0 0
        %600 = vmatmul.mubr.bf16.gmra.mxu0 %v529
        %v601 = vpop.f32.mrf.mxu0
        %v602 = vadd.f32 %v466, %v601
        %v603 = vpop.f32.mrf.mxu0
        %v604 = vpop.f32.mrf.mxu0
        %v605 = vadd.f32 %v466, %v604
        %v606 = vpop.f32.mrf.mxu0
        %607 = vmatprep.mubr.bf16.mxu0 0
        %608 = vmatmul.mubr.bf16.gmra.mxu0 %v532
        %v609 = vpop.f32.mrf.mxu0
        %v610 = vadd.f32 %v466, %v609
        %v611 = vpop.f32.mrf.mxu0
        %v612 = vpop.f32.mrf.mxu0
        %v613 = vadd.f32 %v466, %v612
        %v614 = vpop.f32.mrf.mxu0
        %615 = vmatprep.mubr.bf16.mxu0 0
        %616 = vmatmul.mubr.bf16.gmra.mxu0 %v535
        %v617 = vpop.f32.mrf.mxu0
        %v618 = vadd.f32 %v466, %v617
        %v619 = vpop.f32.mrf.mxu0
        %v620 = vpop.f32.mrf.mxu0
        %v621 = vadd.f32 %v466, %v620
        %v622 = vpop.f32.mrf.mxu0
        %623 = vmatprep.mubr.bf16.mxu0 0
        %624 = vmatmul.mubr.bf16.gmra.mxu0 %v538
        %v625 = vpop.f32.mrf.mxu0
        %v626 = vadd.f32 %v466, %v625
        %v627 = vpop.f32.mrf.mxu0
        %v628 = vpop.f32.mrf.mxu0
        %v629 = vadd.f32 %v466, %v628
        %v630 = vpop.f32.mrf.mxu0
        %631 = vmatprep.mubr.bf16.mxu0 0
        %632 = vmatmul.mubr.bf16.gmra.mxu0 %v541
        %v633 = vpop.f32.mrf.mxu0
        %v634 = vadd.f32 %v466, %v633
        %v635 = vpop.f32.mrf.mxu0
        %v636 = vpop.f32.mrf.mxu0
        %v637 = vadd.f32 %v466, %v636
        %v638 = vpop.f32.mrf.mxu0
        %639 = vmatprep.mubr.bf16.mxu0 0
        %640 = vmatmul.mubr.bf16.gmra.mxu0 %v544
        %v641 = vpop.f32.mrf.mxu0
        %v642 = vadd.f32 %v466, %v641
        %v643 = vpop.f32.mrf.mxu0
        %v644 = vpop.f32.mrf.mxu0
        %v645 = vadd.f32 %v466, %v644
        %v646 = vpop.f32.mrf.mxu0
        %647 = vmatprep.mubr.bf16.mxu0 0
        %648 = vmatmul.mubr.bf16.gmra.mxu0 %v547
        %v649 = vpop.f32.mrf.mxu0
        %v650 = vadd.f32 %v466, %v649
        %v651 = vpop.f32.mrf.mxu0
        %v652 = vpop.f32.mrf.mxu0
        %v653 = vadd.f32 %v466, %v652
        %v654 = vpop.f32.mrf.mxu0
        %655 = vmatprep.mubr.bf16.mxu0 0
        %656 = vmatmul.mubr.bf16.gmra.mxu0 %v550
        %v657 = vpop.f32.mrf.mxu0
        %v658 = vadd.f32 %v466, %v657
        %v659 = vpop.f32.mrf.mxu0
        %v660 = vpop.f32.mrf.mxu0
        %v661 = vadd.f32 %v466, %v660
        %v662 = vpop.f32.mrf.mxu0
        %663 = vdwg.mxu0
        %v664 = vmax.f32 %v594, 0.0
        %v665 = vmax.f32 %v597, 0.0
        %v666 = vmax.f32 %v602, 0.0
        %v667 = vmax.f32 %v605, 0.0
        %v668 = vmax.f32 %v610, 0.0
        %v669 = vmax.f32 %v613, 0.0
        %v670 = vmax.f32 %v618, 0.0
        %v671 = vmax.f32 %v621, 0.0
        %v672 = vmax.f32 %v626, 0.0
        %v673 = vmax.f32 %v629, 0.0
        %v674 = vmax.f32 %v634, 0.0
        %v675 = vmax.f32 %v637, 0.0
        %v676 = vmax.f32 %v642, 0.0
        %v677 = vmax.f32 %v645, 0.0
        %v678 = vmax.f32 %v650, 0.0
        %v679 = vmax.f32 %v653, 0.0
        %v680 = vmax.f32 %v658, 0.0
        %v681 = vmax.f32 %v661, 0.0
        %v682 = vpack.c.bf16 %v665, %v664
        %v683 = vpack.c.bf16 %v667, %v666
        %v684 = vpack.c.bf16 %v669, %v668
        %v685 = vpack.c.bf16 %v671, %v670
        %v686 = vpack.c.bf16 %v673, %v672
        %v687 = vpack.c.bf16 %v675, %v674
        %v688 = vpack.c.bf16 %v677, %v676
        %v689 = vpack.c.bf16 %v679, %v678
        %v690 = vpack.c.bf16 %v681, %v680
        %v691 = vld [vmem:[%s3] sm:$0xff]
        %v692 = vld [vmem:[%s3 + $0x8] sm:$0xff]
        %v693 = vld [vmem:[%s3 + $0x10] sm:$0xff]
        %v694 = vld [vmem:[%s3 + $0x18] sm:$0x11]
        %v699 = vunpack.c.l.b16 %v691
        %v700 = vunpack.c.h.b16 %v691
        %v701 = vunpack.c.l.b16 %v692
        %v702 = vunpack.c.h.b16 %v692
        %v703 = vunpack.c.l.b16 %v693
        %v704 = vunpack.c.h.b16 %v693
        %v705 = vunpack.c.l.b16 %v694
        %v706 = vunpack.c.h.b16 %v694
        %v707 = vpack.c.b16 %v701, %v699
        %v708 = vpack.c.b16 %v702, %v700
        %v709 = vpack.c.b16 %v705, %v703
        %v710 = vpack.c.b16 %v706, %v704
        %vm713 = vcmask 130048
        %v715 = vsel %vm713, %v708, 0
        %v718 = vsel %vm713, %v710, 0
        %720 = vmatprep.subr.bf16.mxu0 0
        %721 = vmatpush1.bf16.msra.mxu0 %v689
        %722 = vmatprep.subr.bf16.mxu0 0
        %723 = vmatpush1.bf16.msra.mxu0 %v688
        %724 = vmatprep.subr.bf16.mxu0 0
        %725 = vmatpush1.bf16.msra.mxu0 %v687
        %726 = vmatprep.subr.bf16.mxu0 0
        %727 = vmatpush1.bf16.msra.mxu0 %v686
        %728 = vmatprep.subr.bf16.mxu0 0
        %729 = vmatpush1.bf16.msra.mxu0 %v685
        %730 = vmatprep.subr.bf16.mxu0 0
        %731 = vmatpush1.bf16.msra.mxu0 %v684
        %732 = vmatprep.subr.bf16.mxu0 0
        %733 = vmatpush1.bf16.msra.mxu0 %v683
        %734 = vmatprep.subr.bf16.mxu0 0
        %735 = vmatpush1.bf16.msra.mxu0 %v682
        %736 = vmatprep.subr.bf16.mxu0 0
        %737 = vmatpush2.bf16.msra.mxu0 0
        %738 = vmatprep.subr.bf16.mxu0 0
        %739 = vmatpush2.bf16.msra.mxu0 0
        %740 = vmatprep.subr.bf16.mxu0 0
        %741 = vmatpush2.bf16.msra.mxu0 0
        %742 = vmatprep.subr.bf16.mxu0 0
        %743 = vmatpush2.bf16.msra.mxu0 0
        %744 = vmatprep.subr.bf16.mxu0 0
        %745 = vmatpush2.bf16.msra.mxu0 0
        %746 = vmatprep.subr.bf16.mxu0 0
        %747 = vmatpush2.bf16.msra.mxu0 0
        %748 = vmatprep.subr.bf16.mxu0 0
        %749 = vmatpush2.bf16.msra.mxu0 0
        %750 = vmatprep.subr.bf16.mxu0 0
        %751 = vmatpush2.bf16.msra.mxu0 %v690
        %752 = vmatprep.mubr.bf16.mxu0 %v715
        %753 = vmatmul.mubr.bf16.gmra.mxu0 %v707
        %v754 = vpop.f32.mrf.mxu0
        %v755 = vadd.f32 0.0, %v754
        %v756 = vpop.f32.mrf.mxu0
        %v757 = vpop.f32.mrf.mxu0
        %v758 = vadd.f32 0.0, %v757
        %v759 = vpop.f32.mrf.mxu0
        %760 = vmatprep.mubr.bf16.mxu0 %v718
        %761 = vmatmul.mubr.bf16.gmra.mxu0 %v709
        %v762 = vpop.f32.mrf.mxu0
        %v763 = vadd.f32 0.0, %v762
        %v764 = vpop.f32.mrf.mxu0
        %v765 = vpop.f32.mrf.mxu0
        %v766 = vadd.f32 0.0, %v765
        %v767 = vpop.f32.mrf.mxu0
        %768 = vdwg.mxu0
        %v769 = vpack.c.bf16 %v758, %v755
        %v770 = vpack.c.bf16 %v766, %v763
        %v771 = vld [vmem:[%s4] sm:$0xf]
        %v772 = vld [vmem:[%s4 + $0x4] sm:$0xf]
        %s773 = scalar_lea.vmem %s3, 32
        %v774 = vld [vmem:[%s773] sm:$0xff]
        %v775 = vld [vmem:[%s773 + $0x8] sm:$0xff]
        %v776 = vld [vmem:[%s773 + $0x10] sm:$0xff]
        %v777 = vld [vmem:[%s773 + $0x18] sm:$0x11]
        %v782 = vunpack.c.l.b16 %v774
        %v783 = vunpack.c.h.b16 %v774
        %v784 = vunpack.c.l.b16 %v775
        %v785 = vunpack.c.h.b16 %v775
        %v786 = vunpack.c.l.b16 %v776
        %v787 = vunpack.c.h.b16 %v776
        %v788 = vunpack.c.l.b16 %v777
        %v789 = vunpack.c.h.b16 %v777
        %v790 = vpack.c.b16 %v784, %v782
        %v791 = vpack.c.b16 %v785, %v783
        %v792 = vpack.c.b16 %v788, %v786
        %v793 = vpack.c.b16 %v789, %v787
        %v797 = vsel %vm713, %v791, 0
        %v800 = vsel %vm713, %v793, 0
        %802 = vmatprep.subr.bf16.mxu0 0
        %803 = vmatpush1.bf16.msra.mxu0 %v689
        %804 = vmatprep.subr.bf16.mxu0 0
        %805 = vmatpush1.bf16.msra.mxu0 %v688
        %806 = vmatprep.subr.bf16.mxu0 0
        %807 = vmatpush1.bf16.msra.mxu0 %v687
        %808 = vmatprep.subr.bf16.mxu0 0
        %809 = vmatpush1.bf16.msra.mxu0 %v686
        %810 = vmatprep.subr.bf16.mxu0 0
        %811 = vmatpush1.bf16.msra.mxu0 %v685
        %812 = vmatprep.subr.bf16.mxu0 0
        %813 = vmatpush1.bf16.msra.mxu0 %v684
        %814 = vmatprep.subr.bf16.mxu0 0
        %815 = vmatpush1.bf16.msra.mxu0 %v683
        %816 = vmatprep.subr.bf16.mxu0 0
        %817 = vmatpush1.bf16.msra.mxu0 %v682
        %818 = vmatprep.subr.bf16.mxu0 0
        %819 = vmatpush2.bf16.msra.mxu0 0
        %820 = vmatprep.subr.bf16.mxu0 0
        %821 = vmatpush2.bf16.msra.mxu0 0
        %822 = vmatprep.subr.bf16.mxu0 0
        %823 = vmatpush2.bf16.msra.mxu0 0
        %824 = vmatprep.subr.bf16.mxu0 0
        %825 = vmatpush2.bf16.msra.mxu0 0
        %826 = vmatprep.subr.bf16.mxu0 0
        %827 = vmatpush2.bf16.msra.mxu0 0
        %828 = vmatprep.subr.bf16.mxu0 0
        %829 = vmatpush2.bf16.msra.mxu0 0
        %830 = vmatprep.subr.bf16.mxu0 0
        %831 = vmatpush2.bf16.msra.mxu0 0
        %832 = vmatprep.subr.bf16.mxu0 0
        %833 = vmatpush2.bf16.msra.mxu0 %v690
        %834 = vmatprep.mubr.bf16.mxu0 %v797
        %835 = vmatmul.mubr.bf16.gmra.mxu0 %v790
        %v836 = vpop.f32.mrf.mxu0
        %v837 = vadd.f32 0.0, %v836
        %v838 = vpop.f32.mrf.mxu0
        %v839 = vpop.f32.mrf.mxu0
        %v840 = vadd.f32 0.0, %v839
        %v841 = vpop.f32.mrf.mxu0
        %842 = vmatprep.mubr.bf16.mxu0 %v800
        %843 = vmatmul.mubr.bf16.gmra.mxu0 %v792
        %v844 = vpop.f32.mrf.mxu0
        %v845 = vadd.f32 0.0, %v844
        %v846 = vpop.f32.mrf.mxu0
        %v847 = vpop.f32.mrf.mxu0
        %v848 = vadd.f32 0.0, %v847
        %v849 = vpop.f32.mrf.mxu0
        %850 = vdwg.mxu0
        %v851 = vpack.c.bf16 %v840, %v837
        %v852 = vpack.c.bf16 %v848, %v845
        %s853 = scalar_lea.vmem %s4, 8
        %v854 = vld [vmem:[%s853] sm:$0xf]
        %v855 = vld [vmem:[%s853 + $0x4] sm:$0xf]
        %v858 = vunpack.c.l.b16 %v854
        %v859 = vunpack.c.l.b16 %v855
        %v860 = vpack.c.b16 %v859, %v858
        %v863 = vsel %vm713, %v851, 0
        %v866 = vsel %vm713, %v852, 0
        %868 = vmatprep.subr.bf16.mxu0 0
        %869 = vmatpush1.bf16.msra.mxu0 0
        %870 = vmatprep.subr.bf16.mxu0 0
        %871 = vmatpush1.bf16.msra.mxu0 0
        %872 = vmatprep.subr.bf16.mxu0 0
        %873 = vmatpush1.bf16.msra.mxu0 0
        %874 = vmatprep.subr.bf16.mxu0 0
        %875 = vmatpush1.bf16.msra.mxu0 0
        %876 = vmatprep.subr.bf16.mxu0 0
        %877 = vmatpush1.bf16.msra.mxu0 0
        %878 = vmatprep.subr.bf16.mxu0 0
        %879 = vmatpush1.bf16.msra.mxu0 0
        %880 = vmatprep.subr.bf16.mxu0 0
        %881 = vmatpush1.bf16.msra.mxu0 0
        %882 = vmatprep.subr.bf16.mxu0 0
        %883 = vmatpush1.bf16.msra.mxu0 %v860
        %884 = vmatprep.subr.bf16.mxu0 0
        %885 = vmatpush2.bf16.msra.mxu0 0
        %886 = vmatprep.subr.bf16.mxu0 0
        %887 = vmatpush2.bf16.msra.mxu0 0
        %888 = vmatprep.subr.bf16.mxu0 0
        %889 = vmatpush2.bf16.msra.mxu0 0
        %890 = vmatprep.subr.bf16.mxu0 0
        %891 = vmatpush2.bf16.msra.mxu0 0
        %892 = vmatprep.subr.bf16.mxu0 0
        %893 = vmatpush2.bf16.msra.mxu0 0
        %894 = vmatprep.subr.bf16.mxu0 0
        %895 = vmatpush2.bf16.msra.mxu0 0
        %896 = vmatprep.subr.bf16.mxu0 0
        %897 = vmatpush2.bf16.msra.mxu0 0
        %898 = vmatprep.subr.bf16.mxu0 0
        %899 = vmatpush2.bf16.msra.mxu0 0
        %900 = vmatprep.mubr.bf16.mxu0 0
        %901 = vmatmul.mubr.bf16.gmra.mxu0 %v863
        %v902 = vpop.f32.mrf.mxu0
        %v903 = vadd.f32 0.0, %v902
        %v904 = vpop.f32.mrf.mxu0
        %v905 = vpop.f32.mrf.mxu0
        %v906 = vadd.f32 0.0, %v905
        %v907 = vpop.f32.mrf.mxu0
        %908 = vmatprep.mubr.bf16.mxu0 0
        %909 = vmatmul.mubr.bf16.gmra.mxu0 %v866
        %v910 = vpop.f32.mrf.mxu0
        %v911 = vadd.f32 0.0, %v910
        %v912 = vpop.f32.mrf.mxu0
        %v913 = vpop.f32.mrf.mxu0
        %v914 = vadd.f32 0.0, %v913
        %v915 = vpop.f32.mrf.mxu0
        %916 = vdwg.mxu0
        %v919 = vunpack.c.l.b16 %v771
        %v920 = vunpack.c.l.b16 %v772
        %v921 = vpack.c.b16 %v920, %v919
        %v924 = vsel %vm713, %v769, 0
        %v927 = vsel %vm713, %v770, 0
        %929 = vmatprep.subr.bf16.mxu0 0
        %930 = vmatpush1.bf16.msra.mxu0 0
        %931 = vmatprep.subr.bf16.mxu0 0
        %932 = vmatpush1.bf16.msra.mxu0 0
        %933 = vmatprep.subr.bf16.mxu0 0
        %934 = vmatpush1.bf16.msra.mxu0 0
        %935 = vmatprep.subr.bf16.mxu0 0
        %936 = vmatpush1.bf16.msra.mxu0 0
        %937 = vmatprep.subr.bf16.mxu0 0
        %938 = vmatpush1.bf16.msra.mxu0 0
        %939 = vmatprep.subr.bf16.mxu0 0
        %940 = vmatpush1.bf16.msra.mxu0 0
        %941 = vmatprep.subr.bf16.mxu0 0
        %942 = vmatpush1.bf16.msra.mxu0 0
        %943 = vmatprep.subr.bf16.mxu0 0
        %944 = vmatpush1.bf16.msra.mxu0 %v921
        %945 = vmatprep.subr.bf16.mxu0 0
        %946 = vmatpush2.bf16.msra.mxu0 0
        %947 = vmatprep.subr.bf16.mxu0 0
        %948 = vmatpush2.bf16.msra.mxu0 0
        %949 = vmatprep.subr.bf16.mxu0 0
        %950 = vmatpush2.bf16.msra.mxu0 0
        %951 = vmatprep.subr.bf16.mxu0 0
        %952 = vmatpush2.bf16.msra.mxu0 0
        %953 = vmatprep.subr.bf16.mxu0 0
        %954 = vmatpush2.bf16.msra.mxu0 0
        %955 = vmatprep.subr.bf16.mxu0 0
        %956 = vmatpush2.bf16.msra.mxu0 0
        %957 = vmatprep.subr.bf16.mxu0 0
        %958 = vmatpush2.bf16.msra.mxu0 0
        %959 = vmatprep.subr.bf16.mxu0 0
        %960 = vmatpush2.bf16.msra.mxu0 0
        %961 = vmatprep.mubr.bf16.mxu0 0
        %962 = vmatmul.mubr.bf16.gmra.mxu0 %v924
        %v963 = vpop.f32.mrf.mxu0
        %v964 = vadd.f32 %v903, %v963
        %v965 = vpop.f32.mrf.mxu0
        %v966 = vpop.f32.mrf.mxu0
        %v967 = vadd.f32 %v906, %v966
        %v968 = vpop.f32.mrf.mxu0
        %969 = vmatprep.mubr.bf16.mxu0 0
        %970 = vmatmul.mubr.bf16.gmra.mxu0 %v927
        %v971 = vpop.f32.mrf.mxu0
        %v972 = vadd.f32 %v911, %v971
        %v973 = vpop.f32.mrf.mxu0
        %v974 = vpop.f32.mrf.mxu0
        %v975 = vadd.f32 %v914, %v974
        %v976 = vpop.f32.mrf.mxu0
        %977 = vdwg.mxu0
        %s978 = scalar_lea.vmem %s3, 64
        %v979 = vld [vmem:[%s978] sm:$0xff]
        %v980 = vld [vmem:[%s978 + $0x8] sm:$0xff]
        %v981 = vld [vmem:[%s978 + $0x10] sm:$0xff]
        %v982 = vld [vmem:[%s978 + $0x18] sm:$0x11]
        %v987 = vunpack.c.l.b16 %v979
        %v988 = vunpack.c.h.b16 %v979
        %v989 = vunpack.c.l.b16 %v980
        %v990 = vunpack.c.h.b16 %v980
        %v991 = vunpack.c.l.b16 %v981
        %v992 = vunpack.c.h.b16 %v981
        %v993 = vunpack.c.l.b16 %v982
        %v994 = vunpack.c.h.b16 %v982
        %v995 = vpack.c.b16 %v989, %v987
        %v996 = vpack.c.b16 %v990, %v988
        %v997 = vpack.c.b16 %v993, %v991
        %v998 = vpack.c.b16 %v994, %v992
        %v1002 = vsel %vm713, %v996, 0
        %v1005 = vsel %vm713, %v998, 0
        %1007 = vmatprep.subr.bf16.mxu0 0
        %1008 = vmatpush1.bf16.msra.mxu0 %v689
        %1009 = vmatprep.subr.bf16.mxu0 0
        %1010 = vmatpush1.bf16.msra.mxu0 %v688
        %1011 = vmatprep.subr.bf16.mxu0 0
        %1012 = vmatpush1.bf16.msra.mxu0 %v687
        %1013 = vmatprep.subr.bf16.mxu0 0
        %1014 = vmatpush1.bf16.msra.mxu0 %v686
        %1015 = vmatprep.subr.bf16.mxu0 0
        %1016 = vmatpush1.bf16.msra.mxu0 %v685
        %1017 = vmatprep.subr.bf16.mxu0 0
        %1018 = vmatpush1.bf16.msra.mxu0 %v684
        %1019 = vmatprep.subr.bf16.mxu0 0
        %1020 = vmatpush1.bf16.msra.mxu0 %v683
        %1021 = vmatprep.subr.bf16.mxu0 0
        %1022 = vmatpush1.bf16.msra.mxu0 %v682
        %1023 = vmatprep.subr.bf16.mxu0 0
        %1024 = vmatpush2.bf16.msra.mxu0 0
        %1025 = vmatprep.subr.bf16.mxu0 0
        %1026 = vmatpush2.bf16.msra.mxu0 0
        %1027 = vmatprep.subr.bf16.mxu0 0
        %1028 = vmatpush2.bf16.msra.mxu0 0
        %1029 = vmatprep.subr.bf16.mxu0 0
        %1030 = vmatpush2.bf16.msra.mxu0 0
        %1031 = vmatprep.subr.bf16.mxu0 0
        %1032 = vmatpush2.bf16.msra.mxu0 0
        %1033 = vmatprep.subr.bf16.mxu0 0
        %1034 = vmatpush2.bf16.msra.mxu0 0
        %1035 = vmatprep.subr.bf16.mxu0 0
        %1036 = vmatpush2.bf16.msra.mxu0 0
        %1037 = vmatprep.subr.bf16.mxu0 0
        %1038 = vmatpush2.bf16.msra.mxu0 %v690
        %1039 = vmatprep.mubr.bf16.mxu0 %v1002
        %1040 = vmatmul.mubr.bf16.gmra.mxu0 %v995
        %v1041 = vpop.f32.mrf.mxu0
        %v1042 = vadd.f32 0.0, %v1041
        %v1043 = vpop.f32.mrf.mxu0
        %v1044 = vpop.f32.mrf.mxu0
        %v1045 = vadd.f32 0.0, %v1044
        %v1046 = vpop.f32.mrf.mxu0
        %1047 = vmatprep.mubr.bf16.mxu0 %v1005
        %1048 = vmatmul.mubr.bf16.gmra.mxu0 %v997
        %v1049 = vpop.f32.mrf.mxu0
        %v1050 = vadd.f32 0.0, %v1049
        %v1051 = vpop.f32.mrf.mxu0
        %v1052 = vpop.f32.mrf.mxu0
        %v1053 = vadd.f32 0.0, %v1052
        %v1054 = vpop.f32.mrf.mxu0
        %1055 = vdwg.mxu0
        %v1056 = vpack.c.bf16 %v1045, %v1042
        %v1057 = vpack.c.bf16 %v1053, %v1050
        %s1058 = scalar_lea.vmem %s4, 16
        %v1059 = vld [vmem:[%s1058] sm:$0xf]
        %v1060 = vld [vmem:[%s1058 + $0x4] sm:$0xf]
        %v1063 = vunpack.c.l.b16 %v1059
        %v1064 = vunpack.c.l.b16 %v1060
        %v1065 = vpack.c.b16 %v1064, %v1063
        %v1068 = vsel %vm713, %v1056, 0
        %v1071 = vsel %vm713, %v1057, 0
        %1073 = vmatprep.subr.bf16.mxu0 0
        %1074 = vmatpush1.bf16.msra.mxu0 0
        %1075 = vmatprep.subr.bf16.mxu0 0
        %1076 = vmatpush1.bf16.msra.mxu0 0
        %1077 = vmatprep.subr.bf16.mxu0 0
        %1078 = vmatpush1.bf16.msra.mxu0 0
        %1079 = vmatprep.subr.bf16.mxu0 0
        %1080 = vmatpush1.bf16.msra.mxu0 0
        %1081 = vmatprep.subr.bf16.mxu0 0
        %1082 = vmatpush1.bf16.msra.mxu0 0
        %1083 = vmatprep.subr.bf16.mxu0 0
        %1084 = vmatpush1.bf16.msra.mxu0 0
        %1085 = vmatprep.subr.bf16.mxu0 0
        %1086 = vmatpush1.bf16.msra.mxu0 0
        %1087 = vmatprep.subr.bf16.mxu0 0
        %1088 = vmatpush1.bf16.msra.mxu0 %v1065
        %1089 = vmatprep.subr.bf16.mxu0 0
        %1090 = vmatpush2.bf16.msra.mxu0 0
        %1091 = vmatprep.subr.bf16.mxu0 0
        %1092 = vmatpush2.bf16.msra.mxu0 0
        %1093 = vmatprep.subr.bf16.mxu0 0
        %1094 = vmatpush2.bf16.msra.mxu0 0
        %1095 = vmatprep.subr.bf16.mxu0 0
        %1096 = vmatpush2.bf16.msra.mxu0 0
        %1097 = vmatprep.subr.bf16.mxu0 0
        %1098 = vmatpush2.bf16.msra.mxu0 0
        %1099 = vmatprep.subr.bf16.mxu0 0
        %1100 = vmatpush2.bf16.msra.mxu0 0
        %1101 = vmatprep.subr.bf16.mxu0 0
        %1102 = vmatpush2.bf16.msra.mxu0 0
        %1103 = vmatprep.subr.bf16.mxu0 0
        %1104 = vmatpush2.bf16.msra.mxu0 0
        %1105 = vmatprep.mubr.bf16.mxu0 0
        %1106 = vmatmul.mubr.bf16.gmra.mxu0 %v1068
        %v1107 = vpop.f32.mrf.mxu0
        %v1108 = vadd.f32 0.0, %v1107
        %v1109 = vpop.f32.mrf.mxu0
        %v1110 = vpop.f32.mrf.mxu0
        %v1111 = vadd.f32 0.0, %v1110
        %v1112 = vpop.f32.mrf.mxu0
        %1113 = vmatprep.mubr.bf16.mxu0 0
        %1114 = vmatmul.mubr.bf16.gmra.mxu0 %v1071
        %v1115 = vpop.f32.mrf.mxu0
        %v1116 = vadd.f32 0.0, %v1115
        %v1117 = vpop.f32.mrf.mxu0
        %v1118 = vpop.f32.mrf.mxu0
        %v1119 = vadd.f32 0.0, %v1118
        %v1120 = vpop.f32.mrf.mxu0
        %1121 = vdwg.mxu0
        %v1122 = vadd.f32 %v964, %v1108
        %v1123 = vadd.f32 %v967, %v1111
        %v1124 = vadd.f32 %v972, %v1116
        %v1125 = vadd.f32 %v975, %v1119
        %s1126 = scalar_lea.vmem %s3, 96
        %v1127 = vld [vmem:[%s1126] sm:$0xff]
        %v1128 = vld [vmem:[%s1126 + $0x8] sm:$0xff]
        %v1129 = vld [vmem:[%s1126 + $0x10] sm:$0xff]
        %v1130 = vld [vmem:[%s1126 + $0x18] sm:$0x11]
        %v1135 = vunpack.c.l.b16 %v1127
        %v1136 = vunpack.c.h.b16 %v1127
        %v1137 = vunpack.c.l.b16 %v1128
        %v1138 = vunpack.c.h.b16 %v1128
        %v1139 = vunpack.c.l.b16 %v1129
        %v1140 = vunpack.c.h.b16 %v1129
        %v1141 = vunpack.c.l.b16 %v1130
        %v1142 = vunpack.c.h.b16 %v1130
        %v1143 = vpack.c.b16 %v1137, %v1135
        %v1144 = vpack.c.b16 %v1138, %v1136
        %v1145 = vpack.c.b16 %v1141, %v1139
        %v1146 = vpack.c.b16 %v1142, %v1140
        %v1150 = vsel %vm713, %v1144, 0
        %v1153 = vsel %vm713, %v1146, 0
        %1155 = vmatprep.subr.bf16.mxu0 0
        %1156 = vmatpush1.bf16.msra.mxu0 %v689
        %1157 = vmatprep.subr.bf16.mxu0 0
        %1158 = vmatpush1.bf16.msra.mxu0 %v688
        %1159 = vmatprep.subr.bf16.mxu0 0
        %1160 = vmatpush1.bf16.msra.mxu0 %v687
        %1161 = vmatprep.subr.bf16.mxu0 0
        %1162 = vmatpush1.bf16.msra.mxu0 %v686
        %1163 = vmatprep.subr.bf16.mxu0 0
        %1164 = vmatpush1.bf16.msra.mxu0 %v685
        %1165 = vmatprep.subr.bf16.mxu0 0
        %1166 = vmatpush1.bf16.msra.mxu0 %v684
        %1167 = vmatprep.subr.bf16.mxu0 0
        %1168 = vmatpush1.bf16.msra.mxu0 %v683
        %1169 = vmatprep.subr.bf16.mxu0 0
        %1170 = vmatpush1.bf16.msra.mxu0 %v682
        %1171 = vmatprep.subr.bf16.mxu0 0
        %1172 = vmatpush2.bf16.msra.mxu0 0
        %1173 = vmatprep.subr.bf16.mxu0 0
        %1174 = vmatpush2.bf16.msra.mxu0 0
        %1175 = vmatprep.subr.bf16.mxu0 0
        %1176 = vmatpush2.bf16.msra.mxu0 0
        %1177 = vmatprep.subr.bf16.mxu0 0
        %1178 = vmatpush2.bf16.msra.mxu0 0
        %1179 = vmatprep.subr.bf16.mxu0 0
        %1180 = vmatpush2.bf16.msra.mxu0 0
        %1181 = vmatprep.subr.bf16.mxu0 0
        %1182 = vmatpush2.bf16.msra.mxu0 0
        %1183 = vmatprep.subr.bf16.mxu0 0
        %1184 = vmatpush2.bf16.msra.mxu0 0
        %1185 = vmatprep.subr.bf16.mxu0 0
        %1186 = vmatpush2.bf16.msra.mxu0 %v690
        %1187 = vmatprep.mubr.bf16.mxu0 %v1150
        %1188 = vmatmul.mubr.bf16.gmra.mxu0 %v1143
        %v1189 = vpop.f32.mrf.mxu0
        %v1190 = vadd.f32 0.0, %v1189
        %v1191 = vpop.f32.mrf.mxu0
        %v1192 = vpop.f32.mrf.mxu0
        %v1193 = vadd.f32 0.0, %v1192
        %v1194 = vpop.f32.mrf.mxu0
        %1195 = vmatprep.mubr.bf16.mxu0 %v1153
        %1196 = vmatmul.mubr.bf16.gmra.mxu0 %v1145
        %v1197 = vpop.f32.mrf.mxu0
        %v1198 = vadd.f32 0.0, %v1197
        %v1199 = vpop.f32.mrf.mxu0
        %v1200 = vpop.f32.mrf.mxu0
        %v1201 = vadd.f32 0.0, %v1200
        %v1202 = vpop.f32.mrf.mxu0
        %1203 = vdwg.mxu0
        %v1204 = vpack.c.bf16 %v1193, %v1190
        %v1205 = vpack.c.bf16 %v1201, %v1198
        %s1206 = scalar_lea.vmem %s4, 24
        %v1207 = vld [vmem:[%s1206] sm:$0xf]
        %v1208 = vld [vmem:[%s1206 + $0x4] sm:$0xf]
        %v1211 = vunpack.c.l.b16 %v1207
        %v1212 = vunpack.c.l.b16 %v1208
        %v1213 = vpack.c.b16 %v1212, %v1211
        %v1216 = vsel %vm713, %v1204, 0
        %v1219 = vsel %vm713, %v1205, 0
        %1221 = vmatprep.subr.bf16.mxu0 0
        %1222 = vmatpush1.bf16.msra.mxu0 0
        %1223 = vmatprep.subr.bf16.mxu0 0
        %1224 = vmatpush1.bf16.msra.mxu0 0
        %1225 = vmatprep.subr.bf16.mxu0 0
        %1226 = vmatpush1.bf16.msra.mxu0 0
        %1227 = vmatprep.subr.bf16.mxu0 0
        %1228 = vmatpush1.bf16.msra.mxu0 0
        %1229 = vmatprep.subr.bf16.mxu0 0
        %1230 = vmatpush1.bf16.msra.mxu0 0
        %1231 = vmatprep.subr.bf16.mxu0 0
        %1232 = vmatpush1.bf16.msra.mxu0 0
        %1233 = vmatprep.subr.bf16.mxu0 0
        %1234 = vmatpush1.bf16.msra.mxu0 0
        %1235 = vmatprep.subr.bf16.mxu0 0
        %1236 = vmatpush1.bf16.msra.mxu0 %v1213
        %1237 = vmatprep.subr.bf16.mxu0 0
        %1238 = vmatpush2.bf16.msra.mxu0 0
        %1239 = vmatprep.subr.bf16.mxu0 0
        %1240 = vmatpush2.bf16.msra.mxu0 0
        %1241 = vmatprep.subr.bf16.mxu0 0
        %1242 = vmatpush2.bf16.msra.mxu0 0
        %1243 = vmatprep.subr.bf16.mxu0 0
        %1244 = vmatpush2.bf16.msra.mxu0 0
        %1245 = vmatprep.subr.bf16.mxu0 0
        %1246 = vmatpush2.bf16.msra.mxu0 0
        %1247 = vmatprep.subr.bf16.mxu0 0
        %1248 = vmatpush2.bf16.msra.mxu0 0
        %1249 = vmatprep.subr.bf16.mxu0 0
        %1250 = vmatpush2.bf16.msra.mxu0 0
        %1251 = vmatprep.subr.bf16.mxu0 0
        %1252 = vmatpush2.bf16.msra.mxu0 0
        %1253 = vmatprep.mubr.bf16.mxu0 0
        %1254 = vmatmul.mubr.bf16.gmra.mxu0 %v1216
        %v1255 = vpop.f32.mrf.mxu0
        %v1256 = vadd.f32 0.0, %v1255
        %v1257 = vpop.f32.mrf.mxu0
        %v1258 = vpop.f32.mrf.mxu0
        %v1259 = vadd.f32 0.0, %v1258
        %v1260 = vpop.f32.mrf.mxu0
        %1261 = vmatprep.mubr.bf16.mxu0 0
        %1262 = vmatmul.mubr.bf16.gmra.mxu0 %v1219
        %v1263 = vpop.f32.mrf.mxu0
        %v1264 = vadd.f32 0.0, %v1263
        %v1265 = vpop.f32.mrf.mxu0
        %v1266 = vpop.f32.mrf.mxu0
        %v1267 = vadd.f32 0.0, %v1266
        %v1268 = vpop.f32.mrf.mxu0
        %1269 = vdwg.mxu0
        %v1270 = vadd.f32 %v1122, %v1256
        %v1271 = vadd.f32 %v1123, %v1259
        %v1272 = vadd.f32 %v1124, %v1264
        %v1273 = vadd.f32 %v1125, %v1267
        %s1274 = scalar_lea.vmem %s3, 128
        %v1275 = vld [vmem:[%s1274] sm:$0xff]
        %v1276 = vld [vmem:[%s1274 + $0x8] sm:$0xff]
        %v1277 = vld [vmem:[%s1274 + $0x10] sm:$0xff]
        %v1278 = vld [vmem:[%s1274 + $0x18] sm:$0x11]
        %v1283 = vunpack.c.l.b16 %v1275
        %v1284 = vunpack.c.h.b16 %v1275
        %v1285 = vunpack.c.l.b16 %v1276
        %v1286 = vunpack.c.h.b16 %v1276
        %v1287 = vunpack.c.l.b16 %v1277
        %v1288 = vunpack.c.h.b16 %v1277
        %v1289 = vunpack.c.l.b16 %v1278
        %v1290 = vunpack.c.h.b16 %v1278
        %v1291 = vpack.c.b16 %v1285, %v1283
        %v1292 = vpack.c.b16 %v1286, %v1284
        %v1293 = vpack.c.b16 %v1289, %v1287
        %v1294 = vpack.c.b16 %v1290, %v1288
        %v1298 = vsel %vm713, %v1292, 0
        %v1301 = vsel %vm713, %v1294, 0
        %1303 = vmatprep.subr.bf16.mxu0 0
        %1304 = vmatpush1.bf16.msra.mxu0 %v689
        %1305 = vmatprep.subr.bf16.mxu0 0
        %1306 = vmatpush1.bf16.msra.mxu0 %v688
        %1307 = vmatprep.subr.bf16.mxu0 0
        %1308 = vmatpush1.bf16.msra.mxu0 %v687
        %1309 = vmatprep.subr.bf16.mxu0 0
        %1310 = vmatpush1.bf16.msra.mxu0 %v686
        %1311 = vmatprep.subr.bf16.mxu0 0
        %1312 = vmatpush1.bf16.msra.mxu0 %v685
        %1313 = vmatprep.subr.bf16.mxu0 0
        %1314 = vmatpush1.bf16.msra.mxu0 %v684
        %1315 = vmatprep.subr.bf16.mxu0 0
        %1316 = vmatpush1.bf16.msra.mxu0 %v683
        %1317 = vmatprep.subr.bf16.mxu0 0
        %1318 = vmatpush1.bf16.msra.mxu0 %v682
        %1319 = vmatprep.subr.bf16.mxu0 0
        %1320 = vmatpush2.bf16.msra.mxu0 0
        %1321 = vmatprep.subr.bf16.mxu0 0
        %1322 = vmatpush2.bf16.msra.mxu0 0
        %1323 = vmatprep.subr.bf16.mxu0 0
        %1324 = vmatpush2.bf16.msra.mxu0 0
        %1325 = vmatprep.subr.bf16.mxu0 0
        %1326 = vmatpush2.bf16.msra.mxu0 0
        %1327 = vmatprep.subr.bf16.mxu0 0
        %1328 = vmatpush2.bf16.msra.mxu0 0
        %1329 = vmatprep.subr.bf16.mxu0 0
        %1330 = vmatpush2.bf16.msra.mxu0 0
        %1331 = vmatprep.subr.bf16.mxu0 0
        %1332 = vmatpush2.bf16.msra.mxu0 0
        %1333 = vmatprep.subr.bf16.mxu0 0
        %1334 = vmatpush2.bf16.msra.mxu0 %v690
        %1335 = vmatprep.mubr.bf16.mxu0 %v1298
        %1336 = vmatmul.mubr.bf16.gmra.mxu0 %v1291
        %v1337 = vpop.f32.mrf.mxu0
        %v1338 = vadd.f32 0.0, %v1337
        %v1339 = vpop.f32.mrf.mxu0
        %v1340 = vpop.f32.mrf.mxu0
        %v1341 = vadd.f32 0.0, %v1340
        %v1342 = vpop.f32.mrf.mxu0
        %1343 = vmatprep.mubr.bf16.mxu0 %v1301
        %1344 = vmatmul.mubr.bf16.gmra.mxu0 %v1293
        %v1345 = vpop.f32.mrf.mxu0
        %v1346 = vadd.f32 0.0, %v1345
        %v1347 = vpop.f32.mrf.mxu0
        %v1348 = vpop.f32.mrf.mxu0
        %v1349 = vadd.f32 0.0, %v1348
        %v1350 = vpop.f32.mrf.mxu0
        %1351 = vdwg.mxu0
        %v1352 = vpack.c.bf16 %v1341, %v1338
        %v1353 = vpack.c.bf16 %v1349, %v1346
        %s1354 = scalar_lea.vmem %s4, 32
        %v1355 = vld [vmem:[%s1354] sm:$0xf]
        %v1356 = vld [vmem:[%s1354 + $0x4] sm:$0xf]
        %v1359 = vunpack.c.l.b16 %v1355
        %v1360 = vunpack.c.l.b16 %v1356
        %v1361 = vpack.c.b16 %v1360, %v1359
        %v1364 = vsel %vm713, %v1352, 0
        %v1367 = vsel %vm713, %v1353, 0
        %1369 = vmatprep.subr.bf16.mxu0 0
        %1370 = vmatpush1.bf16.msra.mxu0 0
        %1371 = vmatprep.subr.bf16.mxu0 0
        %1372 = vmatpush1.bf16.msra.mxu0 0
        %1373 = vmatprep.subr.bf16.mxu0 0
        %1374 = vmatpush1.bf16.msra.mxu0 0
        %1375 = vmatprep.subr.bf16.mxu0 0
        %1376 = vmatpush1.bf16.msra.mxu0 0
        %1377 = vmatprep.subr.bf16.mxu0 0
        %1378 = vmatpush1.bf16.msra.mxu0 0
        %1379 = vmatprep.subr.bf16.mxu0 0
        %1380 = vmatpush1.bf16.msra.mxu0 0
        %1381 = vmatprep.subr.bf16.mxu0 0
        %1382 = vmatpush1.bf16.msra.mxu0 0
        %1383 = vmatprep.subr.bf16.mxu0 0
        %1384 = vmatpush1.bf16.msra.mxu0 %v1361
        %1385 = vmatprep.subr.bf16.mxu0 0
        %1386 = vmatpush2.bf16.msra.mxu0 0
        %1387 = vmatprep.subr.bf16.mxu0 0
        %1388 = vmatpush2.bf16.msra.mxu0 0
        %1389 = vmatprep.subr.bf16.mxu0 0
        %1390 = vmatpush2.bf16.msra.mxu0 0
        %1391 = vmatprep.subr.bf16.mxu0 0
        %1392 = vmatpush2.bf16.msra.mxu0 0
        %1393 = vmatprep.subr.bf16.mxu0 0
        %1394 = vmatpush2.bf16.msra.mxu0 0
        %1395 = vmatprep.subr.bf16.mxu0 0
        %1396 = vmatpush2.bf16.msra.mxu0 0
        %1397 = vmatprep.subr.bf16.mxu0 0
        %1398 = vmatpush2.bf16.msra.mxu0 0
        %1399 = vmatprep.subr.bf16.mxu0 0
        %1400 = vmatpush2.bf16.msra.mxu0 0
        %1401 = vmatprep.mubr.bf16.mxu0 0
        %1402 = vmatmul.mubr.bf16.gmra.mxu0 %v1364
        %v1403 = vpop.f32.mrf.mxu0
        %v1404 = vadd.f32 0.0, %v1403
        %v1405 = vpop.f32.mrf.mxu0
        %v1406 = vpop.f32.mrf.mxu0
        %v1407 = vadd.f32 0.0, %v1406
        %v1408 = vpop.f32.mrf.mxu0
        %1409 = vmatprep.mubr.bf16.mxu0 0
        %1410 = vmatmul.mubr.bf16.gmra.mxu0 %v1367
        %v1411 = vpop.f32.mrf.mxu0
        %v1412 = vadd.f32 0.0, %v1411
        %v1413 = vpop.f32.mrf.mxu0
        %v1414 = vpop.f32.mrf.mxu0
        %v1415 = vadd.f32 0.0, %v1414
        %v1416 = vpop.f32.mrf.mxu0
        %1417 = vdwg.mxu0
        %v1418 = vadd.f32 %v1270, %v1404
        %v1419 = vadd.f32 %v1271, %v1407
        %v1420 = vadd.f32 %v1272, %v1412
        %v1421 = vadd.f32 %v1273, %v1415
        %s1422 = scalar_lea.vmem %s3, 160
        %v1423 = vld [vmem:[%s1422] sm:$0xff]
        %v1424 = vld [vmem:[%s1422 + $0x8] sm:$0xff]
        %v1425 = vld [vmem:[%s1422 + $0x10] sm:$0xff]
        %v1426 = vld [vmem:[%s1422 + $0x18] sm:$0x11]
        %v1431 = vunpack.c.l.b16 %v1423
        %v1432 = vunpack.c.h.b16 %v1423
        %v1433 = vunpack.c.l.b16 %v1424
        %v1434 = vunpack.c.h.b16 %v1424
        %v1435 = vunpack.c.l.b16 %v1425
        %v1436 = vunpack.c.h.b16 %v1425
        %v1437 = vunpack.c.l.b16 %v1426
        %v1438 = vunpack.c.h.b16 %v1426
        %v1439 = vpack.c.b16 %v1433, %v1431
        %v1440 = vpack.c.b16 %v1434, %v1432
        %v1441 = vpack.c.b16 %v1437, %v1435
        %v1442 = vpack.c.b16 %v1438, %v1436
        %v1446 = vsel %vm713, %v1440, 0
        %v1449 = vsel %vm713, %v1442, 0
        %1451 = vmatprep.subr.bf16.mxu0 0
        %1452 = vmatpush1.bf16.msra.mxu0 %v689
        %1453 = vmatprep.subr.bf16.mxu0 0
        %1454 = vmatpush1.bf16.msra.mxu0 %v688
        %1455 = vmatprep.subr.bf16.mxu0 0
        %1456 = vmatpush1.bf16.msra.mxu0 %v687
        %1457 = vmatprep.subr.bf16.mxu0 0
        %1458 = vmatpush1.bf16.msra.mxu0 %v686
        %1459 = vmatprep.subr.bf16.mxu0 0
        %1460 = vmatpush1.bf16.msra.mxu0 %v685
        %1461 = vmatprep.subr.bf16.mxu0 0
        %1462 = vmatpush1.bf16.msra.mxu0 %v684
        %1463 = vmatprep.subr.bf16.mxu0 0
        %1464 = vmatpush1.bf16.msra.mxu0 %v683
        %1465 = vmatprep.subr.bf16.mxu0 0
        %1466 = vmatpush1.bf16.msra.mxu0 %v682
        %1467 = vmatprep.subr.bf16.mxu0 0
        %1468 = vmatpush2.bf16.msra.mxu0 0
        %1469 = vmatprep.subr.bf16.mxu0 0
        %1470 = vmatpush2.bf16.msra.mxu0 0
        %1471 = vmatprep.subr.bf16.mxu0 0
        %1472 = vmatpush2.bf16.msra.mxu0 0
        %1473 = vmatprep.subr.bf16.mxu0 0
        %1474 = vmatpush2.bf16.msra.mxu0 0
        %1475 = vmatprep.subr.bf16.mxu0 0
        %1476 = vmatpush2.bf16.msra.mxu0 0
        %1477 = vmatprep.subr.bf16.mxu0 0
        %1478 = vmatpush2.bf16.msra.mxu0 0
        %1479 = vmatprep.subr.bf16.mxu0 0
        %1480 = vmatpush2.bf16.msra.mxu0 0
        %1481 = vmatprep.subr.bf16.mxu0 0
        %1482 = vmatpush2.bf16.msra.mxu0 %v690
        %1483 = vmatprep.mubr.bf16.mxu0 %v1446
        %1484 = vmatmul.mubr.bf16.gmra.mxu0 %v1439
        %v1485 = vpop.f32.mrf.mxu0
        %v1486 = vadd.f32 0.0, %v1485
        %v1487 = vpop.f32.mrf.mxu0
        %v1488 = vpop.f32.mrf.mxu0
        %v1489 = vadd.f32 0.0, %v1488
        %v1490 = vpop.f32.mrf.mxu0
        %1491 = vmatprep.mubr.bf16.mxu0 %v1449
        %1492 = vmatmul.mubr.bf16.gmra.mxu0 %v1441
        %v1493 = vpop.f32.mrf.mxu0
        %v1494 = vadd.f32 0.0, %v1493
        %v1495 = vpop.f32.mrf.mxu0
        %v1496 = vpop.f32.mrf.mxu0
        %v1497 = vadd.f32 0.0, %v1496
        %v1498 = vpop.f32.mrf.mxu0
        %1499 = vdwg.mxu0
        %v1500 = vpack.c.bf16 %v1489, %v1486
        %v1501 = vpack.c.bf16 %v1497, %v1494
        %s1502 = scalar_lea.vmem %s4, 40
        %v1503 = vld [vmem:[%s1502] sm:$0xf]
        %v1504 = vld [vmem:[%s1502 + $0x4] sm:$0xf]
        %v1507 = vunpack.c.l.b16 %v1503
        %v1508 = vunpack.c.l.b16 %v1504
        %v1509 = vpack.c.b16 %v1508, %v1507
        %v1512 = vsel %vm713, %v1500, 0
        %v1515 = vsel %vm713, %v1501, 0
        %1517 = vmatprep.subr.bf16.mxu0 0
        %1518 = vmatpush1.bf16.msra.mxu0 0
        %1519 = vmatprep.subr.bf16.mxu0 0
        %1520 = vmatpush1.bf16.msra.mxu0 0
        %1521 = vmatprep.subr.bf16.mxu0 0
        %1522 = vmatpush1.bf16.msra.mxu0 0
        %1523 = vmatprep.subr.bf16.mxu0 0
        %1524 = vmatpush1.bf16.msra.mxu0 0
        %1525 = vmatprep.subr.bf16.mxu0 0
        %1526 = vmatpush1.bf16.msra.mxu0 0
        %1527 = vmatprep.subr.bf16.mxu0 0
        %1528 = vmatpush1.bf16.msra.mxu0 0
        %1529 = vmatprep.subr.bf16.mxu0 0
        %1530 = vmatpush1.bf16.msra.mxu0 0
        %1531 = vmatprep.subr.bf16.mxu0 0
        %1532 = vmatpush1.bf16.msra.mxu0 %v1509
        %1533 = vmatprep.subr.bf16.mxu0 0
        %1534 = vmatpush2.bf16.msra.mxu0 0
        %1535 = vmatprep.subr.bf16.mxu0 0
        %1536 = vmatpush2.bf16.msra.mxu0 0
        %1537 = vmatprep.subr.bf16.mxu0 0
        %1538 = vmatpush2.bf16.msra.mxu0 0
        %1539 = vmatprep.subr.bf16.mxu0 0
        %1540 = vmatpush2.bf16.msra.mxu0 0
        %1541 = vmatprep.subr.bf16.mxu0 0
        %1542 = vmatpush2.bf16.msra.mxu0 0
        %1543 = vmatprep.subr.bf16.mxu0 0
        %1544 = vmatpush2.bf16.msra.mxu0 0
        %1545 = vmatprep.subr.bf16.mxu0 0
        %1546 = vmatpush2.bf16.msra.mxu0 0
        %1547 = vmatprep.subr.bf16.mxu0 0
        %1548 = vmatpush2.bf16.msra.mxu0 0
        %1549 = vmatprep.mubr.bf16.mxu0 0
        %1550 = vmatmul.mubr.bf16.gmra.mxu0 %v1512
        %v1551 = vpop.f32.mrf.mxu0
        %v1552 = vadd.f32 0.0, %v1551
        %v1553 = vpop.f32.mrf.mxu0
        %v1554 = vpop.f32.mrf.mxu0
        %v1555 = vadd.f32 0.0, %v1554
        %v1556 = vpop.f32.mrf.mxu0
        %1557 = vmatprep.mubr.bf16.mxu0 0
        %1558 = vmatmul.mubr.bf16.gmra.mxu0 %v1515
        %v1559 = vpop.f32.mrf.mxu0
        %v1560 = vadd.f32 0.0, %v1559
        %v1561 = vpop.f32.mrf.mxu0
        %v1562 = vpop.f32.mrf.mxu0
        %v1563 = vadd.f32 0.0, %v1562
        %v1564 = vpop.f32.mrf.mxu0
        %1565 = vdwg.mxu0
        %v1566 = vadd.f32 %v1418, %v1552
        %v1567 = vadd.f32 %v1419, %v1555
        %v1568 = vadd.f32 %v1420, %v1560
        %v1569 = vadd.f32 %v1421, %v1563
        %s1570 = scalar_lea.vmem %s3, 192
        %v1571 = vld [vmem:[%s1570] sm:$0xff]
        %v1572 = vld [vmem:[%s1570 + $0x8] sm:$0xff]
        %v1573 = vld [vmem:[%s1570 + $0x10] sm:$0xff]
        %v1574 = vld [vmem:[%s1570 + $0x18] sm:$0x11]
        %v1579 = vunpack.c.l.b16 %v1571
        %v1580 = vunpack.c.h.b16 %v1571
        %v1581 = vunpack.c.l.b16 %v1572
        %v1582 = vunpack.c.h.b16 %v1572
        %v1583 = vunpack.c.l.b16 %v1573
        %v1584 = vunpack.c.h.b16 %v1573
        %v1585 = vunpack.c.l.b16 %v1574
        %v1586 = vunpack.c.h.b16 %v1574
        %v1587 = vpack.c.b16 %v1581, %v1579
        %v1588 = vpack.c.b16 %v1582, %v1580
        %v1589 = vpack.c.b16 %v1585, %v1583
        %v1590 = vpack.c.b16 %v1586, %v1584
        %v1594 = vsel %vm713, %v1588, 0
        %v1597 = vsel %vm713, %v1590, 0
        %1599 = vmatprep.subr.bf16.mxu0 0
        %1600 = vmatpush1.bf16.msra.mxu0 %v689
        %1601 = vmatprep.subr.bf16.mxu0 0
        %1602 = vmatpush1.bf16.msra.mxu0 %v688
        %1603 = vmatprep.subr.bf16.mxu0 0
        %1604 = vmatpush1.bf16.msra.mxu0 %v687
        %1605 = vmatprep.subr.bf16.mxu0 0
        %1606 = vmatpush1.bf16.msra.mxu0 %v686
        %1607 = vmatprep.subr.bf16.mxu0 0
        %1608 = vmatpush1.bf16.msra.mxu0 %v685
        %1609 = vmatprep.subr.bf16.mxu0 0
        %1610 = vmatpush1.bf16.msra.mxu0 %v684
        %1611 = vmatprep.subr.bf16.mxu0 0
        %1612 = vmatpush1.bf16.msra.mxu0 %v683
        %1613 = vmatprep.subr.bf16.mxu0 0
        %1614 = vmatpush1.bf16.msra.mxu0 %v682
        %1615 = vmatprep.subr.bf16.mxu0 0
        %1616 = vmatpush2.bf16.msra.mxu0 0
        %1617 = vmatprep.subr.bf16.mxu0 0
        %1618 = vmatpush2.bf16.msra.mxu0 0
        %1619 = vmatprep.subr.bf16.mxu0 0
        %1620 = vmatpush2.bf16.msra.mxu0 0
        %1621 = vmatprep.subr.bf16.mxu0 0
        %1622 = vmatpush2.bf16.msra.mxu0 0
        %1623 = vmatprep.subr.bf16.mxu0 0
        %1624 = vmatpush2.bf16.msra.mxu0 0
        %1625 = vmatprep.subr.bf16.mxu0 0
        %1626 = vmatpush2.bf16.msra.mxu0 0
        %1627 = vmatprep.subr.bf16.mxu0 0
        %1628 = vmatpush2.bf16.msra.mxu0 0
        %1629 = vmatprep.subr.bf16.mxu0 0
        %1630 = vmatpush2.bf16.msra.mxu0 %v690
        %1631 = vmatprep.mubr.bf16.mxu0 %v1594
        %1632 = vmatmul.mubr.bf16.gmra.mxu0 %v1587
        %v1633 = vpop.f32.mrf.mxu0
        %v1634 = vadd.f32 0.0, %v1633
        %v1635 = vpop.f32.mrf.mxu0
        %v1636 = vpop.f32.mrf.mxu0
        %v1637 = vadd.f32 0.0, %v1636
        %v1638 = vpop.f32.mrf.mxu0
        %1639 = vmatprep.mubr.bf16.mxu0 %v1597
        %1640 = vmatmul.mubr.bf16.gmra.mxu0 %v1589
        %v1641 = vpop.f32.mrf.mxu0
        %v1642 = vadd.f32 0.0, %v1641
        %v1643 = vpop.f32.mrf.mxu0
        %v1644 = vpop.f32.mrf.mxu0
        %v1645 = vadd.f32 0.0, %v1644
        %v1646 = vpop.f32.mrf.mxu0
        %1647 = vdwg.mxu0
        %v1648 = vpack.c.bf16 %v1637, %v1634
        %v1649 = vpack.c.bf16 %v1645, %v1642
        %s1650 = scalar_lea.vmem %s4, 48
        %v1651 = vld [vmem:[%s1650] sm:$0xf]
        %v1652 = vld [vmem:[%s1650 + $0x4] sm:$0xf]
        %v1655 = vunpack.c.l.b16 %v1651
        %v1656 = vunpack.c.l.b16 %v1652
        %v1657 = vpack.c.b16 %v1656, %v1655
        %v1660 = vsel %vm713, %v1648, 0
        %v1663 = vsel %vm713, %v1649, 0
        %1665 = vmatprep.subr.bf16.mxu0 0
        %1666 = vmatpush1.bf16.msra.mxu0 0
        %1667 = vmatprep.subr.bf16.mxu0 0
        %1668 = vmatpush1.bf16.msra.mxu0 0
        %1669 = vmatprep.subr.bf16.mxu0 0
        %1670 = vmatpush1.bf16.msra.mxu0 0
        %1671 = vmatprep.subr.bf16.mxu0 0
        %1672 = vmatpush1.bf16.msra.mxu0 0
        %1673 = vmatprep.subr.bf16.mxu0 0
        %1674 = vmatpush1.bf16.msra.mxu0 0
        %1675 = vmatprep.subr.bf16.mxu0 0
        %1676 = vmatpush1.bf16.msra.mxu0 0
        %1677 = vmatprep.subr.bf16.mxu0 0
        %1678 = vmatpush1.bf16.msra.mxu0 0
        %1679 = vmatprep.subr.bf16.mxu0 0
        %1680 = vmatpush1.bf16.msra.mxu0 %v1657
        %1681 = vmatprep.subr.bf16.mxu0 0
        %1682 = vmatpush2.bf16.msra.mxu0 0
        %1683 = vmatprep.subr.bf16.mxu0 0
        %1684 = vmatpush2.bf16.msra.mxu0 0
        %1685 = vmatprep.subr.bf16.mxu0 0
        %1686 = vmatpush2.bf16.msra.mxu0 0
        %1687 = vmatprep.subr.bf16.mxu0 0
        %1688 = vmatpush2.bf16.msra.mxu0 0
        %1689 = vmatprep.subr.bf16.mxu0 0
        %1690 = vmatpush2.bf16.msra.mxu0 0
        %1691 = vmatprep.subr.bf16.mxu0 0
        %1692 = vmatpush2.bf16.msra.mxu0 0
        %1693 = vmatprep.subr.bf16.mxu0 0
        %1694 = vmatpush2.bf16.msra.mxu0 0
        %1695 = vmatprep.subr.bf16.mxu0 0
        %1696 = vmatpush2.bf16.msra.mxu0 0
        %1697 = vmatprep.mubr.bf16.mxu0 0
        %1698 = vmatmul.mubr.bf16.gmra.mxu0 %v1660
        %v1699 = vpop.f32.mrf.mxu0
        %v1700 = vadd.f32 0.0, %v1699
        %v1701 = vpop.f32.mrf.mxu0
        %v1702 = vpop.f32.mrf.mxu0
        %v1703 = vadd.f32 0.0, %v1702
        %v1704 = vpop.f32.mrf.mxu0
        %1705 = vmatprep.mubr.bf16.mxu0 0
        %1706 = vmatmul.mubr.bf16.gmra.mxu0 %v1663
        %v1707 = vpop.f32.mrf.mxu0
        %v1708 = vadd.f32 0.0, %v1707
        %v1709 = vpop.f32.mrf.mxu0
        %v1710 = vpop.f32.mrf.mxu0
        %v1711 = vadd.f32 0.0, %v1710
        %v1712 = vpop.f32.mrf.mxu0
        %1713 = vdwg.mxu0
        %v1714 = vadd.f32 %v1566, %v1700
        %v1715 = vadd.f32 %v1567, %v1703
        %v1716 = vadd.f32 %v1568, %v1708
        %v1717 = vadd.f32 %v1569, %v1711
        %s1718 = scalar_lea.vmem %s3, 224
        %v1719 = vld [vmem:[%s1718] sm:$0xff]
        %v1720 = vld [vmem:[%s1718 + $0x8] sm:$0xff]
        %v1721 = vld [vmem:[%s1718 + $0x10] sm:$0xff]
        %v1722 = vld [vmem:[%s1718 + $0x18] sm:$0x11]
        %v1727 = vunpack.c.l.b16 %v1719
        %v1728 = vunpack.c.h.b16 %v1719
        %v1729 = vunpack.c.l.b16 %v1720
        %v1730 = vunpack.c.h.b16 %v1720
        %v1731 = vunpack.c.l.b16 %v1721
        %v1732 = vunpack.c.h.b16 %v1721
        %v1733 = vunpack.c.l.b16 %v1722
        %v1734 = vunpack.c.h.b16 %v1722
        %v1735 = vpack.c.b16 %v1729, %v1727
        %v1736 = vpack.c.b16 %v1730, %v1728
        %v1737 = vpack.c.b16 %v1733, %v1731
        %v1738 = vpack.c.b16 %v1734, %v1732
        %v1742 = vsel %vm713, %v1736, 0
        %v1745 = vsel %vm713, %v1738, 0
        %1747 = vmatprep.subr.bf16.mxu0 0
        %1748 = vmatpush1.bf16.msra.mxu0 %v689
        %1749 = vmatprep.subr.bf16.mxu0 0
        %1750 = vmatpush1.bf16.msra.mxu0 %v688
        %1751 = vmatprep.subr.bf16.mxu0 0
        %1752 = vmatpush1.bf16.msra.mxu0 %v687
        %1753 = vmatprep.subr.bf16.mxu0 0
        %1754 = vmatpush1.bf16.msra.mxu0 %v686
        %1755 = vmatprep.subr.bf16.mxu0 0
        %1756 = vmatpush1.bf16.msra.mxu0 %v685
        %1757 = vmatprep.subr.bf16.mxu0 0
        %1758 = vmatpush1.bf16.msra.mxu0 %v684
        %1759 = vmatprep.subr.bf16.mxu0 0
        %1760 = vmatpush1.bf16.msra.mxu0 %v683
        %1761 = vmatprep.subr.bf16.mxu0 0
        %1762 = vmatpush1.bf16.msra.mxu0 %v682
        %1763 = vmatprep.subr.bf16.mxu0 0
        %1764 = vmatpush2.bf16.msra.mxu0 0
        %1765 = vmatprep.subr.bf16.mxu0 0
        %1766 = vmatpush2.bf16.msra.mxu0 0
        %1767 = vmatprep.subr.bf16.mxu0 0
        %1768 = vmatpush2.bf16.msra.mxu0 0
        %1769 = vmatprep.subr.bf16.mxu0 0
        %1770 = vmatpush2.bf16.msra.mxu0 0
        %1771 = vmatprep.subr.bf16.mxu0 0
        %1772 = vmatpush2.bf16.msra.mxu0 0
        %1773 = vmatprep.subr.bf16.mxu0 0
        %1774 = vmatpush2.bf16.msra.mxu0 0
        %1775 = vmatprep.subr.bf16.mxu0 0
        %1776 = vmatpush2.bf16.msra.mxu0 0
        %1777 = vmatprep.subr.bf16.mxu0 0
        %1778 = vmatpush2.bf16.msra.mxu0 %v690
        %1779 = vmatprep.mubr.bf16.mxu0 %v1742
        %1780 = vmatmul.mubr.bf16.gmra.mxu0 %v1735
        %v1781 = vpop.f32.mrf.mxu0
        %v1782 = vadd.f32 0.0, %v1781
        %v1783 = vpop.f32.mrf.mxu0
        %v1784 = vpop.f32.mrf.mxu0
        %v1785 = vadd.f32 0.0, %v1784
        %v1786 = vpop.f32.mrf.mxu0
        %1787 = vmatprep.mubr.bf16.mxu0 %v1745
        %1788 = vmatmul.mubr.bf16.gmra.mxu0 %v1737
        %v1789 = vpop.f32.mrf.mxu0
        %v1790 = vadd.f32 0.0, %v1789
        %v1791 = vpop.f32.mrf.mxu0
        %v1792 = vpop.f32.mrf.mxu0
        %v1793 = vadd.f32 0.0, %v1792
        %v1794 = vpop.f32.mrf.mxu0
        %1795 = vdwg.mxu0
        %v1796 = vpack.c.bf16 %v1785, %v1782
        %v1797 = vpack.c.bf16 %v1793, %v1790
        %s1798 = scalar_lea.vmem %s4, 56
        %v1799 = vld [vmem:[%s1798] sm:$0xf]
        %v1800 = vld [vmem:[%s1798 + $0x4] sm:$0xf]
        %v1803 = vunpack.c.l.b16 %v1799
        %v1804 = vunpack.c.l.b16 %v1800
        %v1805 = vpack.c.b16 %v1804, %v1803
        %v1808 = vsel %vm713, %v1796, 0
        %v1811 = vsel %vm713, %v1797, 0
        %1813 = vmatprep.subr.bf16.mxu0 0
        %1814 = vmatpush1.bf16.msra.mxu0 0
        %1815 = vmatprep.subr.bf16.mxu0 0
        %1816 = vmatpush1.bf16.msra.mxu0 0
        %1817 = vmatprep.subr.bf16.mxu0 0
        %1818 = vmatpush1.bf16.msra.mxu0 0
        %1819 = vmatprep.subr.bf16.mxu0 0
        %1820 = vmatpush1.bf16.msra.mxu0 0
        %1821 = vmatprep.subr.bf16.mxu0 0
        %1822 = vmatpush1.bf16.msra.mxu0 0
        %1823 = vmatprep.subr.bf16.mxu0 0
        %1824 = vmatpush1.bf16.msra.mxu0 0
        %1825 = vmatprep.subr.bf16.mxu0 0
        %1826 = vmatpush1.bf16.msra.mxu0 0
        %1827 = vmatprep.subr.bf16.mxu0 0
        %1828 = vmatpush1.bf16.msra.mxu0 %v1805
        %1829 = vmatprep.subr.bf16.mxu0 0
        %1830 = vmatpush2.bf16.msra.mxu0 0
        %1831 = vmatprep.subr.bf16.mxu0 0
        %1832 = vmatpush2.bf16.msra.mxu0 0
        %1833 = vmatprep.subr.bf16.mxu0 0
        %1834 = vmatpush2.bf16.msra.mxu0 0
        %1835 = vmatprep.subr.bf16.mxu0 0
        %1836 = vmatpush2.bf16.msra.mxu0 0
        %1837 = vmatprep.subr.bf16.mxu0 0
        %1838 = vmatpush2.bf16.msra.mxu0 0
        %1839 = vmatprep.subr.bf16.mxu0 0
        %1840 = vmatpush2.bf16.msra.mxu0 0
        %1841 = vmatprep.subr.bf16.mxu0 0
        %1842 = vmatpush2.bf16.msra.mxu0 0
        %1843 = vmatprep.subr.bf16.mxu0 0
        %1844 = vmatpush2.bf16.msra.mxu0 0
        %1845 = vmatprep.mubr.bf16.mxu0 0
        %1846 = vmatmul.mubr.bf16.gmra.mxu0 %v1808
        %v1847 = vpop.f32.mrf.mxu0
        %v1848 = vadd.f32 0.0, %v1847
        %v1849 = vpop.f32.mrf.mxu0
        %v1850 = vpop.f32.mrf.mxu0
        %v1851 = vadd.f32 0.0, %v1850
        %v1852 = vpop.f32.mrf.mxu0
        %1853 = vmatprep.mubr.bf16.mxu0 0
        %1854 = vmatmul.mubr.bf16.gmra.mxu0 %v1811
        %v1855 = vpop.f32.mrf.mxu0
        %v1856 = vadd.f32 0.0, %v1855
        %v1857 = vpop.f32.mrf.mxu0
        %v1858 = vpop.f32.mrf.mxu0
        %v1859 = vadd.f32 0.0, %v1858
        %v1860 = vpop.f32.mrf.mxu0
        %1861 = vdwg.mxu0
        %v1862 = vadd.f32 %v1714, %v1848
        %v1863 = vadd.f32 %v1715, %v1851
        %v1864 = vadd.f32 %v1716, %v1856
        %v1865 = vadd.f32 %v1717, %v1859
        %s1866 = scalar_lea.vmem %s3, 256
        %v1867 = vld [vmem:[%s1866] sm:$0xff]
        %v1868 = vld [vmem:[%s1866 + $0x8] sm:$0xff]
        %v1869 = vld [vmem:[%s1866 + $0x10] sm:$0xff]
        %v1870 = vld [vmem:[%s1866 + $0x18] sm:$0x11]
        %v1875 = vunpack.c.l.b16 %v1867
        %v1876 = vunpack.c.h.b16 %v1867
        %v1877 = vunpack.c.l.b16 %v1868
        %v1878 = vunpack.c.h.b16 %v1868
        %v1879 = vunpack.c.l.b16 %v1869
        %v1880 = vunpack.c.h.b16 %v1869
        %v1881 = vunpack.c.l.b16 %v1870
        %v1882 = vunpack.c.h.b16 %v1870
        %v1883 = vpack.c.b16 %v1877, %v1875
        %v1884 = vpack.c.b16 %v1878, %v1876
        %v1885 = vpack.c.b16 %v1881, %v1879
        %v1886 = vpack.c.b16 %v1882, %v1880
        %v1890 = vsel %vm713, %v1884, 0
        %v1893 = vsel %vm713, %v1886, 0
        %1895 = vmatprep.subr.bf16.mxu0 0
        %1896 = vmatpush1.bf16.msra.mxu0 %v689
        %1897 = vmatprep.subr.bf16.mxu0 0
        %1898 = vmatpush1.bf16.msra.mxu0 %v688
        %1899 = vmatprep.subr.bf16.mxu0 0
        %1900 = vmatpush1.bf16.msra.mxu0 %v687
        %1901 = vmatprep.subr.bf16.mxu0 0
        %1902 = vmatpush1.bf16.msra.mxu0 %v686
        %1903 = vmatprep.subr.bf16.mxu0 0
        %1904 = vmatpush1.bf16.msra.mxu0 %v685
        %1905 = vmatprep.subr.bf16.mxu0 0
        %1906 = vmatpush1.bf16.msra.mxu0 %v684
        %1907 = vmatprep.subr.bf16.mxu0 0
        %1908 = vmatpush1.bf16.msra.mxu0 %v683
        %1909 = vmatprep.subr.bf16.mxu0 0
        %1910 = vmatpush1.bf16.msra.mxu0 %v682
        %1911 = vmatprep.subr.bf16.mxu0 0
        %1912 = vmatpush2.bf16.msra.mxu0 0
        %1913 = vmatprep.subr.bf16.mxu0 0
        %1914 = vmatpush2.bf16.msra.mxu0 0
        %1915 = vmatprep.subr.bf16.mxu0 0
        %1916 = vmatpush2.bf16.msra.mxu0 0
        %1917 = vmatprep.subr.bf16.mxu0 0
        %1918 = vmatpush2.bf16.msra.mxu0 0
        %1919 = vmatprep.subr.bf16.mxu0 0
        %1920 = vmatpush2.bf16.msra.mxu0 0
        %1921 = vmatprep.subr.bf16.mxu0 0
        %1922 = vmatpush2.bf16.msra.mxu0 0
        %1923 = vmatprep.subr.bf16.mxu0 0
        %1924 = vmatpush2.bf16.msra.mxu0 0
        %1925 = vmatprep.subr.bf16.mxu0 0
        %1926 = vmatpush2.bf16.msra.mxu0 %v690
        %1927 = vmatprep.mubr.bf16.mxu0 %v1890
        %1928 = vmatmul.mubr.bf16.gmra.mxu0 %v1883
        %v1929 = vpop.f32.mrf.mxu0
        %v1930 = vadd.f32 0.0, %v1929
        %v1931 = vpop.f32.mrf.mxu0
        %v1932 = vpop.f32.mrf.mxu0
        %v1933 = vadd.f32 0.0, %v1932
        %v1934 = vpop.f32.mrf.mxu0
        %1935 = vmatprep.mubr.bf16.mxu0 %v1893
        %1936 = vmatmul.mubr.bf16.gmra.mxu0 %v1885
        %v1937 = vpop.f32.mrf.mxu0
        %v1938 = vadd.f32 0.0, %v1937
        %v1939 = vpop.f32.mrf.mxu0
        %v1940 = vpop.f32.mrf.mxu0
        %v1941 = vadd.f32 0.0, %v1940
        %v1942 = vpop.f32.mrf.mxu0
        %1943 = vdwg.mxu0
        %v1944 = vpack.c.bf16 %v1933, %v1930
        %v1945 = vpack.c.bf16 %v1941, %v1938
        %s1946 = scalar_lea.vmem %s4, 64
        %v1947 = vld [vmem:[%s1946] sm:$0xf]
        %v1948 = vld [vmem:[%s1946 + $0x4] sm:$0xf]
        %v1951 = vunpack.c.l.b16 %v1947
        %v1952 = vunpack.c.l.b16 %v1948
        %v1953 = vpack.c.b16 %v1952, %v1951
        %v1956 = vsel %vm713, %v1944, 0
        %v1959 = vsel %vm713, %v1945, 0
        %1961 = vmatprep.subr.bf16.mxu0 0
        %1962 = vmatpush1.bf16.msra.mxu0 0
        %1963 = vmatprep.subr.bf16.mxu0 0
        %1964 = vmatpush1.bf16.msra.mxu0 0
        %1965 = vmatprep.subr.bf16.mxu0 0
        %1966 = vmatpush1.bf16.msra.mxu0 0
        %1967 = vmatprep.subr.bf16.mxu0 0
        %1968 = vmatpush1.bf16.msra.mxu0 0
        %1969 = vmatprep.subr.bf16.mxu0 0
        %1970 = vmatpush1.bf16.msra.mxu0 0
        %1971 = vmatprep.subr.bf16.mxu0 0
        %1972 = vmatpush1.bf16.msra.mxu0 0
        %1973 = vmatprep.subr.bf16.mxu0 0
        %1974 = vmatpush1.bf16.msra.mxu0 0
        %1975 = vmatprep.subr.bf16.mxu0 0
        %1976 = vmatpush1.bf16.msra.mxu0 %v1953
        %1977 = vmatprep.subr.bf16.mxu0 0
        %1978 = vmatpush2.bf16.msra.mxu0 0
        %1979 = vmatprep.subr.bf16.mxu0 0
        %1980 = vmatpush2.bf16.msra.mxu0 0
        %1981 = vmatprep.subr.bf16.mxu0 0
        %1982 = vmatpush2.bf16.msra.mxu0 0
        %1983 = vmatprep.subr.bf16.mxu0 0
        %1984 = vmatpush2.bf16.msra.mxu0 0
        %1985 = vmatprep.subr.bf16.mxu0 0
        %1986 = vmatpush2.bf16.msra.mxu0 0
        %1987 = vmatprep.subr.bf16.mxu0 0
        %1988 = vmatpush2.bf16.msra.mxu0 0
        %1989 = vmatprep.subr.bf16.mxu0 0
        %1990 = vmatpush2.bf16.msra.mxu0 0
        %1991 = vmatprep.subr.bf16.mxu0 0
        %1992 = vmatpush2.bf16.msra.mxu0 0
        %1993 = vmatprep.mubr.bf16.mxu0 0
        %1994 = vmatmul.mubr.bf16.gmra.mxu0 %v1956
        %v1995 = vpop.f32.mrf.mxu0
        %v1996 = vadd.f32 0.0, %v1995
        %v1997 = vpop.f32.mrf.mxu0
        %v1998 = vpop.f32.mrf.mxu0
        %v1999 = vadd.f32 0.0, %v1998
        %v2000 = vpop.f32.mrf.mxu0
        %2001 = vmatprep.mubr.bf16.mxu0 0
        %2002 = vmatmul.mubr.bf16.gmra.mxu0 %v1959
        %v2003 = vpop.f32.mrf.mxu0
        %v2004 = vadd.f32 0.0, %v2003
        %v2005 = vpop.f32.mrf.mxu0
        %v2006 = vpop.f32.mrf.mxu0
        %v2007 = vadd.f32 0.0, %v2006
        %v2008 = vpop.f32.mrf.mxu0
        %2009 = vdwg.mxu0
        %v2010 = vadd.f32 %v1862, %v1996
        %v2011 = vadd.f32 %v1863, %v1999
        %v2012 = vadd.f32 %v1864, %v2004
        %v2013 = vadd.f32 %v1865, %v2007
        %s2014 = scalar_lea.vmem %s3, 288
        %v2015 = vld [vmem:[%s2014] sm:$0xff]
        %v2016 = vld [vmem:[%s2014 + $0x8] sm:$0xff]
        %v2017 = vld [vmem:[%s2014 + $0x10] sm:$0xff]
        %v2018 = vld [vmem:[%s2014 + $0x18] sm:$0x11]
        %v2023 = vunpack.c.l.b16 %v2015
        %v2024 = vunpack.c.h.b16 %v2015
        %v2025 = vunpack.c.l.b16 %v2016
        %v2026 = vunpack.c.h.b16 %v2016
        %v2027 = vunpack.c.l.b16 %v2017
        %v2028 = vunpack.c.h.b16 %v2017
        %v2029 = vunpack.c.l.b16 %v2018
        %v2030 = vunpack.c.h.b16 %v2018
        %v2031 = vpack.c.b16 %v2025, %v2023
        %v2032 = vpack.c.b16 %v2026, %v2024
        %v2033 = vpack.c.b16 %v2029, %v2027
        %v2034 = vpack.c.b16 %v2030, %v2028
        %v2038 = vsel %vm713, %v2032, 0
        %v2041 = vsel %vm713, %v2034, 0
        %2043 = vmatprep.subr.bf16.mxu0 0
        %2044 = vmatpush1.bf16.msra.mxu0 %v689
        %2045 = vmatprep.subr.bf16.mxu0 0
        %2046 = vmatpush1.bf16.msra.mxu0 %v688
        %2047 = vmatprep.subr.bf16.mxu0 0
        %2048 = vmatpush1.bf16.msra.mxu0 %v687
        %2049 = vmatprep.subr.bf16.mxu0 0
        %2050 = vmatpush1.bf16.msra.mxu0 %v686
        %2051 = vmatprep.subr.bf16.mxu0 0
        %2052 = vmatpush1.bf16.msra.mxu0 %v685
        %2053 = vmatprep.subr.bf16.mxu0 0
        %2054 = vmatpush1.bf16.msra.mxu0 %v684
        %2055 = vmatprep.subr.bf16.mxu0 0
        %2056 = vmatpush1.bf16.msra.mxu0 %v683
        %2057 = vmatprep.subr.bf16.mxu0 0
        %2058 = vmatpush1.bf16.msra.mxu0 %v682
        %2059 = vmatprep.subr.bf16.mxu0 0
        %2060 = vmatpush2.bf16.msra.mxu0 0
        %2061 = vmatprep.subr.bf16.mxu0 0
        %2062 = vmatpush2.bf16.msra.mxu0 0
        %2063 = vmatprep.subr.bf16.mxu0 0
        %2064 = vmatpush2.bf16.msra.mxu0 0
        %2065 = vmatprep.subr.bf16.mxu0 0
        %2066 = vmatpush2.bf16.msra.mxu0 0
        %2067 = vmatprep.subr.bf16.mxu0 0
        %2068 = vmatpush2.bf16.msra.mxu0 0
        %2069 = vmatprep.subr.bf16.mxu0 0
        %2070 = vmatpush2.bf16.msra.mxu0 0
        %2071 = vmatprep.subr.bf16.mxu0 0
        %2072 = vmatpush2.bf16.msra.mxu0 0
        %2073 = vmatprep.subr.bf16.mxu0 0
        %2074 = vmatpush2.bf16.msra.mxu0 %v690
        %2075 = vmatprep.mubr.bf16.mxu0 %v2038
        %2076 = vmatmul.mubr.bf16.gmra.mxu0 %v2031
        %v2077 = vpop.f32.mrf.mxu0
        %v2078 = vadd.f32 0.0, %v2077
        %v2079 = vpop.f32.mrf.mxu0
        %v2080 = vpop.f32.mrf.mxu0
        %v2081 = vadd.f32 0.0, %v2080
        %v2082 = vpop.f32.mrf.mxu0
        %2083 = vmatprep.mubr.bf16.mxu0 %v2041
        %2084 = vmatmul.mubr.bf16.gmra.mxu0 %v2033
        %v2085 = vpop.f32.mrf.mxu0
        %v2086 = vadd.f32 0.0, %v2085
        %v2087 = vpop.f32.mrf.mxu0
        %v2088 = vpop.f32.mrf.mxu0
        %v2089 = vadd.f32 0.0, %v2088
        %v2090 = vpop.f32.mrf.mxu0
        %2091 = vdwg.mxu0
        %v2092 = vpack.c.bf16 %v2081, %v2078
        %v2093 = vpack.c.bf16 %v2089, %v2086
        %s2094 = scalar_lea.vmem %s4, 72
        %v2095 = vld [vmem:[%s2094] sm:$0xf]
        %v2096 = vld [vmem:[%s2094 + $0x4] sm:$0xf]
        %v2099 = vunpack.c.l.b16 %v2095
        %v2100 = vunpack.c.l.b16 %v2096
        %v2101 = vpack.c.b16 %v2100, %v2099
        %v2104 = vsel %vm713, %v2092, 0
        %v2107 = vsel %vm713, %v2093, 0
        %2109 = vmatprep.subr.bf16.mxu0 0
        %2110 = vmatpush1.bf16.msra.mxu0 0
        %2111 = vmatprep.subr.bf16.mxu0 0
        %2112 = vmatpush1.bf16.msra.mxu0 0
        %2113 = vmatprep.subr.bf16.mxu0 0
        %2114 = vmatpush1.bf16.msra.mxu0 0
        %2115 = vmatprep.subr.bf16.mxu0 0
        %2116 = vmatpush1.bf16.msra.mxu0 0
        %2117 = vmatprep.subr.bf16.mxu0 0
        %2118 = vmatpush1.bf16.msra.mxu0 0
        %2119 = vmatprep.subr.bf16.mxu0 0
        %2120 = vmatpush1.bf16.msra.mxu0 0
        %2121 = vmatprep.subr.bf16.mxu0 0
        %2122 = vmatpush1.bf16.msra.mxu0 0
        %2123 = vmatprep.subr.bf16.mxu0 0
        %2124 = vmatpush1.bf16.msra.mxu0 %v2101
        %2125 = vmatprep.subr.bf16.mxu0 0
        %2126 = vmatpush2.bf16.msra.mxu0 0
        %2127 = vmatprep.subr.bf16.mxu0 0
        %2128 = vmatpush2.bf16.msra.mxu0 0
        %2129 = vmatprep.subr.bf16.mxu0 0
        %2130 = vmatpush2.bf16.msra.mxu0 0
        %2131 = vmatprep.subr.bf16.mxu0 0
        %2132 = vmatpush2.bf16.msra.mxu0 0
        %2133 = vmatprep.subr.bf16.mxu0 0
        %2134 = vmatpush2.bf16.msra.mxu0 0
        %2135 = vmatprep.subr.bf16.mxu0 0
        %2136 = vmatpush2.bf16.msra.mxu0 0
        %2137 = vmatprep.subr.bf16.mxu0 0
        %2138 = vmatpush2.bf16.msra.mxu0 0
        %2139 = vmatprep.subr.bf16.mxu0 0
        %2140 = vmatpush2.bf16.msra.mxu0 0
        %2141 = vmatprep.mubr.bf16.mxu0 0
        %2142 = vmatmul.mubr.bf16.gmra.mxu0 %v2104
        %v2143 = vpop.f32.mrf.mxu0
        %v2144 = vadd.f32 0.0, %v2143
        %v2145 = vpop.f32.mrf.mxu0
        %v2146 = vpop.f32.mrf.mxu0
        %v2147 = vadd.f32 0.0, %v2146
        %v2148 = vpop.f32.mrf.mxu0
        %2149 = vmatprep.mubr.bf16.mxu0 0
        %2150 = vmatmul.mubr.bf16.gmra.mxu0 %v2107
        %v2151 = vpop.f32.mrf.mxu0
        %v2152 = vadd.f32 0.0, %v2151
        %v2153 = vpop.f32.mrf.mxu0
        %v2154 = vpop.f32.mrf.mxu0
        %v2155 = vadd.f32 0.0, %v2154
        %v2156 = vpop.f32.mrf.mxu0
        %2157 = vdwg.mxu0
        %v2158 = vadd.f32 %v2010, %v2144
        %v2159 = vadd.f32 %v2011, %v2147
        %v2160 = vadd.f32 %v2012, %v2152
        %v2161 = vadd.f32 %v2013, %v2155
        %s2162 = scalar_lea.vmem %s3, 320
        %v2163 = vld [vmem:[%s2162] sm:$0xff]
        %v2164 = vld [vmem:[%s2162 + $0x8] sm:$0xff]
        %v2165 = vld [vmem:[%s2162 + $0x10] sm:$0xff]
        %v2166 = vld [vmem:[%s2162 + $0x18] sm:$0x11]
        %v2171 = vunpack.c.l.b16 %v2163
        %v2172 = vunpack.c.h.b16 %v2163
        %v2173 = vunpack.c.l.b16 %v2164
        %v2174 = vunpack.c.h.b16 %v2164
        %v2175 = vunpack.c.l.b16 %v2165
        %v2176 = vunpack.c.h.b16 %v2165
        %v2177 = vunpack.c.l.b16 %v2166
        %v2178 = vunpack.c.h.b16 %v2166
        %v2179 = vpack.c.b16 %v2173, %v2171
        %v2180 = vpack.c.b16 %v2174, %v2172
        %v2181 = vpack.c.b16 %v2177, %v2175
        %v2182 = vpack.c.b16 %v2178, %v2176
        %v2186 = vsel %vm713, %v2180, 0
        %v2189 = vsel %vm713, %v2182, 0
        %2191 = vmatprep.subr.bf16.mxu0 0
        %2192 = vmatpush1.bf16.msra.mxu0 %v689
        %2193 = vmatprep.subr.bf16.mxu0 0
        %2194 = vmatpush1.bf16.msra.mxu0 %v688
        %2195 = vmatprep.subr.bf16.mxu0 0
        %2196 = vmatpush1.bf16.msra.mxu0 %v687
        %2197 = vmatprep.subr.bf16.mxu0 0
        %2198 = vmatpush1.bf16.msra.mxu0 %v686
        %2199 = vmatprep.subr.bf16.mxu0 0
        %2200 = vmatpush1.bf16.msra.mxu0 %v685
        %2201 = vmatprep.subr.bf16.mxu0 0
        %2202 = vmatpush1.bf16.msra.mxu0 %v684
        %2203 = vmatprep.subr.bf16.mxu0 0
        %2204 = vmatpush1.bf16.msra.mxu0 %v683
        %2205 = vmatprep.subr.bf16.mxu0 0
        %2206 = vmatpush1.bf16.msra.mxu0 %v682
        %2207 = vmatprep.subr.bf16.mxu0 0
        %2208 = vmatpush2.bf16.msra.mxu0 0
        %2209 = vmatprep.subr.bf16.mxu0 0
        %2210 = vmatpush2.bf16.msra.mxu0 0
        %2211 = vmatprep.subr.bf16.mxu0 0
        %2212 = vmatpush2.bf16.msra.mxu0 0
        %2213 = vmatprep.subr.bf16.mxu0 0
        %2214 = vmatpush2.bf16.msra.mxu0 0
        %2215 = vmatprep.subr.bf16.mxu0 0
        %2216 = vmatpush2.bf16.msra.mxu0 0
        %2217 = vmatprep.subr.bf16.mxu0 0
        %2218 = vmatpush2.bf16.msra.mxu0 0
        %2219 = vmatprep.subr.bf16.mxu0 0
        %2220 = vmatpush2.bf16.msra.mxu0 0
        %2221 = vmatprep.subr.bf16.mxu0 0
        %2222 = vmatpush2.bf16.msra.mxu0 %v690
        %2223 = vmatprep.mubr.bf16.mxu0 %v2186
        %2224 = vmatmul.mubr.bf16.gmra.mxu0 %v2179
        %v2225 = vpop.f32.mrf.mxu0
        %v2226 = vadd.f32 0.0, %v2225
        %v2227 = vpop.f32.mrf.mxu0
        %v2228 = vpop.f32.mrf.mxu0
        %v2229 = vadd.f32 0.0, %v2228
        %v2230 = vpop.f32.mrf.mxu0
        %2231 = vmatprep.mubr.bf16.mxu0 %v2189
        %2232 = vmatmul.mubr.bf16.gmra.mxu0 %v2181
        %v2233 = vpop.f32.mrf.mxu0
        %v2234 = vadd.f32 0.0, %v2233
        %v2235 = vpop.f32.mrf.mxu0
        %v2236 = vpop.f32.mrf.mxu0
        %v2237 = vadd.f32 0.0, %v2236
        %v2238 = vpop.f32.mrf.mxu0
        %2239 = vdwg.mxu0
        %v2240 = vpack.c.bf16 %v2229, %v2226
        %v2241 = vpack.c.bf16 %v2237, %v2234
        %s2242 = scalar_lea.vmem %s4, 80
        %v2243 = vld [vmem:[%s2242] sm:$0xf]
        %v2244 = vld [vmem:[%s2242 + $0x4] sm:$0xf]
        %v2247 = vunpack.c.l.b16 %v2243
        %v2248 = vunpack.c.l.b16 %v2244
        %v2249 = vpack.c.b16 %v2248, %v2247
        %v2252 = vsel %vm713, %v2240, 0
        %v2255 = vsel %vm713, %v2241, 0
        %2257 = vmatprep.subr.bf16.mxu0 0
        %2258 = vmatpush1.bf16.msra.mxu0 0
        %2259 = vmatprep.subr.bf16.mxu0 0
        %2260 = vmatpush1.bf16.msra.mxu0 0
        %2261 = vmatprep.subr.bf16.mxu0 0
        %2262 = vmatpush1.bf16.msra.mxu0 0
        %2263 = vmatprep.subr.bf16.mxu0 0
        %2264 = vmatpush1.bf16.msra.mxu0 0
        %2265 = vmatprep.subr.bf16.mxu0 0
        %2266 = vmatpush1.bf16.msra.mxu0 0
        %2267 = vmatprep.subr.bf16.mxu0 0
        %2268 = vmatpush1.bf16.msra.mxu0 0
        %2269 = vmatprep.subr.bf16.mxu0 0
        %2270 = vmatpush1.bf16.msra.mxu0 0
        %2271 = vmatprep.subr.bf16.mxu0 0
        %2272 = vmatpush1.bf16.msra.mxu0 %v2249
        %2273 = vmatprep.subr.bf16.mxu0 0
        %2274 = vmatpush2.bf16.msra.mxu0 0
        %2275 = vmatprep.subr.bf16.mxu0 0
        %2276 = vmatpush2.bf16.msra.mxu0 0
        %2277 = vmatprep.subr.bf16.mxu0 0
        %2278 = vmatpush2.bf16.msra.mxu0 0
        %2279 = vmatprep.subr.bf16.mxu0 0
        %2280 = vmatpush2.bf16.msra.mxu0 0
        %2281 = vmatprep.subr.bf16.mxu0 0
        %2282 = vmatpush2.bf16.msra.mxu0 0
        %2283 = vmatprep.subr.bf16.mxu0 0
        %2284 = vmatpush2.bf16.msra.mxu0 0
        %2285 = vmatprep.subr.bf16.mxu0 0
        %2286 = vmatpush2.bf16.msra.mxu0 0
        %2287 = vmatprep.subr.bf16.mxu0 0
        %2288 = vmatpush2.bf16.msra.mxu0 0
        %2289 = vmatprep.mubr.bf16.mxu0 0
        %2290 = vmatmul.mubr.bf16.gmra.mxu0 %v2252
        %v2291 = vpop.f32.mrf.mxu0
        %v2292 = vadd.f32 0.0, %v2291
        %v2293 = vpop.f32.mrf.mxu0
        %v2294 = vpop.f32.mrf.mxu0
        %v2295 = vadd.f32 0.0, %v2294
        %v2296 = vpop.f32.mrf.mxu0
        %2297 = vmatprep.mubr.bf16.mxu0 0
        %2298 = vmatmul.mubr.bf16.gmra.mxu0 %v2255
        %v2299 = vpop.f32.mrf.mxu0
        %v2300 = vadd.f32 0.0, %v2299
        %v2301 = vpop.f32.mrf.mxu0
        %v2302 = vpop.f32.mrf.mxu0
        %v2303 = vadd.f32 0.0, %v2302
        %v2304 = vpop.f32.mrf.mxu0
        %2305 = vdwg.mxu0
        %v2306 = vadd.f32 %v2158, %v2292
        %v2307 = vadd.f32 %v2159, %v2295
        %v2308 = vadd.f32 %v2160, %v2300
        %v2309 = vadd.f32 %v2161, %v2303
        %s2310 = scalar_lea.vmem %s3, 352
        %v2311 = vld [vmem:[%s2310] sm:$0xff]
        %v2312 = vld [vmem:[%s2310 + $0x8] sm:$0xff]
        %v2313 = vld [vmem:[%s2310 + $0x10] sm:$0xff]
        %v2314 = vld [vmem:[%s2310 + $0x18] sm:$0x11]
        %v2319 = vunpack.c.l.b16 %v2311
        %v2320 = vunpack.c.h.b16 %v2311
        %v2321 = vunpack.c.l.b16 %v2312
        %v2322 = vunpack.c.h.b16 %v2312
        %v2323 = vunpack.c.l.b16 %v2313
        %v2324 = vunpack.c.h.b16 %v2313
        %v2325 = vunpack.c.l.b16 %v2314
        %v2326 = vunpack.c.h.b16 %v2314
        %v2327 = vpack.c.b16 %v2321, %v2319
        %v2328 = vpack.c.b16 %v2322, %v2320
        %v2329 = vpack.c.b16 %v2325, %v2323
        %v2330 = vpack.c.b16 %v2326, %v2324
        %v2334 = vsel %vm713, %v2328, 0
        %v2337 = vsel %vm713, %v2330, 0
        %2339 = vmatprep.subr.bf16.mxu0 0
        %2340 = vmatpush1.bf16.msra.mxu0 %v689
        %2341 = vmatprep.subr.bf16.mxu0 0
        %2342 = vmatpush1.bf16.msra.mxu0 %v688
        %2343 = vmatprep.subr.bf16.mxu0 0
        %2344 = vmatpush1.bf16.msra.mxu0 %v687
        %2345 = vmatprep.subr.bf16.mxu0 0
        %2346 = vmatpush1.bf16.msra.mxu0 %v686
        %2347 = vmatprep.subr.bf16.mxu0 0
        %2348 = vmatpush1.bf16.msra.mxu0 %v685
        %2349 = vmatprep.subr.bf16.mxu0 0
        %2350 = vmatpush1.bf16.msra.mxu0 %v684
        %2351 = vmatprep.subr.bf16.mxu0 0
        %2352 = vmatpush1.bf16.msra.mxu0 %v683
        %2353 = vmatprep.subr.bf16.mxu0 0
        %2354 = vmatpush1.bf16.msra.mxu0 %v682
        %2355 = vmatprep.subr.bf16.mxu0 0
        %2356 = vmatpush2.bf16.msra.mxu0 0
        %2357 = vmatprep.subr.bf16.mxu0 0
        %2358 = vmatpush2.bf16.msra.mxu0 0
        %2359 = vmatprep.subr.bf16.mxu0 0
        %2360 = vmatpush2.bf16.msra.mxu0 0
        %2361 = vmatprep.subr.bf16.mxu0 0
        %2362 = vmatpush2.bf16.msra.mxu0 0
        %2363 = vmatprep.subr.bf16.mxu0 0
        %2364 = vmatpush2.bf16.msra.mxu0 0
        %2365 = vmatprep.subr.bf16.mxu0 0
        %2366 = vmatpush2.bf16.msra.mxu0 0
        %2367 = vmatprep.subr.bf16.mxu0 0
        %2368 = vmatpush2.bf16.msra.mxu0 0
        %2369 = vmatprep.subr.bf16.mxu0 0
        %2370 = vmatpush2.bf16.msra.mxu0 %v690
        %2371 = vmatprep.mubr.bf16.mxu0 %v2334
        %2372 = vmatmul.mubr.bf16.gmra.mxu0 %v2327
        %v2373 = vpop.f32.mrf.mxu0
        %v2374 = vadd.f32 0.0, %v2373
        %v2375 = vpop.f32.mrf.mxu0
        %v2376 = vpop.f32.mrf.mxu0
        %v2377 = vadd.f32 0.0, %v2376
        %v2378 = vpop.f32.mrf.mxu0
        %2379 = vmatprep.mubr.bf16.mxu0 %v2337
        %2380 = vmatmul.mubr.bf16.gmra.mxu0 %v2329
        %v2381 = vpop.f32.mrf.mxu0
        %v2382 = vadd.f32 0.0, %v2381
        %v2383 = vpop.f32.mrf.mxu0
        %v2384 = vpop.f32.mrf.mxu0
        %v2385 = vadd.f32 0.0, %v2384
        %v2386 = vpop.f32.mrf.mxu0
        %2387 = vdwg.mxu0
        %v2388 = vpack.c.bf16 %v2377, %v2374
        %v2389 = vpack.c.bf16 %v2385, %v2382
        %s2390 = scalar_lea.vmem %s4, 88
        %v2391 = vld [vmem:[%s2390] sm:$0xf]
        %v2392 = vld [vmem:[%s2390 + $0x4] sm:$0xf]
        %v2395 = vunpack.c.l.b16 %v2391
        %v2396 = vunpack.c.l.b16 %v2392
        %v2397 = vpack.c.b16 %v2396, %v2395
        %v2400 = vsel %vm713, %v2388, 0
        %v2403 = vsel %vm713, %v2389, 0
        %2405 = vmatprep.subr.bf16.mxu0 0
        %2406 = vmatpush1.bf16.msra.mxu0 0
        %2407 = vmatprep.subr.bf16.mxu0 0
        %2408 = vmatpush1.bf16.msra.mxu0 0
        %2409 = vmatprep.subr.bf16.mxu0 0
        %2410 = vmatpush1.bf16.msra.mxu0 0
        %2411 = vmatprep.subr.bf16.mxu0 0
        %2412 = vmatpush1.bf16.msra.mxu0 0
        %2413 = vmatprep.subr.bf16.mxu0 0
        %2414 = vmatpush1.bf16.msra.mxu0 0
        %2415 = vmatprep.subr.bf16.mxu0 0
        %2416 = vmatpush1.bf16.msra.mxu0 0
        %2417 = vmatprep.subr.bf16.mxu0 0
        %2418 = vmatpush1.bf16.msra.mxu0 0
        %2419 = vmatprep.subr.bf16.mxu0 0
        %2420 = vmatpush1.bf16.msra.mxu0 %v2397
        %2421 = vmatprep.subr.bf16.mxu0 0
        %2422 = vmatpush2.bf16.msra.mxu0 0
        %2423 = vmatprep.subr.bf16.mxu0 0
        %2424 = vmatpush2.bf16.msra.mxu0 0
        %2425 = vmatprep.subr.bf16.mxu0 0
        %2426 = vmatpush2.bf16.msra.mxu0 0
        %2427 = vmatprep.subr.bf16.mxu0 0
        %2428 = vmatpush2.bf16.msra.mxu0 0
        %2429 = vmatprep.subr.bf16.mxu0 0
        %2430 = vmatpush2.bf16.msra.mxu0 0
        %2431 = vmatprep.subr.bf16.mxu0 0
        %2432 = vmatpush2.bf16.msra.mxu0 0
        %2433 = vmatprep.subr.bf16.mxu0 0
        %2434 = vmatpush2.bf16.msra.mxu0 0
        %2435 = vmatprep.subr.bf16.mxu0 0
        %2436 = vmatpush2.bf16.msra.mxu0 0
        %2437 = vmatprep.mubr.bf16.mxu0 0
        %2438 = vmatmul.mubr.bf16.gmra.mxu0 %v2400
        %v2439 = vpop.f32.mrf.mxu0
        %v2440 = vadd.f32 0.0, %v2439
        %v2441 = vpop.f32.mrf.mxu0
        %v2442 = vpop.f32.mrf.mxu0
        %v2443 = vadd.f32 0.0, %v2442
        %v2444 = vpop.f32.mrf.mxu0
        %2445 = vmatprep.mubr.bf16.mxu0 0
        %2446 = vmatmul.mubr.bf16.gmra.mxu0 %v2403
        %v2447 = vpop.f32.mrf.mxu0
        %v2448 = vadd.f32 0.0, %v2447
        %v2449 = vpop.f32.mrf.mxu0
        %v2450 = vpop.f32.mrf.mxu0
        %v2451 = vadd.f32 0.0, %v2450
        %v2452 = vpop.f32.mrf.mxu0
        %2453 = vdwg.mxu0
        %v2454 = vadd.f32 %v2306, %v2440
        %v2455 = vadd.f32 %v2307, %v2443
        %v2456 = vadd.f32 %v2308, %v2448
        %v2457 = vadd.f32 %v2309, %v2451
        %s2458 = scalar_lea.vmem %s3, 384
        %v2459 = vld [vmem:[%s2458] sm:$0xff]
        %v2460 = vld [vmem:[%s2458 + $0x8] sm:$0xff]
        %v2461 = vld [vmem:[%s2458 + $0x10] sm:$0xff]
        %v2462 = vld [vmem:[%s2458 + $0x18] sm:$0x11]
        %v2467 = vunpack.c.l.b16 %v2459
        %v2468 = vunpack.c.h.b16 %v2459
        %v2469 = vunpack.c.l.b16 %v2460
        %v2470 = vunpack.c.h.b16 %v2460
        %v2471 = vunpack.c.l.b16 %v2461
        %v2472 = vunpack.c.h.b16 %v2461
        %v2473 = vunpack.c.l.b16 %v2462
        %v2474 = vunpack.c.h.b16 %v2462
        %v2475 = vpack.c.b16 %v2469, %v2467
        %v2476 = vpack.c.b16 %v2470, %v2468
        %v2477 = vpack.c.b16 %v2473, %v2471
        %v2478 = vpack.c.b16 %v2474, %v2472
        %v2482 = vsel %vm713, %v2476, 0
        %v2485 = vsel %vm713, %v2478, 0
        %2487 = vmatprep.subr.bf16.mxu0 0
        %2488 = vmatpush1.bf16.msra.mxu0 %v689
        %2489 = vmatprep.subr.bf16.mxu0 0
        %2490 = vmatpush1.bf16.msra.mxu0 %v688
        %2491 = vmatprep.subr.bf16.mxu0 0
        %2492 = vmatpush1.bf16.msra.mxu0 %v687
        %2493 = vmatprep.subr.bf16.mxu0 0
        %2494 = vmatpush1.bf16.msra.mxu0 %v686
        %2495 = vmatprep.subr.bf16.mxu0 0
        %2496 = vmatpush1.bf16.msra.mxu0 %v685
        %2497 = vmatprep.subr.bf16.mxu0 0
        %2498 = vmatpush1.bf16.msra.mxu0 %v684
        %2499 = vmatprep.subr.bf16.mxu0 0
        %2500 = vmatpush1.bf16.msra.mxu0 %v683
        %2501 = vmatprep.subr.bf16.mxu0 0
        %2502 = vmatpush1.bf16.msra.mxu0 %v682
        %2503 = vmatprep.subr.bf16.mxu0 0
        %2504 = vmatpush2.bf16.msra.mxu0 0
        %2505 = vmatprep.subr.bf16.mxu0 0
        %2506 = vmatpush2.bf16.msra.mxu0 0
        %2507 = vmatprep.subr.bf16.mxu0 0
        %2508 = vmatpush2.bf16.msra.mxu0 0
        %2509 = vmatprep.subr.bf16.mxu0 0
        %2510 = vmatpush2.bf16.msra.mxu0 0
        %2511 = vmatprep.subr.bf16.mxu0 0
        %2512 = vmatpush2.bf16.msra.mxu0 0
        %2513 = vmatprep.subr.bf16.mxu0 0
        %2514 = vmatpush2.bf16.msra.mxu0 0
        %2515 = vmatprep.subr.bf16.mxu0 0
        %2516 = vmatpush2.bf16.msra.mxu0 0
        %2517 = vmatprep.subr.bf16.mxu0 0
        %2518 = vmatpush2.bf16.msra.mxu0 %v690
        %2519 = vmatprep.mubr.bf16.mxu0 %v2482
        %2520 = vmatmul.mubr.bf16.gmra.mxu0 %v2475
        %v2521 = vpop.f32.mrf.mxu0
        %v2522 = vadd.f32 0.0, %v2521
        %v2523 = vpop.f32.mrf.mxu0
        %v2524 = vpop.f32.mrf.mxu0
        %v2525 = vadd.f32 0.0, %v2524
        %v2526 = vpop.f32.mrf.mxu0
        %2527 = vmatprep.mubr.bf16.mxu0 %v2485
        %2528 = vmatmul.mubr.bf16.gmra.mxu0 %v2477
        %v2529 = vpop.f32.mrf.mxu0
        %v2530 = vadd.f32 0.0, %v2529
        %v2531 = vpop.f32.mrf.mxu0
        %v2532 = vpop.f32.mrf.mxu0
        %v2533 = vadd.f32 0.0, %v2532
        %v2534 = vpop.f32.mrf.mxu0
        %2535 = vdwg.mxu0
        %v2536 = vpack.c.bf16 %v2525, %v2522
        %v2537 = vpack.c.bf16 %v2533, %v2530
        %s2538 = scalar_lea.vmem %s4, 96
        %v2539 = vld [vmem:[%s2538] sm:$0xf]
        %v2540 = vld [vmem:[%s2538 + $0x4] sm:$0xf]
        %v2543 = vunpack.c.l.b16 %v2539
        %v2544 = vunpack.c.l.b16 %v2540
        %v2545 = vpack.c.b16 %v2544, %v2543
        %v2548 = vsel %vm713, %v2536, 0
        %v2551 = vsel %vm713, %v2537, 0
        %2553 = vmatprep.subr.bf16.mxu0 0
        %2554 = vmatpush1.bf16.msra.mxu0 0
        %2555 = vmatprep.subr.bf16.mxu0 0
        %2556 = vmatpush1.bf16.msra.mxu0 0
        %2557 = vmatprep.subr.bf16.mxu0 0
        %2558 = vmatpush1.bf16.msra.mxu0 0
        %2559 = vmatprep.subr.bf16.mxu0 0
        %2560 = vmatpush1.bf16.msra.mxu0 0
        %2561 = vmatprep.subr.bf16.mxu0 0
        %2562 = vmatpush1.bf16.msra.mxu0 0
        %2563 = vmatprep.subr.bf16.mxu0 0
        %2564 = vmatpush1.bf16.msra.mxu0 0
        %2565 = vmatprep.subr.bf16.mxu0 0
        %2566 = vmatpush1.bf16.msra.mxu0 0
        %2567 = vmatprep.subr.bf16.mxu0 0
        %2568 = vmatpush1.bf16.msra.mxu0 %v2545
        %2569 = vmatprep.subr.bf16.mxu0 0
        %2570 = vmatpush2.bf16.msra.mxu0 0
        %2571 = vmatprep.subr.bf16.mxu0 0
        %2572 = vmatpush2.bf16.msra.mxu0 0
        %2573 = vmatprep.subr.bf16.mxu0 0
        %2574 = vmatpush2.bf16.msra.mxu0 0
        %2575 = vmatprep.subr.bf16.mxu0 0
        %2576 = vmatpush2.bf16.msra.mxu0 0
        %2577 = vmatprep.subr.bf16.mxu0 0
        %2578 = vmatpush2.bf16.msra.mxu0 0
        %2579 = vmatprep.subr.bf16.mxu0 0
        %2580 = vmatpush2.bf16.msra.mxu0 0
        %2581 = vmatprep.subr.bf16.mxu0 0
        %2582 = vmatpush2.bf16.msra.mxu0 0
        %2583 = vmatprep.subr.bf16.mxu0 0
        %2584 = vmatpush2.bf16.msra.mxu0 0
        %2585 = vmatprep.mubr.bf16.mxu0 0
        %2586 = vmatmul.mubr.bf16.gmra.mxu0 %v2548
        %v2587 = vpop.f32.mrf.mxu0
        %v2588 = vadd.f32 0.0, %v2587
        %v2589 = vpop.f32.mrf.mxu0
        %v2590 = vpop.f32.mrf.mxu0
        %v2591 = vadd.f32 0.0, %v2590
        %v2592 = vpop.f32.mrf.mxu0
        %2593 = vmatprep.mubr.bf16.mxu0 0
        %2594 = vmatmul.mubr.bf16.gmra.mxu0 %v2551
        %v2595 = vpop.f32.mrf.mxu0
        %v2596 = vadd.f32 0.0, %v2595
        %v2597 = vpop.f32.mrf.mxu0
        %v2598 = vpop.f32.mrf.mxu0
        %v2599 = vadd.f32 0.0, %v2598
        %v2600 = vpop.f32.mrf.mxu0
        %2601 = vdwg.mxu0
        %v2602 = vadd.f32 %v2454, %v2588
        %v2603 = vadd.f32 %v2455, %v2591
        %v2604 = vadd.f32 %v2456, %v2596
        %v2605 = vadd.f32 %v2457, %v2599
        %s2606 = scalar_lea.vmem %s3, 416
        %v2607 = vld [vmem:[%s2606] sm:$0xff]
        %v2608 = vld [vmem:[%s2606 + $0x8] sm:$0xff]
        %v2609 = vld [vmem:[%s2606 + $0x10] sm:$0xff]
        %v2610 = vld [vmem:[%s2606 + $0x18] sm:$0x11]
        %v2615 = vunpack.c.l.b16 %v2607
        %v2616 = vunpack.c.h.b16 %v2607
        %v2617 = vunpack.c.l.b16 %v2608
        %v2618 = vunpack.c.h.b16 %v2608
        %v2619 = vunpack.c.l.b16 %v2609
        %v2620 = vunpack.c.h.b16 %v2609
        %v2621 = vunpack.c.l.b16 %v2610
        %v2622 = vunpack.c.h.b16 %v2610
        %v2623 = vpack.c.b16 %v2617, %v2615
        %v2624 = vpack.c.b16 %v2618, %v2616
        %v2625 = vpack.c.b16 %v2621, %v2619
        %v2626 = vpack.c.b16 %v2622, %v2620
        %v2630 = vsel %vm713, %v2624, 0
        %v2633 = vsel %vm713, %v2626, 0
        %2635 = vmatprep.subr.bf16.mxu0 0
        %2636 = vmatpush1.bf16.msra.mxu0 %v689
        %2637 = vmatprep.subr.bf16.mxu0 0
        %2638 = vmatpush1.bf16.msra.mxu0 %v688
        %2639 = vmatprep.subr.bf16.mxu0 0
        %2640 = vmatpush1.bf16.msra.mxu0 %v687
        %2641 = vmatprep.subr.bf16.mxu0 0
        %2642 = vmatpush1.bf16.msra.mxu0 %v686
        %2643 = vmatprep.subr.bf16.mxu0 0
        %2644 = vmatpush1.bf16.msra.mxu0 %v685
        %2645 = vmatprep.subr.bf16.mxu0 0
        %2646 = vmatpush1.bf16.msra.mxu0 %v684
        %2647 = vmatprep.subr.bf16.mxu0 0
        %2648 = vmatpush1.bf16.msra.mxu0 %v683
        %2649 = vmatprep.subr.bf16.mxu0 0
        %2650 = vmatpush1.bf16.msra.mxu0 %v682
        %2651 = vmatprep.subr.bf16.mxu0 0
        %2652 = vmatpush2.bf16.msra.mxu0 0
        %2653 = vmatprep.subr.bf16.mxu0 0
        %2654 = vmatpush2.bf16.msra.mxu0 0
        %2655 = vmatprep.subr.bf16.mxu0 0
        %2656 = vmatpush2.bf16.msra.mxu0 0
        %2657 = vmatprep.subr.bf16.mxu0 0
        %2658 = vmatpush2.bf16.msra.mxu0 0
        %2659 = vmatprep.subr.bf16.mxu0 0
        %2660 = vmatpush2.bf16.msra.mxu0 0
        %2661 = vmatprep.subr.bf16.mxu0 0
        %2662 = vmatpush2.bf16.msra.mxu0 0
        %2663 = vmatprep.subr.bf16.mxu0 0
        %2664 = vmatpush2.bf16.msra.mxu0 0
        %2665 = vmatprep.subr.bf16.mxu0 0
        %2666 = vmatpush2.bf16.msra.mxu0 %v690
        %2667 = vmatprep.mubr.bf16.mxu0 %v2630
        %2668 = vmatmul.mubr.bf16.gmra.mxu0 %v2623
        %v2669 = vpop.f32.mrf.mxu0
        %v2670 = vadd.f32 0.0, %v2669
        %v2671 = vpop.f32.mrf.mxu0
        %v2672 = vpop.f32.mrf.mxu0
        %v2673 = vadd.f32 0.0, %v2672
        %v2674 = vpop.f32.mrf.mxu0
        %2675 = vmatprep.mubr.bf16.mxu0 %v2633
        %2676 = vmatmul.mubr.bf16.gmra.mxu0 %v2625
        %v2677 = vpop.f32.mrf.mxu0
        %v2678 = vadd.f32 0.0, %v2677
        %v2679 = vpop.f32.mrf.mxu0
        %v2680 = vpop.f32.mrf.mxu0
        %v2681 = vadd.f32 0.0, %v2680
        %v2682 = vpop.f32.mrf.mxu0
        %2683 = vdwg.mxu0
        %v2684 = vpack.c.bf16 %v2673, %v2670
        %v2685 = vpack.c.bf16 %v2681, %v2678
        %s2686 = scalar_lea.vmem %s4, 104
        %v2687 = vld [vmem:[%s2686] sm:$0xf]
        %v2688 = vld [vmem:[%s2686 + $0x4] sm:$0xf]
        %v2691 = vunpack.c.l.b16 %v2687
        %v2692 = vunpack.c.l.b16 %v2688
        %v2693 = vpack.c.b16 %v2692, %v2691
        %v2696 = vsel %vm713, %v2684, 0
        %v2699 = vsel %vm713, %v2685, 0
        %2701 = vmatprep.subr.bf16.mxu0 0
        %2702 = vmatpush1.bf16.msra.mxu0 0
        %2703 = vmatprep.subr.bf16.mxu0 0
        %2704 = vmatpush1.bf16.msra.mxu0 0
        %2705 = vmatprep.subr.bf16.mxu0 0
        %2706 = vmatpush1.bf16.msra.mxu0 0
        %2707 = vmatprep.subr.bf16.mxu0 0
        %2708 = vmatpush1.bf16.msra.mxu0 0
        %2709 = vmatprep.subr.bf16.mxu0 0
        %2710 = vmatpush1.bf16.msra.mxu0 0
        %2711 = vmatprep.subr.bf16.mxu0 0
        %2712 = vmatpush1.bf16.msra.mxu0 0
        %2713 = vmatprep.subr.bf16.mxu0 0
        %2714 = vmatpush1.bf16.msra.mxu0 0
        %2715 = vmatprep.subr.bf16.mxu0 0
        %2716 = vmatpush1.bf16.msra.mxu0 %v2693
        %2717 = vmatprep.subr.bf16.mxu0 0
        %2718 = vmatpush2.bf16.msra.mxu0 0
        %2719 = vmatprep.subr.bf16.mxu0 0
        %2720 = vmatpush2.bf16.msra.mxu0 0
        %2721 = vmatprep.subr.bf16.mxu0 0
        %2722 = vmatpush2.bf16.msra.mxu0 0
        %2723 = vmatprep.subr.bf16.mxu0 0
        %2724 = vmatpush2.bf16.msra.mxu0 0
        %2725 = vmatprep.subr.bf16.mxu0 0
        %2726 = vmatpush2.bf16.msra.mxu0 0
        %2727 = vmatprep.subr.bf16.mxu0 0
        %2728 = vmatpush2.bf16.msra.mxu0 0
        %2729 = vmatprep.subr.bf16.mxu0 0
        %2730 = vmatpush2.bf16.msra.mxu0 0
        %2731 = vmatprep.subr.bf16.mxu0 0
        %2732 = vmatpush2.bf16.msra.mxu0 0
        %2733 = vmatprep.mubr.bf16.mxu0 0
        %2734 = vmatmul.mubr.bf16.gmra.mxu0 %v2696
        %v2735 = vpop.f32.mrf.mxu0
        %v2736 = vadd.f32 0.0, %v2735
        %v2737 = vpop.f32.mrf.mxu0
        %v2738 = vpop.f32.mrf.mxu0
        %v2739 = vadd.f32 0.0, %v2738
        %v2740 = vpop.f32.mrf.mxu0
        %2741 = vmatprep.mubr.bf16.mxu0 0
        %2742 = vmatmul.mubr.bf16.gmra.mxu0 %v2699
        %v2743 = vpop.f32.mrf.mxu0
        %v2744 = vadd.f32 0.0, %v2743
        %v2745 = vpop.f32.mrf.mxu0
        %v2746 = vpop.f32.mrf.mxu0
        %v2747 = vadd.f32 0.0, %v2746
        %v2748 = vpop.f32.mrf.mxu0
        %2749 = vdwg.mxu0
        %v2750 = vadd.f32 %v2602, %v2736
        %v2751 = vadd.f32 %v2603, %v2739
        %v2752 = vadd.f32 %v2604, %v2744
        %v2753 = vadd.f32 %v2605, %v2747
        %s2754 = scalar_lea.vmem %s3, 448
        %v2755 = vld [vmem:[%s2754] sm:$0xff]
        %v2756 = vld [vmem:[%s2754 + $0x8] sm:$0xff]
        %v2757 = vld [vmem:[%s2754 + $0x10] sm:$0xff]
        %v2758 = vld [vmem:[%s2754 + $0x18] sm:$0x11]
        %v2763 = vunpack.c.l.b16 %v2755
        %v2764 = vunpack.c.h.b16 %v2755
        %v2765 = vunpack.c.l.b16 %v2756
        %v2766 = vunpack.c.h.b16 %v2756
        %v2767 = vunpack.c.l.b16 %v2757
        %v2768 = vunpack.c.h.b16 %v2757
        %v2769 = vunpack.c.l.b16 %v2758
        %v2770 = vunpack.c.h.b16 %v2758
        %v2771 = vpack.c.b16 %v2765, %v2763
        %v2772 = vpack.c.b16 %v2766, %v2764
        %v2773 = vpack.c.b16 %v2769, %v2767
        %v2774 = vpack.c.b16 %v2770, %v2768
        %v2778 = vsel %vm713, %v2772, 0
        %v2781 = vsel %vm713, %v2774, 0
        %2783 = vmatprep.subr.bf16.mxu0 0
        %2784 = vmatpush1.bf16.msra.mxu0 %v689
        %2785 = vmatprep.subr.bf16.mxu0 0
        %2786 = vmatpush1.bf16.msra.mxu0 %v688
        %2787 = vmatprep.subr.bf16.mxu0 0
        %2788 = vmatpush1.bf16.msra.mxu0 %v687
        %2789 = vmatprep.subr.bf16.mxu0 0
        %2790 = vmatpush1.bf16.msra.mxu0 %v686
        %2791 = vmatprep.subr.bf16.mxu0 0
        %2792 = vmatpush1.bf16.msra.mxu0 %v685
        %2793 = vmatprep.subr.bf16.mxu0 0
        %2794 = vmatpush1.bf16.msra.mxu0 %v684
        %2795 = vmatprep.subr.bf16.mxu0 0
        %2796 = vmatpush1.bf16.msra.mxu0 %v683
        %2797 = vmatprep.subr.bf16.mxu0 0
        %2798 = vmatpush1.bf16.msra.mxu0 %v682
        %2799 = vmatprep.subr.bf16.mxu0 0
        %2800 = vmatpush2.bf16.msra.mxu0 0
        %2801 = vmatprep.subr.bf16.mxu0 0
        %2802 = vmatpush2.bf16.msra.mxu0 0
        %2803 = vmatprep.subr.bf16.mxu0 0
        %2804 = vmatpush2.bf16.msra.mxu0 0
        %2805 = vmatprep.subr.bf16.mxu0 0
        %2806 = vmatpush2.bf16.msra.mxu0 0
        %2807 = vmatprep.subr.bf16.mxu0 0
        %2808 = vmatpush2.bf16.msra.mxu0 0
        %2809 = vmatprep.subr.bf16.mxu0 0
        %2810 = vmatpush2.bf16.msra.mxu0 0
        %2811 = vmatprep.subr.bf16.mxu0 0
        %2812 = vmatpush2.bf16.msra.mxu0 0
        %2813 = vmatprep.subr.bf16.mxu0 0
        %2814 = vmatpush2.bf16.msra.mxu0 %v690
        %2815 = vmatprep.mubr.bf16.mxu0 %v2778
        %2816 = vmatmul.mubr.bf16.gmra.mxu0 %v2771
        %v2817 = vpop.f32.mrf.mxu0
        %v2818 = vadd.f32 0.0, %v2817
        %v2819 = vpop.f32.mrf.mxu0
        %v2820 = vpop.f32.mrf.mxu0
        %v2821 = vadd.f32 0.0, %v2820
        %v2822 = vpop.f32.mrf.mxu0
        %2823 = vmatprep.mubr.bf16.mxu0 %v2781
        %2824 = vmatmul.mubr.bf16.gmra.mxu0 %v2773
        %v2825 = vpop.f32.mrf.mxu0
        %v2826 = vadd.f32 0.0, %v2825
        %v2827 = vpop.f32.mrf.mxu0
        %v2828 = vpop.f32.mrf.mxu0
        %v2829 = vadd.f32 0.0, %v2828
        %v2830 = vpop.f32.mrf.mxu0
        %2831 = vdwg.mxu0
        %v2832 = vpack.c.bf16 %v2821, %v2818
        %v2833 = vpack.c.bf16 %v2829, %v2826
        %s2834 = scalar_lea.vmem %s4, 112
        %v2835 = vld [vmem:[%s2834] sm:$0xf]
        %v2836 = vld [vmem:[%s2834 + $0x4] sm:$0xf]
        %v2839 = vunpack.c.l.b16 %v2835
        %v2840 = vunpack.c.l.b16 %v2836
        %v2841 = vpack.c.b16 %v2840, %v2839
        %v2844 = vsel %vm713, %v2832, 0
        %v2847 = vsel %vm713, %v2833, 0
        %2849 = vmatprep.subr.bf16.mxu0 0
        %2850 = vmatpush1.bf16.msra.mxu0 0
        %2851 = vmatprep.subr.bf16.mxu0 0
        %2852 = vmatpush1.bf16.msra.mxu0 0
        %2853 = vmatprep.subr.bf16.mxu0 0
        %2854 = vmatpush1.bf16.msra.mxu0 0
        %2855 = vmatprep.subr.bf16.mxu0 0
        %2856 = vmatpush1.bf16.msra.mxu0 0
        %2857 = vmatprep.subr.bf16.mxu0 0
        %2858 = vmatpush1.bf16.msra.mxu0 0
        %2859 = vmatprep.subr.bf16.mxu0 0
        %2860 = vmatpush1.bf16.msra.mxu0 0
        %2861 = vmatprep.subr.bf16.mxu0 0
        %2862 = vmatpush1.bf16.msra.mxu0 0
        %2863 = vmatprep.subr.bf16.mxu0 0
        %2864 = vmatpush1.bf16.msra.mxu0 %v2841
        %2865 = vmatprep.subr.bf16.mxu0 0
        %2866 = vmatpush2.bf16.msra.mxu0 0
        %2867 = vmatprep.subr.bf16.mxu0 0
        %2868 = vmatpush2.bf16.msra.mxu0 0
        %2869 = vmatprep.subr.bf16.mxu0 0
        %2870 = vmatpush2.bf16.msra.mxu0 0
        %2871 = vmatprep.subr.bf16.mxu0 0
        %2872 = vmatpush2.bf16.msra.mxu0 0
        %2873 = vmatprep.subr.bf16.mxu0 0
        %2874 = vmatpush2.bf16.msra.mxu0 0
        %2875 = vmatprep.subr.bf16.mxu0 0
        %2876 = vmatpush2.bf16.msra.mxu0 0
        %2877 = vmatprep.subr.bf16.mxu0 0
        %2878 = vmatpush2.bf16.msra.mxu0 0
        %2879 = vmatprep.subr.bf16.mxu0 0
        %2880 = vmatpush2.bf16.msra.mxu0 0
        %2881 = vmatprep.mubr.bf16.mxu0 0
        %2882 = vmatmul.mubr.bf16.gmra.mxu0 %v2844
        %v2883 = vpop.f32.mrf.mxu0
        %v2884 = vadd.f32 0.0, %v2883
        %v2885 = vpop.f32.mrf.mxu0
        %v2886 = vpop.f32.mrf.mxu0
        %v2887 = vadd.f32 0.0, %v2886
        %v2888 = vpop.f32.mrf.mxu0
        %2889 = vmatprep.mubr.bf16.mxu0 0
        %2890 = vmatmul.mubr.bf16.gmra.mxu0 %v2847
        %v2891 = vpop.f32.mrf.mxu0
        %v2892 = vadd.f32 0.0, %v2891
        %v2893 = vpop.f32.mrf.mxu0
        %v2894 = vpop.f32.mrf.mxu0
        %v2895 = vadd.f32 0.0, %v2894
        %v2896 = vpop.f32.mrf.mxu0
        %2897 = vdwg.mxu0
        %v2898 = vadd.f32 %v2750, %v2884
        %v2899 = vadd.f32 %v2751, %v2887
        %v2900 = vadd.f32 %v2752, %v2892
        %v2901 = vadd.f32 %v2753, %v2895
        %s2902 = scalar_lea.vmem %s3, 480
        %v2903 = vld [vmem:[%s2902] sm:$0xff]
        %v2904 = vld [vmem:[%s2902 + $0x8] sm:$0xff]
        %v2905 = vld [vmem:[%s2902 + $0x10] sm:$0xff]
        %v2906 = vld [vmem:[%s2902 + $0x18] sm:$0x11]
        %v2911 = vunpack.c.l.b16 %v2903
        %v2912 = vunpack.c.h.b16 %v2903
        %v2913 = vunpack.c.l.b16 %v2904
        %v2914 = vunpack.c.h.b16 %v2904
        %v2915 = vunpack.c.l.b16 %v2905
        %v2916 = vunpack.c.h.b16 %v2905
        %v2917 = vunpack.c.l.b16 %v2906
        %v2918 = vunpack.c.h.b16 %v2906
        %v2919 = vpack.c.b16 %v2913, %v2911
        %v2920 = vpack.c.b16 %v2914, %v2912
        %v2921 = vpack.c.b16 %v2917, %v2915
        %v2922 = vpack.c.b16 %v2918, %v2916
        %v2926 = vsel %vm713, %v2920, 0
        %v2929 = vsel %vm713, %v2922, 0
        %2931 = vmatprep.subr.bf16.mxu0 0
        %2932 = vmatpush1.bf16.msra.mxu0 %v689
        %2933 = vmatprep.subr.bf16.mxu0 0
        %2934 = vmatpush1.bf16.msra.mxu0 %v688
        %2935 = vmatprep.subr.bf16.mxu0 0
        %2936 = vmatpush1.bf16.msra.mxu0 %v687
        %2937 = vmatprep.subr.bf16.mxu0 0
        %2938 = vmatpush1.bf16.msra.mxu0 %v686
        %2939 = vmatprep.subr.bf16.mxu0 0
        %2940 = vmatpush1.bf16.msra.mxu0 %v685
        %2941 = vmatprep.subr.bf16.mxu0 0
        %2942 = vmatpush1.bf16.msra.mxu0 %v684
        %2943 = vmatprep.subr.bf16.mxu0 0
        %2944 = vmatpush1.bf16.msra.mxu0 %v683
        %2945 = vmatprep.subr.bf16.mxu0 0
        %2946 = vmatpush1.bf16.msra.mxu0 %v682
        %2947 = vmatprep.subr.bf16.mxu0 0
        %2948 = vmatpush2.bf16.msra.mxu0 0
        %2949 = vmatprep.subr.bf16.mxu0 0
        %2950 = vmatpush2.bf16.msra.mxu0 0
        %2951 = vmatprep.subr.bf16.mxu0 0
        %2952 = vmatpush2.bf16.msra.mxu0 0
        %2953 = vmatprep.subr.bf16.mxu0 0
        %2954 = vmatpush2.bf16.msra.mxu0 0
        %2955 = vmatprep.subr.bf16.mxu0 0
        %2956 = vmatpush2.bf16.msra.mxu0 0
        %2957 = vmatprep.subr.bf16.mxu0 0
        %2958 = vmatpush2.bf16.msra.mxu0 0
        %2959 = vmatprep.subr.bf16.mxu0 0
        %2960 = vmatpush2.bf16.msra.mxu0 0
        %2961 = vmatprep.subr.bf16.mxu0 0
        %2962 = vmatpush2.bf16.msra.mxu0 %v690
        %2963 = vmatprep.mubr.bf16.mxu0 %v2926
        %2964 = vmatmul.mubr.bf16.gmra.mxu0 %v2919
        %v2965 = vpop.f32.mrf.mxu0
        %v2966 = vadd.f32 0.0, %v2965
        %v2967 = vpop.f32.mrf.mxu0
        %v2968 = vpop.f32.mrf.mxu0
        %v2969 = vadd.f32 0.0, %v2968
        %v2970 = vpop.f32.mrf.mxu0
        %2971 = vmatprep.mubr.bf16.mxu0 %v2929
        %2972 = vmatmul.mubr.bf16.gmra.mxu0 %v2921
        %v2973 = vpop.f32.mrf.mxu0
        %v2974 = vadd.f32 0.0, %v2973
        %v2975 = vpop.f32.mrf.mxu0
        %v2976 = vpop.f32.mrf.mxu0
        %v2977 = vadd.f32 0.0, %v2976
        %v2978 = vpop.f32.mrf.mxu0
        %2979 = vdwg.mxu0
        %v2980 = vpack.c.bf16 %v2969, %v2966
        %v2981 = vpack.c.bf16 %v2977, %v2974
        %s2982 = scalar_lea.vmem %s4, 120
        %v2983 = vld [vmem:[%s2982] sm:$0xf]
        %v2984 = vld [vmem:[%s2982 + $0x4] sm:$0xf]
        %v2987 = vunpack.c.l.b16 %v2983
        %v2988 = vunpack.c.l.b16 %v2984
        %v2989 = vpack.c.b16 %v2988, %v2987
        %v2992 = vsel %vm713, %v2980, 0
        %v2995 = vsel %vm713, %v2981, 0
        %2997 = vmatprep.subr.bf16.mxu0 0
        %2998 = vmatpush1.bf16.msra.mxu0 0
        %2999 = vmatprep.subr.bf16.mxu0 0
        %3000 = vmatpush1.bf16.msra.mxu0 0
        %3001 = vmatprep.subr.bf16.mxu0 0
        %3002 = vmatpush1.bf16.msra.mxu0 0
        %3003 = vmatprep.subr.bf16.mxu0 0
        %3004 = vmatpush1.bf16.msra.mxu0 0
        %3005 = vmatprep.subr.bf16.mxu0 0
        %3006 = vmatpush1.bf16.msra.mxu0 0
        %3007 = vmatprep.subr.bf16.mxu0 0
        %3008 = vmatpush1.bf16.msra.mxu0 0
        %3009 = vmatprep.subr.bf16.mxu0 0
        %3010 = vmatpush1.bf16.msra.mxu0 0
        %3011 = vmatprep.subr.bf16.mxu0 0
        %3012 = vmatpush1.bf16.msra.mxu0 %v2989
        %3013 = vmatprep.subr.bf16.mxu0 0
        %3014 = vmatpush2.bf16.msra.mxu0 0
        %3015 = vmatprep.subr.bf16.mxu0 0
        %3016 = vmatpush2.bf16.msra.mxu0 0
        %3017 = vmatprep.subr.bf16.mxu0 0
        %3018 = vmatpush2.bf16.msra.mxu0 0
        %3019 = vmatprep.subr.bf16.mxu0 0
        %3020 = vmatpush2.bf16.msra.mxu0 0
        %3021 = vmatprep.subr.bf16.mxu0 0
        %3022 = vmatpush2.bf16.msra.mxu0 0
        %3023 = vmatprep.subr.bf16.mxu0 0
        %3024 = vmatpush2.bf16.msra.mxu0 0
        %3025 = vmatprep.subr.bf16.mxu0 0
        %3026 = vmatpush2.bf16.msra.mxu0 0
        %3027 = vmatprep.subr.bf16.mxu0 0
        %3028 = vmatpush2.bf16.msra.mxu0 0
        %3029 = vmatprep.mubr.bf16.mxu0 0
        %3030 = vmatmul.mubr.bf16.gmra.mxu0 %v2992
        %v3031 = vpop.f32.mrf.mxu0
        %v3032 = vadd.f32 0.0, %v3031
        %v3033 = vpop.f32.mrf.mxu0
        %v3034 = vpop.f32.mrf.mxu0
        %v3035 = vadd.f32 0.0, %v3034
        %v3036 = vpop.f32.mrf.mxu0
        %3037 = vmatprep.mubr.bf16.mxu0 0
        %3038 = vmatmul.mubr.bf16.gmra.mxu0 %v2995
        %v3039 = vpop.f32.mrf.mxu0
        %v3040 = vadd.f32 0.0, %v3039
        %v3041 = vpop.f32.mrf.mxu0
        %v3042 = vpop.f32.mrf.mxu0
        %v3043 = vadd.f32 0.0, %v3042
        %v3044 = vpop.f32.mrf.mxu0
        %3045 = vdwg.mxu0
        %v3046 = vadd.f32 %v2898, %v3032
        %v3047 = vadd.f32 %v2899, %v3035
        %v3048 = vadd.f32 %v2900, %v3040
        %v3049 = vadd.f32 %v2901, %v3043
        %v3050 = vld [vmem:[%s5] sm:$0x1]
        %v3052 = vlaneseq
        %v3053 = vshrl.u32 %v3052, 7
        %v3054 = vsub.s32 0, %v3053
        %v3055 = vrot.slane %v3050, %v3054
        %v3057 = vadd.f32 %v3046, %v3055
        %v3058 = vadd.f32 %v3047, %v3055
        %v3059 = vadd.f32 %v3048, %v3055
        %v3060 = vadd.f32 %v3049, %v3055
        %v3061 = vmax.f32 %v3057, 0.0
        %v3062 = vmax.f32 %v3058, 0.0
        %v3063 = vmax.f32 %v3059, 0.0
        %v3064 = vmax.f32 %v3060, 0.0
        %v3065 = vpack.c.bf16 %v3062, %v3061
        %v3066 = vpack.c.bf16 %v3064, %v3063
        %v3067 = vld [vmem:[%s6] sm:$0xf]
        %v3068 = vld [vmem:[%s6 + $0x4] sm:$0x1]
        %v3071 = vunpack.c.l.b16 %v3067
        %v3072 = vunpack.c.l.b16 %v3068
        %v3073 = vpack.c.b16 %v3072, %v3071
        %v3075 = vsel %vm524, %v3073, 0
        %v3078 = vand.u32 %v3066, %v555
        %3080 = vmatprep.subr.bf16.mxu0 0
        %3081 = vmatpush1.bf16.msra.mxu0 0
        %3082 = vmatprep.subr.bf16.mxu0 0
        %3083 = vmatpush1.bf16.msra.mxu0 0
        %3084 = vmatprep.subr.bf16.mxu0 0
        %3085 = vmatpush1.bf16.msra.mxu0 0
        %3086 = vmatprep.subr.bf16.mxu0 0
        %3087 = vmatpush1.bf16.msra.mxu0 0
        %3088 = vmatprep.subr.bf16.mxu0 0
        %3089 = vmatpush1.bf16.msra.mxu0 0
        %3090 = vmatprep.subr.bf16.mxu0 0
        %3091 = vmatpush1.bf16.msra.mxu0 0
        %3092 = vmatprep.subr.bf16.mxu0 0
        %3093 = vmatpush1.bf16.msra.mxu0 %v3078
        %3094 = vmatprep.subr.bf16.mxu0 0
        %3095 = vmatpush1.bf16.msra.mxu0 %v3065
        %3096 = vmatprep.subr.bf16.mxu0 0
        %3097 = vmatpush2.bf16.msra.mxu0 0
        %3098 = vmatprep.subr.bf16.mxu0 0
        %3099 = vmatpush2.bf16.msra.mxu0 0
        %3100 = vmatprep.subr.bf16.mxu0 0
        %3101 = vmatpush2.bf16.msra.mxu0 0
        %3102 = vmatprep.subr.bf16.mxu0 0
        %3103 = vmatpush2.bf16.msra.mxu0 0
        %3104 = vmatprep.subr.bf16.mxu0 0
        %3105 = vmatpush2.bf16.msra.mxu0 0
        %3106 = vmatprep.subr.bf16.mxu0 0
        %3107 = vmatpush2.bf16.msra.mxu0 0
        %3108 = vmatprep.subr.bf16.mxu0 0
        %3109 = vmatpush2.bf16.msra.mxu0 0
        %3110 = vmatprep.subr.bf16.mxu0 0
        %3111 = vmatpush2.bf16.msra.mxu0 0
        %3112 = vmatprep.mubr.bf16.mxu0 0
        %3113 = vmatmul.mubr.bf16.gmra.mxu0 %v3075
        %v3114 = vpop.f32.mrf.mxu0
        %v3115 = vadd.f32 0.0, %v3114
        %v3116 = vpop.f32.mrf.mxu0
        %v3117 = vpop.f32.mrf.mxu0
        %v3118 = vadd.f32 0.0, %v3117
        %v3119 = vpop.f32.mrf.mxu0
        %3120 = vdwg.mxu0
        %v3121 = vpack.c.bf16 %v3118, %v3115
        %v3122 = vld [vmem:[%s7] sm:$0xf]
        %v3123 = vld [vmem:[%s7 + $0x4] sm:$0xf]
        %s3124 = scalar_lea.vmem %s6, 8
        %v3125 = vld [vmem:[%s3124] sm:$0xf]
        %v3126 = vld [vmem:[%s3124 + $0x4] sm:$0x1]
        %v3129 = vunpack.c.l.b16 %v3125
        %v3130 = vunpack.c.l.b16 %v3126
        %v3131 = vpack.c.b16 %v3130, %v3129
        %v3133 = vsel %vm524, %v3131, 0
        %3135 = vmatprep.subr.bf16.mxu0 0
        %3136 = vmatpush1.bf16.msra.mxu0 0
        %3137 = vmatprep.subr.bf16.mxu0 0
        %3138 = vmatpush1.bf16.msra.mxu0 0
        %3139 = vmatprep.subr.bf16.mxu0 0
        %3140 = vmatpush1.bf16.msra.mxu0 0
        %3141 = vmatprep.subr.bf16.mxu0 0
        %3142 = vmatpush1.bf16.msra.mxu0 0
        %3143 = vmatprep.subr.bf16.mxu0 0
        %3144 = vmatpush1.bf16.msra.mxu0 0
        %3145 = vmatprep.subr.bf16.mxu0 0
        %3146 = vmatpush1.bf16.msra.mxu0 0
        %3147 = vmatprep.subr.bf16.mxu0 0
        %3148 = vmatpush1.bf16.msra.mxu0 %v3078
        %3149 = vmatprep.subr.bf16.mxu0 0
        %3150 = vmatpush1.bf16.msra.mxu0 %v3065
        %3151 = vmatprep.subr.bf16.mxu0 0
        %3152 = vmatpush2.bf16.msra.mxu0 0
        %3153 = vmatprep.subr.bf16.mxu0 0
        %3154 = vmatpush2.bf16.msra.mxu0 0
        %3155 = vmatprep.subr.bf16.mxu0 0
        %3156 = vmatpush2.bf16.msra.mxu0 0
        %3157 = vmatprep.subr.bf16.mxu0 0
        %3158 = vmatpush2.bf16.msra.mxu0 0
        %3159 = vmatprep.subr.bf16.mxu0 0
        %3160 = vmatpush2.bf16.msra.mxu0 0
        %3161 = vmatprep.subr.bf16.mxu0 0
        %3162 = vmatpush2.bf16.msra.mxu0 0
        %3163 = vmatprep.subr.bf16.mxu0 0
        %3164 = vmatpush2.bf16.msra.mxu0 0
        %3165 = vmatprep.subr.bf16.mxu0 0
        %3166 = vmatpush2.bf16.msra.mxu0 0
        %3167 = vmatprep.mubr.bf16.mxu0 0
        %3168 = vmatmul.mubr.bf16.gmra.mxu0 %v3133
        %v3169 = vpop.f32.mrf.mxu0
        %v3170 = vadd.f32 0.0, %v3169
        %v3171 = vpop.f32.mrf.mxu0
        %v3172 = vpop.f32.mrf.mxu0
        %v3173 = vadd.f32 0.0, %v3172
        %v3174 = vpop.f32.mrf.mxu0
        %3175 = vdwg.mxu0
        %v3176 = vpack.c.bf16 %v3173, %v3170
        %s3177 = scalar_lea.vmem %s7, 8
        %v3178 = vld [vmem:[%s3177] sm:$0xf]
        %v3179 = vld [vmem:[%s3177 + $0x4] sm:$0xf]
        %v3182 = vunpack.c.l.b16 %v3178
        %v3183 = vunpack.c.l.b16 %v3179
        %v3184 = vpack.c.b16 %v3183, %v3182
        %v3187 = vsel %vm713, %v3176, 0
        %3189 = vmatprep.subr.bf16.mxu0 0
        %3190 = vmatpush1.bf16.msra.mxu0 0
        %3191 = vmatprep.subr.bf16.mxu0 0
        %3192 = vmatpush1.bf16.msra.mxu0 0
        %3193 = vmatprep.subr.bf16.mxu0 0
        %3194 = vmatpush1.bf16.msra.mxu0 0
        %3195 = vmatprep.subr.bf16.mxu0 0
        %3196 = vmatpush1.bf16.msra.mxu0 0
        %3197 = vmatprep.subr.bf16.mxu0 0
        %3198 = vmatpush1.bf16.msra.mxu0 0
        %3199 = vmatprep.subr.bf16.mxu0 0
        %3200 = vmatpush1.bf16.msra.mxu0 0
        %3201 = vmatprep.subr.bf16.mxu0 0
        %3202 = vmatpush1.bf16.msra.mxu0 0
        %3203 = vmatprep.subr.bf16.mxu0 0
        %3204 = vmatpush1.bf16.msra.mxu0 %v3184
        %3205 = vmatprep.subr.bf16.mxu0 0
        %3206 = vmatpush2.bf16.msra.mxu0 0
        %3207 = vmatprep.subr.bf16.mxu0 0
        %3208 = vmatpush2.bf16.msra.mxu0 0
        %3209 = vmatprep.subr.bf16.mxu0 0
        %3210 = vmatpush2.bf16.msra.mxu0 0
        %3211 = vmatprep.subr.bf16.mxu0 0
        %3212 = vmatpush2.bf16.msra.mxu0 0
        %3213 = vmatprep.subr.bf16.mxu0 0
        %3214 = vmatpush2.bf16.msra.mxu0 0
        %3215 = vmatprep.subr.bf16.mxu0 0
        %3216 = vmatpush2.bf16.msra.mxu0 0
        %3217 = vmatprep.subr.bf16.mxu0 0
        %3218 = vmatpush2.bf16.msra.mxu0 0
        %3219 = vmatprep.subr.bf16.mxu0 0
        %3220 = vmatpush2.bf16.msra.mxu0 0
        %3221 = vmatprep.mubr.bf16.mxu0 0
        %3222 = vmatmul.mubr.bf16.gmra.mxu0 %v3187
        %v3223 = vpop.f32.mrf.mxu0
        %v3224 = vadd.f32 0.0, %v3223
        %v3225 = vpop.f32.mrf.mxu0
        %v3226 = vpop.f32.mrf.mxu0
        %v3227 = vadd.f32 0.0, %v3226
        %v3228 = vpop.f32.mrf.mxu0
        %3229 = vdwg.mxu0
        %v3232 = vunpack.c.l.b16 %v3122
        %v3233 = vunpack.c.l.b16 %v3123
        %v3234 = vpack.c.b16 %v3233, %v3232
        %v3237 = vsel %vm713, %v3121, 0
        %3239 = vmatprep.subr.bf16.mxu0 0
        %3240 = vmatpush1.bf16.msra.mxu0 0
        %3241 = vmatprep.subr.bf16.mxu0 0
        %3242 = vmatpush1.bf16.msra.mxu0 0
        %3243 = vmatprep.subr.bf16.mxu0 0
        %3244 = vmatpush1.bf16.msra.mxu0 0
        %3245 = vmatprep.subr.bf16.mxu0 0
        %3246 = vmatpush1.bf16.msra.mxu0 0
        %3247 = vmatprep.subr.bf16.mxu0 0
        %3248 = vmatpush1.bf16.msra.mxu0 0
        %3249 = vmatprep.subr.bf16.mxu0 0
        %3250 = vmatpush1.bf16.msra.mxu0 0
        %3251 = vmatprep.subr.bf16.mxu0 0
        %3252 = vmatpush1.bf16.msra.mxu0 0
        %3253 = vmatprep.subr.bf16.mxu0 0
        %3254 = vmatpush1.bf16.msra.mxu0 %v3234
        %3255 = vmatprep.subr.bf16.mxu0 0
        %3256 = vmatpush2.bf16.msra.mxu0 0
        %3257 = vmatprep.subr.bf16.mxu0 0
        %3258 = vmatpush2.bf16.msra.mxu0 0
        %3259 = vmatprep.subr.bf16.mxu0 0
        %3260 = vmatpush2.bf16.msra.mxu0 0
        %3261 = vmatprep.subr.bf16.mxu0 0
        %3262 = vmatpush2.bf16.msra.mxu0 0
        %3263 = vmatprep.subr.bf16.mxu0 0
        %3264 = vmatpush2.bf16.msra.mxu0 0
        %3265 = vmatprep.subr.bf16.mxu0 0
        %3266 = vmatpush2.bf16.msra.mxu0 0
        %3267 = vmatprep.subr.bf16.mxu0 0
        %3268 = vmatpush2.bf16.msra.mxu0 0
        %3269 = vmatprep.subr.bf16.mxu0 0
        %3270 = vmatpush2.bf16.msra.mxu0 0
        %3271 = vmatprep.mubr.bf16.mxu0 0
        %3272 = vmatmul.mubr.bf16.gmra.mxu0 %v3237
        %v3273 = vpop.f32.mrf.mxu0
        %v3274 = vadd.f32 %v3224, %v3273
        %v3275 = vpop.f32.mrf.mxu0
        %v3276 = vpop.f32.mrf.mxu0
        %v3277 = vadd.f32 %v3227, %v3276
        %v3278 = vpop.f32.mrf.mxu0
        %3279 = vdwg.mxu0
        %s3280 = scalar_lea.vmem %s6, 16
        %v3281 = vld [vmem:[%s3280] sm:$0xf]
        %v3282 = vld [vmem:[%s3280 + $0x4] sm:$0x1]
        %v3285 = vunpack.c.l.b16 %v3281
        %v3286 = vunpack.c.l.b16 %v3282
        %v3287 = vpack.c.b16 %v3286, %v3285
        %v3289 = vsel %vm524, %v3287, 0
        %3291 = vmatprep.subr.bf16.mxu0 0
        %3292 = vmatpush1.bf16.msra.mxu0 0
        %3293 = vmatprep.subr.bf16.mxu0 0
        %3294 = vmatpush1.bf16.msra.mxu0 0
        %3295 = vmatprep.subr.bf16.mxu0 0
        %3296 = vmatpush1.bf16.msra.mxu0 0
        %3297 = vmatprep.subr.bf16.mxu0 0
        %3298 = vmatpush1.bf16.msra.mxu0 0
        %3299 = vmatprep.subr.bf16.mxu0 0
        %3300 = vmatpush1.bf16.msra.mxu0 0
        %3301 = vmatprep.subr.bf16.mxu0 0
        %3302 = vmatpush1.bf16.msra.mxu0 0
        %3303 = vmatprep.subr.bf16.mxu0 0
        %3304 = vmatpush1.bf16.msra.mxu0 %v3078
        %3305 = vmatprep.subr.bf16.mxu0 0
        %3306 = vmatpush1.bf16.msra.mxu0 %v3065
        %3307 = vmatprep.subr.bf16.mxu0 0
        %3308 = vmatpush2.bf16.msra.mxu0 0
        %3309 = vmatprep.subr.bf16.mxu0 0
        %3310 = vmatpush2.bf16.msra.mxu0 0
        %3311 = vmatprep.subr.bf16.mxu0 0
        %3312 = vmatpush2.bf16.msra.mxu0 0
        %3313 = vmatprep.subr.bf16.mxu0 0
        %3314 = vmatpush2.bf16.msra.mxu0 0
        %3315 = vmatprep.subr.bf16.mxu0 0
        %3316 = vmatpush2.bf16.msra.mxu0 0
        %3317 = vmatprep.subr.bf16.mxu0 0
        %3318 = vmatpush2.bf16.msra.mxu0 0
        %3319 = vmatprep.subr.bf16.mxu0 0
        %3320 = vmatpush2.bf16.msra.mxu0 0
        %3321 = vmatprep.subr.bf16.mxu0 0
        %3322 = vmatpush2.bf16.msra.mxu0 0
        %3323 = vmatprep.mubr.bf16.mxu0 0
        %3324 = vmatmul.mubr.bf16.gmra.mxu0 %v3289
        %v3325 = vpop.f32.mrf.mxu0
        %v3326 = vadd.f32 0.0, %v3325
        %v3327 = vpop.f32.mrf.mxu0
        %v3328 = vpop.f32.mrf.mxu0
        %v3329 = vadd.f32 0.0, %v3328
        %v3330 = vpop.f32.mrf.mxu0
        %3331 = vdwg.mxu0
        %v3332 = vpack.c.bf16 %v3329, %v3326
        %s3333 = scalar_lea.vmem %s7, 16
        %v3334 = vld [vmem:[%s3333] sm:$0xf]
        %v3335 = vld [vmem:[%s3333 + $0x4] sm:$0xf]
        %v3338 = vunpack.c.l.b16 %v3334
        %v3339 = vunpack.c.l.b16 %v3335
        %v3340 = vpack.c.b16 %v3339, %v3338
        %v3343 = vsel %vm713, %v3332, 0
        %3345 = vmatprep.subr.bf16.mxu0 0
        %3346 = vmatpush1.bf16.msra.mxu0 0
        %3347 = vmatprep.subr.bf16.mxu0 0
        %3348 = vmatpush1.bf16.msra.mxu0 0
        %3349 = vmatprep.subr.bf16.mxu0 0
        %3350 = vmatpush1.bf16.msra.mxu0 0
        %3351 = vmatprep.subr.bf16.mxu0 0
        %3352 = vmatpush1.bf16.msra.mxu0 0
        %3353 = vmatprep.subr.bf16.mxu0 0
        %3354 = vmatpush1.bf16.msra.mxu0 0
        %3355 = vmatprep.subr.bf16.mxu0 0
        %3356 = vmatpush1.bf16.msra.mxu0 0
        %3357 = vmatprep.subr.bf16.mxu0 0
        %3358 = vmatpush1.bf16.msra.mxu0 0
        %3359 = vmatprep.subr.bf16.mxu0 0
        %3360 = vmatpush1.bf16.msra.mxu0 %v3340
        %3361 = vmatprep.subr.bf16.mxu0 0
        %3362 = vmatpush2.bf16.msra.mxu0 0
        %3363 = vmatprep.subr.bf16.mxu0 0
        %3364 = vmatpush2.bf16.msra.mxu0 0
        %3365 = vmatprep.subr.bf16.mxu0 0
        %3366 = vmatpush2.bf16.msra.mxu0 0
        %3367 = vmatprep.subr.bf16.mxu0 0
        %3368 = vmatpush2.bf16.msra.mxu0 0
        %3369 = vmatprep.subr.bf16.mxu0 0
        %3370 = vmatpush2.bf16.msra.mxu0 0
        %3371 = vmatprep.subr.bf16.mxu0 0
        %3372 = vmatpush2.bf16.msra.mxu0 0
        %3373 = vmatprep.subr.bf16.mxu0 0
        %3374 = vmatpush2.bf16.msra.mxu0 0
        %3375 = vmatprep.subr.bf16.mxu0 0
        %3376 = vmatpush2.bf16.msra.mxu0 0
        %3377 = vmatprep.mubr.bf16.mxu0 0
        %3378 = vmatmul.mubr.bf16.gmra.mxu0 %v3343
        %v3379 = vpop.f32.mrf.mxu0
        %v3380 = vadd.f32 0.0, %v3379
        %v3381 = vpop.f32.mrf.mxu0
        %v3382 = vpop.f32.mrf.mxu0
        %v3383 = vadd.f32 0.0, %v3382
        %v3384 = vpop.f32.mrf.mxu0
        %3385 = vdwg.mxu0
        %v3386 = vadd.f32 %v3274, %v3380
        %v3387 = vadd.f32 %v3277, %v3383
        %s3388 = scalar_lea.vmem %s6, 24
        %v3389 = vld [vmem:[%s3388] sm:$0xf]
        %v3390 = vld [vmem:[%s3388 + $0x4] sm:$0x1]
        %v3393 = vunpack.c.l.b16 %v3389
        %v3394 = vunpack.c.l.b16 %v3390
        %v3395 = vpack.c.b16 %v3394, %v3393
        %v3397 = vsel %vm524, %v3395, 0
        %3399 = vmatprep.subr.bf16.mxu0 0
        %3400 = vmatpush1.bf16.msra.mxu0 0
        %3401 = vmatprep.subr.bf16.mxu0 0
        %3402 = vmatpush1.bf16.msra.mxu0 0
        %3403 = vmatprep.subr.bf16.mxu0 0
        %3404 = vmatpush1.bf16.msra.mxu0 0
        %3405 = vmatprep.subr.bf16.mxu0 0
        %3406 = vmatpush1.bf16.msra.mxu0 0
        %3407 = vmatprep.subr.bf16.mxu0 0
        %3408 = vmatpush1.bf16.msra.mxu0 0
        %3409 = vmatprep.subr.bf16.mxu0 0
        %3410 = vmatpush1.bf16.msra.mxu0 0
        %3411 = vmatprep.subr.bf16.mxu0 0
        %3412 = vmatpush1.bf16.msra.mxu0 %v3078
        %3413 = vmatprep.subr.bf16.mxu0 0
        %3414 = vmatpush1.bf16.msra.mxu0 %v3065
        %3415 = vmatprep.subr.bf16.mxu0 0
        %3416 = vmatpush2.bf16.msra.mxu0 0
        %3417 = vmatprep.subr.bf16.mxu0 0
        %3418 = vmatpush2.bf16.msra.mxu0 0
        %3419 = vmatprep.subr.bf16.mxu0 0
        %3420 = vmatpush2.bf16.msra.mxu0 0
        %3421 = vmatprep.subr.bf16.mxu0 0
        %3422 = vmatpush2.bf16.msra.mxu0 0
        %3423 = vmatprep.subr.bf16.mxu0 0
        %3424 = vmatpush2.bf16.msra.mxu0 0
        %3425 = vmatprep.subr.bf16.mxu0 0
        %3426 = vmatpush2.bf16.msra.mxu0 0
        %3427 = vmatprep.subr.bf16.mxu0 0
        %3428 = vmatpush2.bf16.msra.mxu0 0
        %3429 = vmatprep.subr.bf16.mxu0 0
        %3430 = vmatpush2.bf16.msra.mxu0 0
        %3431 = vmatprep.mubr.bf16.mxu0 0
        %3432 = vmatmul.mubr.bf16.gmra.mxu0 %v3397
        %v3433 = vpop.f32.mrf.mxu0
        %v3434 = vadd.f32 0.0, %v3433
        %v3435 = vpop.f32.mrf.mxu0
        %v3436 = vpop.f32.mrf.mxu0
        %v3437 = vadd.f32 0.0, %v3436
        %v3438 = vpop.f32.mrf.mxu0
        %3439 = vdwg.mxu0
        %v3440 = vpack.c.bf16 %v3437, %v3434
        %s3441 = scalar_lea.vmem %s7, 24
        %v3442 = vld [vmem:[%s3441] sm:$0xf]
        %v3443 = vld [vmem:[%s3441 + $0x4] sm:$0xf]
        %v3446 = vunpack.c.l.b16 %v3442
        %v3447 = vunpack.c.l.b16 %v3443
        %v3448 = vpack.c.b16 %v3447, %v3446
        %v3451 = vsel %vm713, %v3440, 0
        %3453 = vmatprep.subr.bf16.mxu0 0
        %3454 = vmatpush1.bf16.msra.mxu0 0
        %3455 = vmatprep.subr.bf16.mxu0 0
        %3456 = vmatpush1.bf16.msra.mxu0 0
        %3457 = vmatprep.subr.bf16.mxu0 0
        %3458 = vmatpush1.bf16.msra.mxu0 0
        %3459 = vmatprep.subr.bf16.mxu0 0
        %3460 = vmatpush1.bf16.msra.mxu0 0
        %3461 = vmatprep.subr.bf16.mxu0 0
        %3462 = vmatpush1.bf16.msra.mxu0 0
        %3463 = vmatprep.subr.bf16.mxu0 0
        %3464 = vmatpush1.bf16.msra.mxu0 0
        %3465 = vmatprep.subr.bf16.mxu0 0
        %3466 = vmatpush1.bf16.msra.mxu0 0
        %3467 = vmatprep.subr.bf16.mxu0 0
        %3468 = vmatpush1.bf16.msra.mxu0 %v3448
        %3469 = vmatprep.subr.bf16.mxu0 0
        %3470 = vmatpush2.bf16.msra.mxu0 0
        %3471 = vmatprep.subr.bf16.mxu0 0
        %3472 = vmatpush2.bf16.msra.mxu0 0
        %3473 = vmatprep.subr.bf16.mxu0 0
        %3474 = vmatpush2.bf16.msra.mxu0 0
        %3475 = vmatprep.subr.bf16.mxu0 0
        %3476 = vmatpush2.bf16.msra.mxu0 0
        %3477 = vmatprep.subr.bf16.mxu0 0
        %3478 = vmatpush2.bf16.msra.mxu0 0
        %3479 = vmatprep.subr.bf16.mxu0 0
        %3480 = vmatpush2.bf16.msra.mxu0 0
        %3481 = vmatprep.subr.bf16.mxu0 0
        %3482 = vmatpush2.bf16.msra.mxu0 0
        %3483 = vmatprep.subr.bf16.mxu0 0
        %3484 = vmatpush2.bf16.msra.mxu0 0
        %3485 = vmatprep.mubr.bf16.mxu0 0
        %3486 = vmatmul.mubr.bf16.gmra.mxu0 %v3451
        %v3487 = vpop.f32.mrf.mxu0
        %v3488 = vadd.f32 0.0, %v3487
        %v3489 = vpop.f32.mrf.mxu0
        %v3490 = vpop.f32.mrf.mxu0
        %v3491 = vadd.f32 0.0, %v3490
        %v3492 = vpop.f32.mrf.mxu0
        %3493 = vdwg.mxu0
        %v3494 = vadd.f32 %v3386, %v3488
        %v3495 = vadd.f32 %v3387, %v3491
        %s3496 = scalar_lea.vmem %s6, 32
        %v3497 = vld [vmem:[%s3496] sm:$0xf]
        %v3498 = vld [vmem:[%s3496 + $0x4] sm:$0x1]
        %v3501 = vunpack.c.l.b16 %v3497
        %v3502 = vunpack.c.l.b16 %v3498
        %v3503 = vpack.c.b16 %v3502, %v3501
        %v3505 = vsel %vm524, %v3503, 0
        %3507 = vmatprep.subr.bf16.mxu0 0
        %3508 = vmatpush1.bf16.msra.mxu0 0
        %3509 = vmatprep.subr.bf16.mxu0 0
        %3510 = vmatpush1.bf16.msra.mxu0 0
        %3511 = vmatprep.subr.bf16.mxu0 0
        %3512 = vmatpush1.bf16.msra.mxu0 0
        %3513 = vmatprep.subr.bf16.mxu0 0
        %3514 = vmatpush1.bf16.msra.mxu0 0
        %3515 = vmatprep.subr.bf16.mxu0 0
        %3516 = vmatpush1.bf16.msra.mxu0 0
        %3517 = vmatprep.subr.bf16.mxu0 0
        %3518 = vmatpush1.bf16.msra.mxu0 0
        %3519 = vmatprep.subr.bf16.mxu0 0
        %3520 = vmatpush1.bf16.msra.mxu0 %v3078
        %3521 = vmatprep.subr.bf16.mxu0 0
        %3522 = vmatpush1.bf16.msra.mxu0 %v3065
        %3523 = vmatprep.subr.bf16.mxu0 0
        %3524 = vmatpush2.bf16.msra.mxu0 0
        %3525 = vmatprep.subr.bf16.mxu0 0
        %3526 = vmatpush2.bf16.msra.mxu0 0
        %3527 = vmatprep.subr.bf16.mxu0 0
        %3528 = vmatpush2.bf16.msra.mxu0 0
        %3529 = vmatprep.subr.bf16.mxu0 0
        %3530 = vmatpush2.bf16.msra.mxu0 0
        %3531 = vmatprep.subr.bf16.mxu0 0
        %3532 = vmatpush2.bf16.msra.mxu0 0
        %3533 = vmatprep.subr.bf16.mxu0 0
        %3534 = vmatpush2.bf16.msra.mxu0 0
        %3535 = vmatprep.subr.bf16.mxu0 0
        %3536 = vmatpush2.bf16.msra.mxu0 0
        %3537 = vmatprep.subr.bf16.mxu0 0
        %3538 = vmatpush2.bf16.msra.mxu0 0
        %3539 = vmatprep.mubr.bf16.mxu0 0
        %3540 = vmatmul.mubr.bf16.gmra.mxu0 %v3505
        %v3541 = vpop.f32.mrf.mxu0
        %v3542 = vadd.f32 0.0, %v3541
        %v3543 = vpop.f32.mrf.mxu0
        %v3544 = vpop.f32.mrf.mxu0
        %v3545 = vadd.f32 0.0, %v3544
        %v3546 = vpop.f32.mrf.mxu0
        %3547 = vdwg.mxu0
        %v3548 = vpack.c.bf16 %v3545, %v3542
        %s3549 = scalar_lea.vmem %s7, 32
        %v3550 = vld [vmem:[%s3549] sm:$0xf]
        %v3551 = vld [vmem:[%s3549 + $0x4] sm:$0xf]
        %v3554 = vunpack.c.l.b16 %v3550
        %v3555 = vunpack.c.l.b16 %v3551
        %v3556 = vpack.c.b16 %v3555, %v3554
        %v3559 = vsel %vm713, %v3548, 0
        %3561 = vmatprep.subr.bf16.mxu0 0
        %3562 = vmatpush1.bf16.msra.mxu0 0
        %3563 = vmatprep.subr.bf16.mxu0 0
        %3564 = vmatpush1.bf16.msra.mxu0 0
        %3565 = vmatprep.subr.bf16.mxu0 0
        %3566 = vmatpush1.bf16.msra.mxu0 0
        %3567 = vmatprep.subr.bf16.mxu0 0
        %3568 = vmatpush1.bf16.msra.mxu0 0
        %3569 = vmatprep.subr.bf16.mxu0 0
        %3570 = vmatpush1.bf16.msra.mxu0 0
        %3571 = vmatprep.subr.bf16.mxu0 0
        %3572 = vmatpush1.bf16.msra.mxu0 0
        %3573 = vmatprep.subr.bf16.mxu0 0
        %3574 = vmatpush1.bf16.msra.mxu0 0
        %3575 = vmatprep.subr.bf16.mxu0 0
        %3576 = vmatpush1.bf16.msra.mxu0 %v3556
        %3577 = vmatprep.subr.bf16.mxu0 0
        %3578 = vmatpush2.bf16.msra.mxu0 0
        %3579 = vmatprep.subr.bf16.mxu0 0
        %3580 = vmatpush2.bf16.msra.mxu0 0
        %3581 = vmatprep.subr.bf16.mxu0 0
        %3582 = vmatpush2.bf16.msra.mxu0 0
        %3583 = vmatprep.subr.bf16.mxu0 0
        %3584 = vmatpush2.bf16.msra.mxu0 0
        %3585 = vmatprep.subr.bf16.mxu0 0
        %3586 = vmatpush2.bf16.msra.mxu0 0
        %3587 = vmatprep.subr.bf16.mxu0 0
        %3588 = vmatpush2.bf16.msra.mxu0 0
        %3589 = vmatprep.subr.bf16.mxu0 0
        %3590 = vmatpush2.bf16.msra.mxu0 0
        %3591 = vmatprep.subr.bf16.mxu0 0
        %3592 = vmatpush2.bf16.msra.mxu0 0
        %3593 = vmatprep.mubr.bf16.mxu0 0
        %3594 = vmatmul.mubr.bf16.gmra.mxu0 %v3559
        %v3595 = vpop.f32.mrf.mxu0
        %v3596 = vadd.f32 0.0, %v3595
        %v3597 = vpop.f32.mrf.mxu0
        %v3598 = vpop.f32.mrf.mxu0
        %v3599 = vadd.f32 0.0, %v3598
        %v3600 = vpop.f32.mrf.mxu0
        %3601 = vdwg.mxu0
        %v3602 = vadd.f32 %v3494, %v3596
        %v3603 = vadd.f32 %v3495, %v3599
        %s3604 = scalar_lea.vmem %s6, 40
        %v3605 = vld [vmem:[%s3604] sm:$0xf]
        %v3606 = vld [vmem:[%s3604 + $0x4] sm:$0x1]
        %v3609 = vunpack.c.l.b16 %v3605
        %v3610 = vunpack.c.l.b16 %v3606
        %v3611 = vpack.c.b16 %v3610, %v3609
        %v3613 = vsel %vm524, %v3611, 0
        %3615 = vmatprep.subr.bf16.mxu0 0
        %3616 = vmatpush1.bf16.msra.mxu0 0
        %3617 = vmatprep.subr.bf16.mxu0 0
        %3618 = vmatpush1.bf16.msra.mxu0 0
        %3619 = vmatprep.subr.bf16.mxu0 0
        %3620 = vmatpush1.bf16.msra.mxu0 0
        %3621 = vmatprep.subr.bf16.mxu0 0
        %3622 = vmatpush1.bf16.msra.mxu0 0
        %3623 = vmatprep.subr.bf16.mxu0 0
        %3624 = vmatpush1.bf16.msra.mxu0 0
        %3625 = vmatprep.subr.bf16.mxu0 0
        %3626 = vmatpush1.bf16.msra.mxu0 0
        %3627 = vmatprep.subr.bf16.mxu0 0
        %3628 = vmatpush1.bf16.msra.mxu0 %v3078
        %3629 = vmatprep.subr.bf16.mxu0 0
        %3630 = vmatpush1.bf16.msra.mxu0 %v3065
        %3631 = vmatprep.subr.bf16.mxu0 0
        %3632 = vmatpush2.bf16.msra.mxu0 0
        %3633 = vmatprep.subr.bf16.mxu0 0
        %3634 = vmatpush2.bf16.msra.mxu0 0
        %3635 = vmatprep.subr.bf16.mxu0 0
        %3636 = vmatpush2.bf16.msra.mxu0 0
        %3637 = vmatprep.subr.bf16.mxu0 0
        %3638 = vmatpush2.bf16.msra.mxu0 0
        %3639 = vmatprep.subr.bf16.mxu0 0
        %3640 = vmatpush2.bf16.msra.mxu0 0
        %3641 = vmatprep.subr.bf16.mxu0 0
        %3642 = vmatpush2.bf16.msra.mxu0 0
        %3643 = vmatprep.subr.bf16.mxu0 0
        %3644 = vmatpush2.bf16.msra.mxu0 0
        %3645 = vmatprep.subr.bf16.mxu0 0
        %3646 = vmatpush2.bf16.msra.mxu0 0
        %3647 = vmatprep.mubr.bf16.mxu0 0
        %3648 = vmatmul.mubr.bf16.gmra.mxu0 %v3613
        %v3649 = vpop.f32.mrf.mxu0
        %v3650 = vadd.f32 0.0, %v3649
        %v3651 = vpop.f32.mrf.mxu0
        %v3652 = vpop.f32.mrf.mxu0
        %v3653 = vadd.f32 0.0, %v3652
        %v3654 = vpop.f32.mrf.mxu0
        %3655 = vdwg.mxu0
        %v3656 = vpack.c.bf16 %v3653, %v3650
        %s3657 = scalar_lea.vmem %s7, 40
        %v3658 = vld [vmem:[%s3657] sm:$0xf]
        %v3659 = vld [vmem:[%s3657 + $0x4] sm:$0xf]
        %v3662 = vunpack.c.l.b16 %v3658
        %v3663 = vunpack.c.l.b16 %v3659
        %v3664 = vpack.c.b16 %v3663, %v3662
        %v3667 = vsel %vm713, %v3656, 0
        %3669 = vmatprep.subr.bf16.mxu0 0
        %3670 = vmatpush1.bf16.msra.mxu0 0
        %3671 = vmatprep.subr.bf16.mxu0 0
        %3672 = vmatpush1.bf16.msra.mxu0 0
        %3673 = vmatprep.subr.bf16.mxu0 0
        %3674 = vmatpush1.bf16.msra.mxu0 0
        %3675 = vmatprep.subr.bf16.mxu0 0
        %3676 = vmatpush1.bf16.msra.mxu0 0
        %3677 = vmatprep.subr.bf16.mxu0 0
        %3678 = vmatpush1.bf16.msra.mxu0 0
        %3679 = vmatprep.subr.bf16.mxu0 0
        %3680 = vmatpush1.bf16.msra.mxu0 0
        %3681 = vmatprep.subr.bf16.mxu0 0
        %3682 = vmatpush1.bf16.msra.mxu0 0
        %3683 = vmatprep.subr.bf16.mxu0 0
        %3684 = vmatpush1.bf16.msra.mxu0 %v3664
        %3685 = vmatprep.subr.bf16.mxu0 0
        %3686 = vmatpush2.bf16.msra.mxu0 0
        %3687 = vmatprep.subr.bf16.mxu0 0
        %3688 = vmatpush2.bf16.msra.mxu0 0
        %3689 = vmatprep.subr.bf16.mxu0 0
        %3690 = vmatpush2.bf16.msra.mxu0 0
        %3691 = vmatprep.subr.bf16.mxu0 0
        %3692 = vmatpush2.bf16.msra.mxu0 0
        %3693 = vmatprep.subr.bf16.mxu0 0
        %3694 = vmatpush2.bf16.msra.mxu0 0
        %3695 = vmatprep.subr.bf16.mxu0 0
        %3696 = vmatpush2.bf16.msra.mxu0 0
        %3697 = vmatprep.subr.bf16.mxu0 0
        %3698 = vmatpush2.bf16.msra.mxu0 0
        %3699 = vmatprep.subr.bf16.mxu0 0
        %3700 = vmatpush2.bf16.msra.mxu0 0
        %3701 = vmatprep.mubr.bf16.mxu0 0
        %3702 = vmatmul.mubr.bf16.gmra.mxu0 %v3667
        %v3703 = vpop.f32.mrf.mxu0
        %v3704 = vadd.f32 0.0, %v3703
        %v3705 = vpop.f32.mrf.mxu0
        %v3706 = vpop.f32.mrf.mxu0
        %v3707 = vadd.f32 0.0, %v3706
        %v3708 = vpop.f32.mrf.mxu0
        %3709 = vdwg.mxu0
        %v3710 = vadd.f32 %v3602, %v3704
        %v3711 = vadd.f32 %v3603, %v3707
        %s3712 = scalar_lea.vmem %s6, 48
        %v3713 = vld [vmem:[%s3712] sm:$0xf]
        %v3714 = vld [vmem:[%s3712 + $0x4] sm:$0x1]
        %v3717 = vunpack.c.l.b16 %v3713
        %v3718 = vunpack.c.l.b16 %v3714
        %v3719 = vpack.c.b16 %v3718, %v3717
        %v3721 = vsel %vm524, %v3719, 0
        %3723 = vmatprep.subr.bf16.mxu0 0
        %3724 = vmatpush1.bf16.msra.mxu0 0
        %3725 = vmatprep.subr.bf16.mxu0 0
        %3726 = vmatpush1.bf16.msra.mxu0 0
        %3727 = vmatprep.subr.bf16.mxu0 0
        %3728 = vmatpush1.bf16.msra.mxu0 0
        %3729 = vmatprep.subr.bf16.mxu0 0
        %3730 = vmatpush1.bf16.msra.mxu0 0
        %3731 = vmatprep.subr.bf16.mxu0 0
        %3732 = vmatpush1.bf16.msra.mxu0 0
        %3733 = vmatprep.subr.bf16.mxu0 0
        %3734 = vmatpush1.bf16.msra.mxu0 0
        %3735 = vmatprep.subr.bf16.mxu0 0
        %3736 = vmatpush1.bf16.msra.mxu0 %v3078
        %3737 = vmatprep.subr.bf16.mxu0 0
        %3738 = vmatpush1.bf16.msra.mxu0 %v3065
        %3739 = vmatprep.subr.bf16.mxu0 0
        %3740 = vmatpush2.bf16.msra.mxu0 0
        %3741 = vmatprep.subr.bf16.mxu0 0
        %3742 = vmatpush2.bf16.msra.mxu0 0
        %3743 = vmatprep.subr.bf16.mxu0 0
        %3744 = vmatpush2.bf16.msra.mxu0 0
        %3745 = vmatprep.subr.bf16.mxu0 0
        %3746 = vmatpush2.bf16.msra.mxu0 0
        %3747 = vmatprep.subr.bf16.mxu0 0
        %3748 = vmatpush2.bf16.msra.mxu0 0
        %3749 = vmatprep.subr.bf16.mxu0 0
        %3750 = vmatpush2.bf16.msra.mxu0 0
        %3751 = vmatprep.subr.bf16.mxu0 0
        %3752 = vmatpush2.bf16.msra.mxu0 0
        %3753 = vmatprep.subr.bf16.mxu0 0
        %3754 = vmatpush2.bf16.msra.mxu0 0
        %3755 = vmatprep.mubr.bf16.mxu0 0
        %3756 = vmatmul.mubr.bf16.gmra.mxu0 %v3721
        %v3757 = vpop.f32.mrf.mxu0
        %v3758 = vadd.f32 0.0, %v3757
        %v3759 = vpop.f32.mrf.mxu0
        %v3760 = vpop.f32.mrf.mxu0
        %v3761 = vadd.f32 0.0, %v3760
        %v3762 = vpop.f32.mrf.mxu0
        %3763 = vdwg.mxu0
        %v3764 = vpack.c.bf16 %v3761, %v3758
        %s3765 = scalar_lea.vmem %s7, 48
        %v3766 = vld [vmem:[%s3765] sm:$0xf]
        %v3767 = vld [vmem:[%s3765 + $0x4] sm:$0xf]
        %v3770 = vunpack.c.l.b16 %v3766
        %v3771 = vunpack.c.l.b16 %v3767
        %v3772 = vpack.c.b16 %v3771, %v3770
        %v3775 = vsel %vm713, %v3764, 0
        %3777 = vmatprep.subr.bf16.mxu0 0
        %3778 = vmatpush1.bf16.msra.mxu0 0
        %3779 = vmatprep.subr.bf16.mxu0 0
        %3780 = vmatpush1.bf16.msra.mxu0 0
        %3781 = vmatprep.subr.bf16.mxu0 0
        %3782 = vmatpush1.bf16.msra.mxu0 0
        %3783 = vmatprep.subr.bf16.mxu0 0
        %3784 = vmatpush1.bf16.msra.mxu0 0
        %3785 = vmatprep.subr.bf16.mxu0 0
        %3786 = vmatpush1.bf16.msra.mxu0 0
        %3787 = vmatprep.subr.bf16.mxu0 0
        %3788 = vmatpush1.bf16.msra.mxu0 0
        %3789 = vmatprep.subr.bf16.mxu0 0
        %3790 = vmatpush1.bf16.msra.mxu0 0
        %3791 = vmatprep.subr.bf16.mxu0 0
        %3792 = vmatpush1.bf16.msra.mxu0 %v3772
        %3793 = vmatprep.subr.bf16.mxu0 0
        %3794 = vmatpush2.bf16.msra.mxu0 0
        %3795 = vmatprep.subr.bf16.mxu0 0
        %3796 = vmatpush2.bf16.msra.mxu0 0
        %3797 = vmatprep.subr.bf16.mxu0 0
        %3798 = vmatpush2.bf16.msra.mxu0 0
        %3799 = vmatprep.subr.bf16.mxu0 0
        %3800 = vmatpush2.bf16.msra.mxu0 0
        %3801 = vmatprep.subr.bf16.mxu0 0
        %3802 = vmatpush2.bf16.msra.mxu0 0
        %3803 = vmatprep.subr.bf16.mxu0 0
        %3804 = vmatpush2.bf16.msra.mxu0 0
        %3805 = vmatprep.subr.bf16.mxu0 0
        %3806 = vmatpush2.bf16.msra.mxu0 0
        %3807 = vmatprep.subr.bf16.mxu0 0
        %3808 = vmatpush2.bf16.msra.mxu0 0
        %3809 = vmatprep.mubr.bf16.mxu0 0
        %3810 = vmatmul.mubr.bf16.gmra.mxu0 %v3775
        %v3811 = vpop.f32.mrf.mxu0
        %v3812 = vadd.f32 0.0, %v3811
        %v3813 = vpop.f32.mrf.mxu0
        %v3814 = vpop.f32.mrf.mxu0
        %v3815 = vadd.f32 0.0, %v3814
        %v3816 = vpop.f32.mrf.mxu0
        %3817 = vdwg.mxu0
        %v3818 = vadd.f32 %v3710, %v3812
        %v3819 = vadd.f32 %v3711, %v3815
        %s3820 = scalar_lea.vmem %s6, 56
        %v3821 = vld [vmem:[%s3820] sm:$0xf]
        %v3822 = vld [vmem:[%s3820 + $0x4] sm:$0x1]
        %v3825 = vunpack.c.l.b16 %v3821
        %v3826 = vunpack.c.l.b16 %v3822
        %v3827 = vpack.c.b16 %v3826, %v3825
        %v3829 = vsel %vm524, %v3827, 0
        %3831 = vmatprep.subr.bf16.mxu0 0
        %3832 = vmatpush1.bf16.msra.mxu0 0
        %3833 = vmatprep.subr.bf16.mxu0 0
        %3834 = vmatpush1.bf16.msra.mxu0 0
        %3835 = vmatprep.subr.bf16.mxu0 0
        %3836 = vmatpush1.bf16.msra.mxu0 0
        %3837 = vmatprep.subr.bf16.mxu0 0
        %3838 = vmatpush1.bf16.msra.mxu0 0
        %3839 = vmatprep.subr.bf16.mxu0 0
        %3840 = vmatpush1.bf16.msra.mxu0 0
        %3841 = vmatprep.subr.bf16.mxu0 0
        %3842 = vmatpush1.bf16.msra.mxu0 0
        %3843 = vmatprep.subr.bf16.mxu0 0
        %3844 = vmatpush1.bf16.msra.mxu0 %v3078
        %3845 = vmatprep.subr.bf16.mxu0 0
        %3846 = vmatpush1.bf16.msra.mxu0 %v3065
        %3847 = vmatprep.subr.bf16.mxu0 0
        %3848 = vmatpush2.bf16.msra.mxu0 0
        %3849 = vmatprep.subr.bf16.mxu0 0
        %3850 = vmatpush2.bf16.msra.mxu0 0
        %3851 = vmatprep.subr.bf16.mxu0 0
        %3852 = vmatpush2.bf16.msra.mxu0 0
        %3853 = vmatprep.subr.bf16.mxu0 0
        %3854 = vmatpush2.bf16.msra.mxu0 0
        %3855 = vmatprep.subr.bf16.mxu0 0
        %3856 = vmatpush2.bf16.msra.mxu0 0
        %3857 = vmatprep.subr.bf16.mxu0 0
        %3858 = vmatpush2.bf16.msra.mxu0 0
        %3859 = vmatprep.subr.bf16.mxu0 0
        %3860 = vmatpush2.bf16.msra.mxu0 0
        %3861 = vmatprep.subr.bf16.mxu0 0
        %3862 = vmatpush2.bf16.msra.mxu0 0
        %3863 = vmatprep.mubr.bf16.mxu0 0
        %3864 = vmatmul.mubr.bf16.gmra.mxu0 %v3829
        %v3865 = vpop.f32.mrf.mxu0
        %v3866 = vadd.f32 0.0, %v3865
        %v3867 = vpop.f32.mrf.mxu0
        %v3868 = vpop.f32.mrf.mxu0
        %v3869 = vadd.f32 0.0, %v3868
        %v3870 = vpop.f32.mrf.mxu0
        %3871 = vdwg.mxu0
        %v3872 = vpack.c.bf16 %v3869, %v3866
        %s3873 = scalar_lea.vmem %s7, 56
        %v3874 = vld [vmem:[%s3873] sm:$0xf]
        %v3875 = vld [vmem:[%s3873 + $0x4] sm:$0xf]
        %v3878 = vunpack.c.l.b16 %v3874
        %v3879 = vunpack.c.l.b16 %v3875
        %v3880 = vpack.c.b16 %v3879, %v3878
        %v3883 = vsel %vm713, %v3872, 0
        %3885 = vmatprep.subr.bf16.mxu0 0
        %3886 = vmatpush1.bf16.msra.mxu0 0
        %3887 = vmatprep.subr.bf16.mxu0 0
        %3888 = vmatpush1.bf16.msra.mxu0 0
        %3889 = vmatprep.subr.bf16.mxu0 0
        %3890 = vmatpush1.bf16.msra.mxu0 0
        %3891 = vmatprep.subr.bf16.mxu0 0
        %3892 = vmatpush1.bf16.msra.mxu0 0
        %3893 = vmatprep.subr.bf16.mxu0 0
        %3894 = vmatpush1.bf16.msra.mxu0 0
        %3895 = vmatprep.subr.bf16.mxu0 0
        %3896 = vmatpush1.bf16.msra.mxu0 0
        %3897 = vmatprep.subr.bf16.mxu0 0
        %3898 = vmatpush1.bf16.msra.mxu0 0
        %3899 = vmatprep.subr.bf16.mxu0 0
        %3900 = vmatpush1.bf16.msra.mxu0 %v3880
        %3901 = vmatprep.subr.bf16.mxu0 0
        %3902 = vmatpush2.bf16.msra.mxu0 0
        %3903 = vmatprep.subr.bf16.mxu0 0
        %3904 = vmatpush2.bf16.msra.mxu0 0
        %3905 = vmatprep.subr.bf16.mxu0 0
        %3906 = vmatpush2.bf16.msra.mxu0 0
        %3907 = vmatprep.subr.bf16.mxu0 0
        %3908 = vmatpush2.bf16.msra.mxu0 0
        %3909 = vmatprep.subr.bf16.mxu0 0
        %3910 = vmatpush2.bf16.msra.mxu0 0
        %3911 = vmatprep.subr.bf16.mxu0 0
        %3912 = vmatpush2.bf16.msra.mxu0 0
        %3913 = vmatprep.subr.bf16.mxu0 0
        %3914 = vmatpush2.bf16.msra.mxu0 0
        %3915 = vmatprep.subr.bf16.mxu0 0
        %3916 = vmatpush2.bf16.msra.mxu0 0
        %3917 = vmatprep.mubr.bf16.mxu0 0
        %3918 = vmatmul.mubr.bf16.gmra.mxu0 %v3883
        %v3919 = vpop.f32.mrf.mxu0
        %v3920 = vadd.f32 0.0, %v3919
        %v3921 = vpop.f32.mrf.mxu0
        %v3922 = vpop.f32.mrf.mxu0
        %v3923 = vadd.f32 0.0, %v3922
        %v3924 = vpop.f32.mrf.mxu0
        %3925 = vdwg.mxu0
        %v3926 = vadd.f32 %v3818, %v3920
        %v3927 = vadd.f32 %v3819, %v3923
        %s3928 = scalar_lea.vmem %s6, 64
        %v3929 = vld [vmem:[%s3928] sm:$0xf]
        %v3930 = vld [vmem:[%s3928 + $0x4] sm:$0x1]
        %v3933 = vunpack.c.l.b16 %v3929
        %v3934 = vunpack.c.l.b16 %v3930
        %v3935 = vpack.c.b16 %v3934, %v3933
        %v3937 = vsel %vm524, %v3935, 0
        %3939 = vmatprep.subr.bf16.mxu0 0
        %3940 = vmatpush1.bf16.msra.mxu0 0
        %3941 = vmatprep.subr.bf16.mxu0 0
        %3942 = vmatpush1.bf16.msra.mxu0 0
        %3943 = vmatprep.subr.bf16.mxu0 0
        %3944 = vmatpush1.bf16.msra.mxu0 0
        %3945 = vmatprep.subr.bf16.mxu0 0
        %3946 = vmatpush1.bf16.msra.mxu0 0
        %3947 = vmatprep.subr.bf16.mxu0 0
        %3948 = vmatpush1.bf16.msra.mxu0 0
        %3949 = vmatprep.subr.bf16.mxu0 0
        %3950 = vmatpush1.bf16.msra.mxu0 0
        %3951 = vmatprep.subr.bf16.mxu0 0
        %3952 = vmatpush1.bf16.msra.mxu0 %v3078
        %3953 = vmatprep.subr.bf16.mxu0 0
        %3954 = vmatpush1.bf16.msra.mxu0 %v3065
        %3955 = vmatprep.subr.bf16.mxu0 0
        %3956 = vmatpush2.bf16.msra.mxu0 0
        %3957 = vmatprep.subr.bf16.mxu0 0
        %3958 = vmatpush2.bf16.msra.mxu0 0
        %3959 = vmatprep.subr.bf16.mxu0 0
        %3960 = vmatpush2.bf16.msra.mxu0 0
        %3961 = vmatprep.subr.bf16.mxu0 0
        %3962 = vmatpush2.bf16.msra.mxu0 0
        %3963 = vmatprep.subr.bf16.mxu0 0
        %3964 = vmatpush2.bf16.msra.mxu0 0
        %3965 = vmatprep.subr.bf16.mxu0 0
        %3966 = vmatpush2.bf16.msra.mxu0 0
        %3967 = vmatprep.subr.bf16.mxu0 0
        %3968 = vmatpush2.bf16.msra.mxu0 0
        %3969 = vmatprep.subr.bf16.mxu0 0
        %3970 = vmatpush2.bf16.msra.mxu0 0
        %3971 = vmatprep.mubr.bf16.mxu0 0
        %3972 = vmatmul.mubr.bf16.gmra.mxu0 %v3937
        %v3973 = vpop.f32.mrf.mxu0
        %v3974 = vadd.f32 0.0, %v3973
        %v3975 = vpop.f32.mrf.mxu0
        %v3976 = vpop.f32.mrf.mxu0
        %v3977 = vadd.f32 0.0, %v3976
        %v3978 = vpop.f32.mrf.mxu0
        %3979 = vdwg.mxu0
        %v3980 = vpack.c.bf16 %v3977, %v3974
        %s3981 = scalar_lea.vmem %s7, 64
        %v3982 = vld [vmem:[%s3981] sm:$0xf]
        %v3983 = vld [vmem:[%s3981 + $0x4] sm:$0xf]
        %v3986 = vunpack.c.l.b16 %v3982
        %v3987 = vunpack.c.l.b16 %v3983
        %v3988 = vpack.c.b16 %v3987, %v3986
        %v3991 = vsel %vm713, %v3980, 0
        %3993 = vmatprep.subr.bf16.mxu0 0
        %3994 = vmatpush1.bf16.msra.mxu0 0
        %3995 = vmatprep.subr.bf16.mxu0 0
        %3996 = vmatpush1.bf16.msra.mxu0 0
        %3997 = vmatprep.subr.bf16.mxu0 0
        %3998 = vmatpush1.bf16.msra.mxu0 0
        %3999 = vmatprep.subr.bf16.mxu0 0
        %4000 = vmatpush1.bf16.msra.mxu0 0
        %4001 = vmatprep.subr.bf16.mxu0 0
        %4002 = vmatpush1.bf16.msra.mxu0 0
        %4003 = vmatprep.subr.bf16.mxu0 0
        %4004 = vmatpush1.bf16.msra.mxu0 0
        %4005 = vmatprep.subr.bf16.mxu0 0
        %4006 = vmatpush1.bf16.msra.mxu0 0
        %4007 = vmatprep.subr.bf16.mxu0 0
        %4008 = vmatpush1.bf16.msra.mxu0 %v3988
        %4009 = vmatprep.subr.bf16.mxu0 0
        %4010 = vmatpush2.bf16.msra.mxu0 0
        %4011 = vmatprep.subr.bf16.mxu0 0
        %4012 = vmatpush2.bf16.msra.mxu0 0
        %4013 = vmatprep.subr.bf16.mxu0 0
        %4014 = vmatpush2.bf16.msra.mxu0 0
        %4015 = vmatprep.subr.bf16.mxu0 0
        %4016 = vmatpush2.bf16.msra.mxu0 0
        %4017 = vmatprep.subr.bf16.mxu0 0
        %4018 = vmatpush2.bf16.msra.mxu0 0
        %4019 = vmatprep.subr.bf16.mxu0 0
        %4020 = vmatpush2.bf16.msra.mxu0 0
        %4021 = vmatprep.subr.bf16.mxu0 0
        %4022 = vmatpush2.bf16.msra.mxu0 0
        %4023 = vmatprep.subr.bf16.mxu0 0
        %4024 = vmatpush2.bf16.msra.mxu0 0
        %4025 = vmatprep.mubr.bf16.mxu0 0
        %4026 = vmatmul.mubr.bf16.gmra.mxu0 %v3991
        %v4027 = vpop.f32.mrf.mxu0
        %v4028 = vadd.f32 0.0, %v4027
        %v4029 = vpop.f32.mrf.mxu0
        %v4030 = vpop.f32.mrf.mxu0
        %v4031 = vadd.f32 0.0, %v4030
        %v4032 = vpop.f32.mrf.mxu0
        %4033 = vdwg.mxu0
        %v4034 = vadd.f32 %v3926, %v4028
        %v4035 = vadd.f32 %v3927, %v4031
        %v4036 = vld [vmem:[%s8] sm:$0x1]
        %v4038 = vlaneseq
        %v4039 = vshrl.u32 %v4038, 7
        %v4040 = vsub.s32 0, %v4039
        %v4041 = vrot.slane %v4036, %v4040
        %v4043 = vadd.f32 %v4034, %v4041
        %v4044 = vadd.f32 %v4035, %v4041
        %v4045 = vmax.f32 %v4043, 0.0
        %v4046 = vmax.f32 %v4044, 0.0
        %v4047 = vpack.c.bf16 %v4046, %v4045
        %v4048 = vld [vmem:[%s9] sm:$0xf]
        %v4049 = vld [vmem:[%s9 + $0x4] sm:$0xf]
        %s4050 = scalar_lea.vmem %s9, 8
        %v4051 = vld [vmem:[%s4050] sm:$0xf]
        %v4052 = vld [vmem:[%s4050 + $0x4] sm:$0xf]
        %v4054 = vshrl.u32 %v4047, 16
        %v4058 = vunpack.c.l.b16 %v4051
        %v4059 = vunpack.c.l.b16 %v4052
        %v4060 = vpack.c.b16 %v4059, %v4058
        %v4063 = vsel %vm713, %v4054, 0
        %4065 = vmatprep.subr.bf16.mxu0 0
        %4066 = vmatpush1.bf16.msra.mxu0 0
        %4067 = vmatprep.subr.bf16.mxu0 0
        %4068 = vmatpush1.bf16.msra.mxu0 0
        %4069 = vmatprep.subr.bf16.mxu0 0
        %4070 = vmatpush1.bf16.msra.mxu0 0
        %4071 = vmatprep.subr.bf16.mxu0 0
        %4072 = vmatpush1.bf16.msra.mxu0 0
        %4073 = vmatprep.subr.bf16.mxu0 0
        %4074 = vmatpush1.bf16.msra.mxu0 0
        %4075 = vmatprep.subr.bf16.mxu0 0
        %4076 = vmatpush1.bf16.msra.mxu0 0
        %4077 = vmatprep.subr.bf16.mxu0 0
        %4078 = vmatpush1.bf16.msra.mxu0 0
        %4079 = vmatprep.subr.bf16.mxu0 0
        %4080 = vmatpush1.bf16.msra.mxu0 %v4060
        %4081 = vmatprep.subr.bf16.mxu0 0
        %4082 = vmatpush2.bf16.msra.mxu0 0
        %4083 = vmatprep.subr.bf16.mxu0 0
        %4084 = vmatpush2.bf16.msra.mxu0 0
        %4085 = vmatprep.subr.bf16.mxu0 0
        %4086 = vmatpush2.bf16.msra.mxu0 0
        %4087 = vmatprep.subr.bf16.mxu0 0
        %4088 = vmatpush2.bf16.msra.mxu0 0
        %4089 = vmatprep.subr.bf16.mxu0 0
        %4090 = vmatpush2.bf16.msra.mxu0 0
        %4091 = vmatprep.subr.bf16.mxu0 0
        %4092 = vmatpush2.bf16.msra.mxu0 0
        %4093 = vmatprep.subr.bf16.mxu0 0
        %4094 = vmatpush2.bf16.msra.mxu0 0
        %4095 = vmatprep.subr.bf16.mxu0 0
        %4096 = vmatpush2.bf16.msra.mxu0 0
        %4097 = vmatprep.mubr.bf16.mxu0 0
        %4098 = vmatmul.mubr.bf16.gmra.mxu0 %v4063
        %v4099 = vpop.f32.mrf.mxu0
        %v4100 = vadd.f32 0.0, %v4099
        %v4101 = vpop.f32.mrf.mxu0
        %v4102 = vpop.f32.mrf.mxu0
        %v4103 = vpop.f32.mrf.mxu0
        %4104 = vdwg.mxu0
        %v4107 = vunpack.c.l.b16 %v4048
        %v4108 = vunpack.c.l.b16 %v4049
        %v4109 = vpack.c.b16 %v4108, %v4107
        %v4111 = vsel %vm713, %v4047, 0
        %4113 = vmatprep.subr.bf16.mxu0 0
        %4114 = vmatpush1.bf16.msra.mxu0 0
        %4115 = vmatprep.subr.bf16.mxu0 0
        %4116 = vmatpush1.bf16.msra.mxu0 0
        %4117 = vmatprep.subr.bf16.mxu0 0
        %4118 = vmatpush1.bf16.msra.mxu0 0
        %4119 = vmatprep.subr.bf16.mxu0 0
        %4120 = vmatpush1.bf16.msra.mxu0 0
        %4121 = vmatprep.subr.bf16.mxu0 0
        %4122 = vmatpush1.bf16.msra.mxu0 0
        %4123 = vmatprep.subr.bf16.mxu0 0
        %4124 = vmatpush1.bf16.msra.mxu0 0
        %4125 = vmatprep.subr.bf16.mxu0 0
        %4126 = vmatpush1.bf16.msra.mxu0 0
        %4127 = vmatprep.subr.bf16.mxu0 0
        %4128 = vmatpush1.bf16.msra.mxu0 %v4109
        %4129 = vmatprep.subr.bf16.mxu0 0
        %4130 = vmatpush2.bf16.msra.mxu0 0
        %4131 = vmatprep.subr.bf16.mxu0 0
        %4132 = vmatpush2.bf16.msra.mxu0 0
        %4133 = vmatprep.subr.bf16.mxu0 0
        %4134 = vmatpush2.bf16.msra.mxu0 0
        %4135 = vmatprep.subr.bf16.mxu0 0
        %4136 = vmatpush2.bf16.msra.mxu0 0
        %4137 = vmatprep.subr.bf16.mxu0 0
        %4138 = vmatpush2.bf16.msra.mxu0 0
        %4139 = vmatprep.subr.bf16.mxu0 0
        %4140 = vmatpush2.bf16.msra.mxu0 0
        %4141 = vmatprep.subr.bf16.mxu0 0
        %4142 = vmatpush2.bf16.msra.mxu0 0
        %4143 = vmatprep.subr.bf16.mxu0 0
        %4144 = vmatpush2.bf16.msra.mxu0 0
        %4145 = vmatprep.mubr.bf16.mxu0 0
        %4146 = vmatmul.mubr.bf16.gmra.mxu0 %v4111
        %v4147 = vpop.f32.mrf.mxu0
        %v4148 = vadd.f32 %v4100, %v4147
        %v4149 = vpop.f32.mrf.mxu0
        %v4150 = vpop.f32.mrf.mxu0
        %v4151 = vpop.f32.mrf.mxu0
        %4152 = vdwg.mxu0
        %s4153 = scalar_lea.vmem %s9, 16
        %v4154 = vld [vmem:[%s4153] sm:$0xf]
        %v4155 = vld [vmem:[%s4153 + $0x4] sm:$0xf]
        %v4157 = vrot.slane %v4047, 1
        %v4160 = vunpack.c.l.b16 %v4154
        %v4161 = vunpack.c.l.b16 %v4155
        %v4162 = vpack.c.b16 %v4161, %v4160
        %v4165 = vsel %vm713, %v4157, 0
        %4167 = vmatprep.subr.bf16.mxu0 0
        %4168 = vmatpush1.bf16.msra.mxu0 0
        %4169 = vmatprep.subr.bf16.mxu0 0
        %4170 = vmatpush1.bf16.msra.mxu0 0
        %4171 = vmatprep.subr.bf16.mxu0 0
        %4172 = vmatpush1.bf16.msra.mxu0 0
        %4173 = vmatprep.subr.bf16.mxu0 0
        %4174 = vmatpush1.bf16.msra.mxu0 0
        %4175 = vmatprep.subr.bf16.mxu0 0
        %4176 = vmatpush1.bf16.msra.mxu0 0
        %4177 = vmatprep.subr.bf16.mxu0 0
        %4178 = vmatpush1.bf16.msra.mxu0 0
        %4179 = vmatprep.subr.bf16.mxu0 0
        %4180 = vmatpush1.bf16.msra.mxu0 0
        %4181 = vmatprep.subr.bf16.mxu0 0
        %4182 = vmatpush1.bf16.msra.mxu0 %v4162
        %4183 = vmatprep.subr.bf16.mxu0 0
        %4184 = vmatpush2.bf16.msra.mxu0 0
        %4185 = vmatprep.subr.bf16.mxu0 0
        %4186 = vmatpush2.bf16.msra.mxu0 0
        %4187 = vmatprep.subr.bf16.mxu0 0
        %4188 = vmatpush2.bf16.msra.mxu0 0
        %4189 = vmatprep.subr.bf16.mxu0 0
        %4190 = vmatpush2.bf16.msra.mxu0 0
        %4191 = vmatprep.subr.bf16.mxu0 0
        %4192 = vmatpush2.bf16.msra.mxu0 0
        %4193 = vmatprep.subr.bf16.mxu0 0
        %4194 = vmatpush2.bf16.msra.mxu0 0
        %4195 = vmatprep.subr.bf16.mxu0 0
        %4196 = vmatpush2.bf16.msra.mxu0 0
        %4197 = vmatprep.subr.bf16.mxu0 0
        %4198 = vmatpush2.bf16.msra.mxu0 0
        %4199 = vmatprep.mubr.bf16.mxu0 0
        %4200 = vmatmul.mubr.bf16.gmra.mxu0 %v4165
        %v4201 = vpop.f32.mrf.mxu0
        %v4202 = vadd.f32 0.0, %v4201
        %v4203 = vpop.f32.mrf.mxu0
        %v4204 = vpop.f32.mrf.mxu0
        %v4205 = vpop.f32.mrf.mxu0
        %4206 = vdwg.mxu0
        %v4207 = vadd.f32 %v4148, %v4202
        %s4208 = scalar_lea.vmem %s9, 24
        %v4209 = vld [vmem:[%s4208] sm:$0xf]
        %v4210 = vld [vmem:[%s4208 + $0x4] sm:$0xf]
        %v4211 = vrot.slane %v4054, 1
        %v4214 = vunpack.c.l.b16 %v4209
        %v4215 = vunpack.c.l.b16 %v4210
        %v4216 = vpack.c.b16 %v4215, %v4214
        %v4219 = vsel %vm713, %v4211, 0
        %4221 = vmatprep.subr.bf16.mxu0 0
        %4222 = vmatpush1.bf16.msra.mxu0 0
        %4223 = vmatprep.subr.bf16.mxu0 0
        %4224 = vmatpush1.bf16.msra.mxu0 0
        %4225 = vmatprep.subr.bf16.mxu0 0
        %4226 = vmatpush1.bf16.msra.mxu0 0
        %4227 = vmatprep.subr.bf16.mxu0 0
        %4228 = vmatpush1.bf16.msra.mxu0 0
        %4229 = vmatprep.subr.bf16.mxu0 0
        %4230 = vmatpush1.bf16.msra.mxu0 0
        %4231 = vmatprep.subr.bf16.mxu0 0
        %4232 = vmatpush1.bf16.msra.mxu0 0
        %4233 = vmatprep.subr.bf16.mxu0 0
        %4234 = vmatpush1.bf16.msra.mxu0 0
        %4235 = vmatprep.subr.bf16.mxu0 0
        %4236 = vmatpush1.bf16.msra.mxu0 %v4216
        %4237 = vmatprep.subr.bf16.mxu0 0
        %4238 = vmatpush2.bf16.msra.mxu0 0
        %4239 = vmatprep.subr.bf16.mxu0 0
        %4240 = vmatpush2.bf16.msra.mxu0 0
        %4241 = vmatprep.subr.bf16.mxu0 0
        %4242 = vmatpush2.bf16.msra.mxu0 0
        %4243 = vmatprep.subr.bf16.mxu0 0
        %4244 = vmatpush2.bf16.msra.mxu0 0
        %4245 = vmatprep.subr.bf16.mxu0 0
        %4246 = vmatpush2.bf16.msra.mxu0 0
        %4247 = vmatprep.subr.bf16.mxu0 0
        %4248 = vmatpush2.bf16.msra.mxu0 0
        %4249 = vmatprep.subr.bf16.mxu0 0
        %4250 = vmatpush2.bf16.msra.mxu0 0
        %4251 = vmatprep.subr.bf16.mxu0 0
        %4252 = vmatpush2.bf16.msra.mxu0 0
        %4253 = vmatprep.mubr.bf16.mxu0 0
        %4254 = vmatmul.mubr.bf16.gmra.mxu0 %v4219
        %v4255 = vpop.f32.mrf.mxu0
        %v4256 = vadd.f32 0.0, %v4255
        %v4257 = vpop.f32.mrf.mxu0
        %v4258 = vpop.f32.mrf.mxu0
        %v4259 = vpop.f32.mrf.mxu0
        %4260 = vdwg.mxu0
        %v4261 = vadd.f32 %v4207, %v4256
        %s4262 = scalar_lea.vmem %s9, 32
        %v4263 = vld [vmem:[%s4262] sm:$0xf]
        %v4264 = vld [vmem:[%s4262 + $0x4] sm:$0xf]
        %v4265 = vrot.slane %v4047, 2
        %v4268 = vunpack.c.l.b16 %v4263
        %v4269 = vunpack.c.l.b16 %v4264
        %v4270 = vpack.c.b16 %v4269, %v4268
        %v4273 = vsel %vm713, %v4265, 0
        %4275 = vmatprep.subr.bf16.mxu0 0
        %4276 = vmatpush1.bf16.msra.mxu0 0
        %4277 = vmatprep.subr.bf16.mxu0 0
        %4278 = vmatpush1.bf16.msra.mxu0 0
        %4279 = vmatprep.subr.bf16.mxu0 0
        %4280 = vmatpush1.bf16.msra.mxu0 0
        %4281 = vmatprep.subr.bf16.mxu0 0
        %4282 = vmatpush1.bf16.msra.mxu0 0
        %4283 = vmatprep.subr.bf16.mxu0 0
        %4284 = vmatpush1.bf16.msra.mxu0 0
        %4285 = vmatprep.subr.bf16.mxu0 0
        %4286 = vmatpush1.bf16.msra.mxu0 0
        %4287 = vmatprep.subr.bf16.mxu0 0
        %4288 = vmatpush1.bf16.msra.mxu0 0
        %4289 = vmatprep.subr.bf16.mxu0 0
        %4290 = vmatpush1.bf16.msra.mxu0 %v4270
        %4291 = vmatprep.subr.bf16.mxu0 0
        %4292 = vmatpush2.bf16.msra.mxu0 0
        %4293 = vmatprep.subr.bf16.mxu0 0
        %4294 = vmatpush2.bf16.msra.mxu0 0
        %4295 = vmatprep.subr.bf16.mxu0 0
        %4296 = vmatpush2.bf16.msra.mxu0 0
        %4297 = vmatprep.subr.bf16.mxu0 0
        %4298 = vmatpush2.bf16.msra.mxu0 0
        %4299 = vmatprep.subr.bf16.mxu0 0
        %4300 = vmatpush2.bf16.msra.mxu0 0
        %4301 = vmatprep.subr.bf16.mxu0 0
        %4302 = vmatpush2.bf16.msra.mxu0 0
        %4303 = vmatprep.subr.bf16.mxu0 0
        %4304 = vmatpush2.bf16.msra.mxu0 0
        %4305 = vmatprep.subr.bf16.mxu0 0
        %4306 = vmatpush2.bf16.msra.mxu0 0
        %4307 = vmatprep.mubr.bf16.mxu0 0
        %4308 = vmatmul.mubr.bf16.gmra.mxu0 %v4273
        %v4309 = vpop.f32.mrf.mxu0
        %v4310 = vadd.f32 0.0, %v4309
        %v4311 = vpop.f32.mrf.mxu0
        %v4312 = vpop.f32.mrf.mxu0
        %v4313 = vpop.f32.mrf.mxu0
        %4314 = vdwg.mxu0
        %v4315 = vadd.f32 %v4261, %v4310
        %s4316 = scalar_lea.vmem %s9, 40
        %v4317 = vld [vmem:[%s4316] sm:$0xf]
        %v4318 = vld [vmem:[%s4316 + $0x4] sm:$0xf]
        %v4319 = vrot.slane %v4054, 2
        %v4322 = vunpack.c.l.b16 %v4317
        %v4323 = vunpack.c.l.b16 %v4318
        %v4324 = vpack.c.b16 %v4323, %v4322
        %v4327 = vsel %vm713, %v4319, 0
        %4329 = vmatprep.subr.bf16.mxu0 0
        %4330 = vmatpush1.bf16.msra.mxu0 0
        %4331 = vmatprep.subr.bf16.mxu0 0
        %4332 = vmatpush1.bf16.msra.mxu0 0
        %4333 = vmatprep.subr.bf16.mxu0 0
        %4334 = vmatpush1.bf16.msra.mxu0 0
        %4335 = vmatprep.subr.bf16.mxu0 0
        %4336 = vmatpush1.bf16.msra.mxu0 0
        %4337 = vmatprep.subr.bf16.mxu0 0
        %4338 = vmatpush1.bf16.msra.mxu0 0
        %4339 = vmatprep.subr.bf16.mxu0 0
        %4340 = vmatpush1.bf16.msra.mxu0 0
        %4341 = vmatprep.subr.bf16.mxu0 0
        %4342 = vmatpush1.bf16.msra.mxu0 0
        %4343 = vmatprep.subr.bf16.mxu0 0
        %4344 = vmatpush1.bf16.msra.mxu0 %v4324
        %4345 = vmatprep.subr.bf16.mxu0 0
        %4346 = vmatpush2.bf16.msra.mxu0 0
        %4347 = vmatprep.subr.bf16.mxu0 0
        %4348 = vmatpush2.bf16.msra.mxu0 0
        %4349 = vmatprep.subr.bf16.mxu0 0
        %4350 = vmatpush2.bf16.msra.mxu0 0
        %4351 = vmatprep.subr.bf16.mxu0 0
        %4352 = vmatpush2.bf16.msra.mxu0 0
        %4353 = vmatprep.subr.bf16.mxu0 0
        %4354 = vmatpush2.bf16.msra.mxu0 0
        %4355 = vmatprep.subr.bf16.mxu0 0
        %4356 = vmatpush2.bf16.msra.mxu0 0
        %4357 = vmatprep.subr.bf16.mxu0 0
        %4358 = vmatpush2.bf16.msra.mxu0 0
        %4359 = vmatprep.subr.bf16.mxu0 0
        %4360 = vmatpush2.bf16.msra.mxu0 0
        %4361 = vmatprep.mubr.bf16.mxu0 0
        %4362 = vmatmul.mubr.bf16.gmra.mxu0 %v4327
        %v4363 = vpop.f32.mrf.mxu0
        %v4364 = vadd.f32 0.0, %v4363
        %v4365 = vpop.f32.mrf.mxu0
        %v4366 = vpop.f32.mrf.mxu0
        %v4367 = vpop.f32.mrf.mxu0
        %4368 = vdwg.mxu0
        %v4369 = vadd.f32 %v4315, %v4364
        %s4370 = scalar_lea.vmem %s9, 48
        %v4371 = vld [vmem:[%s4370] sm:$0xf]
        %v4372 = vld [vmem:[%s4370 + $0x4] sm:$0xf]
        %v4373 = vrot.slane %v4047, 3
        %v4376 = vunpack.c.l.b16 %v4371
        %v4377 = vunpack.c.l.b16 %v4372
        %v4378 = vpack.c.b16 %v4377, %v4376
        %v4381 = vsel %vm713, %v4373, 0
        %4383 = vmatprep.subr.bf16.mxu0 0
        %4384 = vmatpush1.bf16.msra.mxu0 0
        %4385 = vmatprep.subr.bf16.mxu0 0
        %4386 = vmatpush1.bf16.msra.mxu0 0
        %4387 = vmatprep.subr.bf16.mxu0 0
        %4388 = vmatpush1.bf16.msra.mxu0 0
        %4389 = vmatprep.subr.bf16.mxu0 0
        %4390 = vmatpush1.bf16.msra.mxu0 0
        %4391 = vmatprep.subr.bf16.mxu0 0
        %4392 = vmatpush1.bf16.msra.mxu0 0
        %4393 = vmatprep.subr.bf16.mxu0 0
        %4394 = vmatpush1.bf16.msra.mxu0 0
        %4395 = vmatprep.subr.bf16.mxu0 0
        %4396 = vmatpush1.bf16.msra.mxu0 0
        %4397 = vmatprep.subr.bf16.mxu0 0
        %4398 = vmatpush1.bf16.msra.mxu0 %v4378
        %4399 = vmatprep.subr.bf16.mxu0 0
        %4400 = vmatpush2.bf16.msra.mxu0 0
        %4401 = vmatprep.subr.bf16.mxu0 0
        %4402 = vmatpush2.bf16.msra.mxu0 0
        %4403 = vmatprep.subr.bf16.mxu0 0
        %4404 = vmatpush2.bf16.msra.mxu0 0
        %4405 = vmatprep.subr.bf16.mxu0 0
        %4406 = vmatpush2.bf16.msra.mxu0 0
        %4407 = vmatprep.subr.bf16.mxu0 0
        %4408 = vmatpush2.bf16.msra.mxu0 0
        %4409 = vmatprep.subr.bf16.mxu0 0
        %4410 = vmatpush2.bf16.msra.mxu0 0
        %4411 = vmatprep.subr.bf16.mxu0 0
        %4412 = vmatpush2.bf16.msra.mxu0 0
        %4413 = vmatprep.subr.bf16.mxu0 0
        %4414 = vmatpush2.bf16.msra.mxu0 0
        %4415 = vmatprep.mubr.bf16.mxu0 0
        %4416 = vmatmul.mubr.bf16.gmra.mxu0 %v4381
        %v4417 = vpop.f32.mrf.mxu0
        %v4418 = vadd.f32 0.0, %v4417
        %v4419 = vpop.f32.mrf.mxu0
        %v4420 = vpop.f32.mrf.mxu0
        %v4421 = vpop.f32.mrf.mxu0
        %4422 = vdwg.mxu0
        %v4423 = vadd.f32 %v4369, %v4418
        %s4424 = scalar_lea.vmem %s9, 56
        %v4425 = vld [vmem:[%s4424] sm:$0xf]
        %v4426 = vld [vmem:[%s4424 + $0x4] sm:$0xf]
        %v4427 = vrot.slane %v4054, 3
        %v4430 = vunpack.c.l.b16 %v4425
        %v4431 = vunpack.c.l.b16 %v4426
        %v4432 = vpack.c.b16 %v4431, %v4430
        %v4435 = vsel %vm713, %v4427, 0
        %4437 = vmatprep.subr.bf16.mxu0 0
        %4438 = vmatpush1.bf16.msra.mxu0 0
        %4439 = vmatprep.subr.bf16.mxu0 0
        %4440 = vmatpush1.bf16.msra.mxu0 0
        %4441 = vmatprep.subr.bf16.mxu0 0
        %4442 = vmatpush1.bf16.msra.mxu0 0
        %4443 = vmatprep.subr.bf16.mxu0 0
        %4444 = vmatpush1.bf16.msra.mxu0 0
        %4445 = vmatprep.subr.bf16.mxu0 0
        %4446 = vmatpush1.bf16.msra.mxu0 0
        %4447 = vmatprep.subr.bf16.mxu0 0
        %4448 = vmatpush1.bf16.msra.mxu0 0
        %4449 = vmatprep.subr.bf16.mxu0 0
        %4450 = vmatpush1.bf16.msra.mxu0 0
        %4451 = vmatprep.subr.bf16.mxu0 0
        %4452 = vmatpush1.bf16.msra.mxu0 %v4432
        %4453 = vmatprep.subr.bf16.mxu0 0
        %4454 = vmatpush2.bf16.msra.mxu0 0
        %4455 = vmatprep.subr.bf16.mxu0 0
        %4456 = vmatpush2.bf16.msra.mxu0 0
        %4457 = vmatprep.subr.bf16.mxu0 0
        %4458 = vmatpush2.bf16.msra.mxu0 0
        %4459 = vmatprep.subr.bf16.mxu0 0
        %4460 = vmatpush2.bf16.msra.mxu0 0
        %4461 = vmatprep.subr.bf16.mxu0 0
        %4462 = vmatpush2.bf16.msra.mxu0 0
        %4463 = vmatprep.subr.bf16.mxu0 0
        %4464 = vmatpush2.bf16.msra.mxu0 0
        %4465 = vmatprep.subr.bf16.mxu0 0
        %4466 = vmatpush2.bf16.msra.mxu0 0
        %4467 = vmatprep.subr.bf16.mxu0 0
        %4468 = vmatpush2.bf16.msra.mxu0 0
        %4469 = vmatprep.mubr.bf16.mxu0 0
        %4470 = vmatmul.mubr.bf16.gmra.mxu0 %v4435
        %v4471 = vpop.f32.mrf.mxu0
        %v4472 = vadd.f32 0.0, %v4471
        %v4473 = vpop.f32.mrf.mxu0
        %v4474 = vpop.f32.mrf.mxu0
        %v4475 = vpop.f32.mrf.mxu0
        %4476 = vdwg.mxu0
        %v4477 = vadd.f32 %v4423, %v4472
        %s4478 = scalar_lea.vmem %s9, 64
        %v4479 = vld [vmem:[%s4478] sm:$0xf]
        %v4480 = vld [vmem:[%s4478 + $0x4] sm:$0xf]
        %v4481 = vrot.slane %v4047, 4
        %v4484 = vunpack.c.l.b16 %v4479
        %v4485 = vunpack.c.l.b16 %v4480
        %v4486 = vpack.c.b16 %v4485, %v4484
        %v4489 = vsel %vm713, %v4481, 0
        %4491 = vmatprep.subr.bf16.mxu0 0
        %4492 = vmatpush1.bf16.msra.mxu0 0
        %4493 = vmatprep.subr.bf16.mxu0 0
        %4494 = vmatpush1.bf16.msra.mxu0 0
        %4495 = vmatprep.subr.bf16.mxu0 0
        %4496 = vmatpush1.bf16.msra.mxu0 0
        %4497 = vmatprep.subr.bf16.mxu0 0
        %4498 = vmatpush1.bf16.msra.mxu0 0
        %4499 = vmatprep.subr.bf16.mxu0 0
        %4500 = vmatpush1.bf16.msra.mxu0 0
        %4501 = vmatprep.subr.bf16.mxu0 0
        %4502 = vmatpush1.bf16.msra.mxu0 0
        %4503 = vmatprep.subr.bf16.mxu0 0
        %4504 = vmatpush1.bf16.msra.mxu0 0
        %4505 = vmatprep.subr.bf16.mxu0 0
        %4506 = vmatpush1.bf16.msra.mxu0 %v4486
        %4507 = vmatprep.subr.bf16.mxu0 0
        %4508 = vmatpush2.bf16.msra.mxu0 0
        %4509 = vmatprep.subr.bf16.mxu0 0
        %4510 = vmatpush2.bf16.msra.mxu0 0
        %4511 = vmatprep.subr.bf16.mxu0 0
        %4512 = vmatpush2.bf16.msra.mxu0 0
        %4513 = vmatprep.subr.bf16.mxu0 0
        %4514 = vmatpush2.bf16.msra.mxu0 0
        %4515 = vmatprep.subr.bf16.mxu0 0
        %4516 = vmatpush2.bf16.msra.mxu0 0
        %4517 = vmatprep.subr.bf16.mxu0 0
        %4518 = vmatpush2.bf16.msra.mxu0 0
        %4519 = vmatprep.subr.bf16.mxu0 0
        %4520 = vmatpush2.bf16.msra.mxu0 0
        %4521 = vmatprep.subr.bf16.mxu0 0
        %4522 = vmatpush2.bf16.msra.mxu0 0
        %4523 = vmatprep.mubr.bf16.mxu0 0
        %4524 = vmatmul.mubr.bf16.gmra.mxu0 %v4489
        %v4525 = vpop.f32.mrf.mxu0
        %v4526 = vadd.f32 0.0, %v4525
        %v4527 = vpop.f32.mrf.mxu0
        %v4528 = vpop.f32.mrf.mxu0
        %v4529 = vpop.f32.mrf.mxu0
        %4530 = vdwg.mxu0
        %v4531 = vadd.f32 %v4477, %v4526
        %v4532 = vld [vmem:[%s10] sm:$0x1]
        %v4533 = vadd.f32 %v4531, %v4532
        %v4534 = vmax.f32 %v4533, 0.0
        %v4535 = vpack.c.bf16 %v4534, %v4534
        %v4536 = vld [vmem:[%s11] sm:$0xf]
        %v4537 = vld [vmem:[%s11 + $0x4] sm:$0xf]
        %v4538 = vld [vmem:[%s12] sm:$0x1]
        %v4541 = vunpack.c.l.b16 %v4536
        %v4542 = vunpack.c.l.b16 %v4537
        %v4543 = vpack.c.b16 %v4542, %v4541
        %v4546 = vsel %vm713, %v4535, 0
        %4548 = vmatprep.subr.bf16.mxu0 0
        %4549 = vmatpush1.bf16.msra.mxu0 0
        %4550 = vmatprep.subr.bf16.mxu0 0
        %4551 = vmatpush1.bf16.msra.mxu0 0
        %4552 = vmatprep.subr.bf16.mxu0 0
        %4553 = vmatpush1.bf16.msra.mxu0 0
        %4554 = vmatprep.subr.bf16.mxu0 0
        %4555 = vmatpush1.bf16.msra.mxu0 0
        %4556 = vmatprep.subr.bf16.mxu0 0
        %4557 = vmatpush1.bf16.msra.mxu0 0
        %4558 = vmatprep.subr.bf16.mxu0 0
        %4559 = vmatpush1.bf16.msra.mxu0 0
        %4560 = vmatprep.subr.bf16.mxu0 0
        %4561 = vmatpush1.bf16.msra.mxu0 0
        %4562 = vmatprep.subr.bf16.mxu0 0
        %4563 = vmatpush1.bf16.msra.mxu0 %v4543
        %4564 = vmatprep.subr.bf16.mxu0 0
        %4565 = vmatpush2.bf16.msra.mxu0 0
        %4566 = vmatprep.subr.bf16.mxu0 0
        %4567 = vmatpush2.bf16.msra.mxu0 0
        %4568 = vmatprep.subr.bf16.mxu0 0
        %4569 = vmatpush2.bf16.msra.mxu0 0
        %4570 = vmatprep.subr.bf16.mxu0 0
        %4571 = vmatpush2.bf16.msra.mxu0 0
        %4572 = vmatprep.subr.bf16.mxu0 0
        %4573 = vmatpush2.bf16.msra.mxu0 0
        %4574 = vmatprep.subr.bf16.mxu0 0
        %4575 = vmatpush2.bf16.msra.mxu0 0
        %4576 = vmatprep.subr.bf16.mxu0 0
        %4577 = vmatpush2.bf16.msra.mxu0 0
        %4578 = vmatprep.subr.bf16.mxu0 0
        %4579 = vmatpush2.bf16.msra.mxu0 0
        %4580 = vmatprep.mubr.bf16.mxu0 0
        %4581 = vmatmul.mubr.bf16.gmra.mxu0 %v4546
        %v4582 = vpop.f32.mrf.mxu0
        %v4583 = vadd.f32 %v4538, %v4582
        %v4584 = vpop.f32.mrf.mxu0
        %v4585 = vpop.f32.mrf.mxu0
        %v4586 = vpop.f32.mrf.mxu0
        %4587 = vdwg.mxu0
        %v4588 = vmax.f32 %v4583, 0.0
        %vm4589 = vcmask 73728
        %4590 = vst.msk [vmem:[%s432] sm:$0x1] %vm4589, %v4588
        %s4591 = sand.u32 %s313, 1
        %s4592 = scalar_lea.sflag [#allocation3], %s4591
        %s4593 = sand.u32 %s313, 1
        %s4594 = scalar_lea.vmem [#allocation2], %s4593
        // Predicated region
        $region73: #{net_forward.1} parent=71 // pred_check
          %p4595 = pneg %p323
        $region74: #{net_forward.1} parent=71 // pred_check_branch
          %4597 = sbr.rel (%p4595) target = $region76
        $region75: #{net_forward.1} parent=71 // pred_region
          %s4599 = ssub.s32 16, 16
          %4600 = vsyncadd %s4592, %s4599
          %s4601 = smul.addr %s27, 16
          %s4602 = scalar_lea.hbm %s13, %s4601
          %s4604 = sshll.u32 %s4594, 4
          %s4605 = int_to_ptr.vmem [resolvable:$true] %s4604
          %4607 = dma.vmem_to_hbm [thread:$0]  %s4605, 16, %s4602, %s4592
        $region76: #{net_forward.1} parent=71 // pred_fallthru
          _
      $region72: #{net_forward.1} parent=5 // pred_fallthru
        _
      %p4608 = scmp.le.s32.totalorder 2, %s22
      // Predicated region
      $region77: #{net_forward.1} parent=5 // pred_check
        %p4609 = pneg %p4608
      $region78: #{net_forward.1} parent=5 // pred_check_branch
        %4611 = sbr.rel (%p4609) target = $region80
      $region79: #{net_forward.1} parent=5 // pred_region
        %s4612 = ssub.s32 %s22, 2
        // Predicated region
        $region81: #{net_forward.1} parent=79 // pred_check
          %p4613 = pneg %p329
        $region82: #{net_forward.1} parent=79 // pred_check_branch
          %4615 = sbr.rel (%p4613) target = $region84
        $region83: #{net_forward.1} parent=79 // pred_region
          %s4616 = sand.u32 %s314, 1
          %s4617 = scalar_lea.sflag [#allocation3], %s4616
          %s4618 = sand.u32 %s314, 1
          %s4619 = scalar_lea.vmem [#allocation2], %s4618
          %4620 = dma.done %s4617, 16
        $region84: #{net_forward.1} parent=79 // pred_fallthru
          _
      $region80: #{net_forward.1} parent=5 // pred_fallthru
        _
    $region6: #{net_forward.1} parent=1 // loop_footer
      %s26 = sadd.s32 1, %s22
    $region7: #{net_forward.1} parent=1 // loop_footer_branch
      %21 = sbr.rel target = $region3
    $region8: #{net_forward.1} parent=1 // loop_exit
      _
    %4621 = vsyncpa [#allocation3], 1
    %s4622 = scalar_lea.sflag [#allocation3], 1
    %4623 = vsyncpa %s4622, 1

</llo_original>
